<compile_context>
chip_gen: v6e
topology: v6e:2x2x1
jax: 0.10.0
libtpu: 0.0.40
codegen_flags: <defaults>
</compile_context>

<pallas_src>
import jax
import jax.numpy as jnp
import numpy as np
from jax.experimental import pallas as pl
from jax.experimental.pallas import tpu as pltpu


# ---------------------------------------------------------------------------
# Fused ConvUnit (4x4 conv, pad=2, stride=1, ReLU) + MaxPool2d(2) kernel
# ---------------------------------------------------------------------------
def conv_relu_pool(x, w_mat, b, *, k=4, pad=2):
    """x: (N, H, W, Cin) NHWC.  w_mat: (k*k*Cin, Cout).  b: (Cout,).

    Returns the pooled activation (N, Ho//2, Wo//2, Cout), Ho = Wo = H+2*pad-k+1.
    Bias/ReLU commute with max-pool, so they are applied after the pool here
    (mathematically identical to ReLU-before-pool in the original module).
    """
    n, h, w_sp, c_in = x.shape
    c_out = w_mat.shape[1]
    hp, wp = h + 2 * pad, w_sp + 2 * pad
    ho, wo = hp - k + 1, wp - k + 1
    hpo, wpo = ho // 2, wo // 2          # MaxPool2d(2), floor mode
    wo_e = 2 * wpo                       # conv columns actually consumed by the pool

    def kernel(x_ref, w_ref, b_ref, o_ref, xp_ref, row_ref):
        # Zero-pad the image into a VMEM scratch (no jnp.pad / extra HBM traffic).
        xp_ref[...] = jnp.zeros_like(xp_ref)
        xp_ref[pad:pad + h, pad:pad + w_sp, :] = x_ref[...]

        w_flat = w_ref[...]                                        # (k*k*Cin, Cout)
        bias = jnp.broadcast_to(b_ref[...], (wpo, c_out))          # hoisted out of loop

        @pl.loop(0, hpo)                     # one pooled output row per iteration
        def _(y):
            r0 = pl.multiple_of(2 * y, 2)
            rows = xp_ref[pl.ds(r0, k + 1), :, :]                  # (k+1, Wp, Cin)
            row_max = None
            for r in range(2):               # the two conv rows feeding pool row y
                # im2col: concatenate all k*k taps along the contraction axis.
                taps = [rows[r + kh, kw:kw + wo_e, :]
                        for kh in range(k) for kw in range(k)]
                patch = jnp.concatenate(taps, axis=-1)             # (Wo_e, k*k*Cin)
                conv_r = jnp.dot(patch, w_flat,
                                 preferred_element_type=jnp.float32)
                row_max = conv_r if row_max is None else jnp.maximum(row_max, conv_r)
            row_ref[...] = row_max                                 # pooled over rows
            even = row_ref[pl.ds(0, wpo, stride=2), :]             # pool over columns
            odd = row_ref[pl.ds(1, wpo, stride=2), :]
            pooled = jnp.maximum(jnp.maximum(even, odd) + bias, 0.0)
            o_ref[pl.ds(y, 1), :, :] = pooled[None].astype(o_ref.dtype)

    return pl.pallas_call(
        kernel,
        out_shape=jax.ShapeDtypeStruct((n, hpo, wpo, c_out), x.dtype),
        grid=(n,),
        in_specs=[
            pl.BlockSpec((None, h, w_sp, c_in), lambda i: (i, 0, 0, 0)),
            pl.BlockSpec((k * k * c_in, c_out), lambda i: (0, 0)),
            pl.BlockSpec((1, c_out), lambda i: (0, 0)),
        ],
        out_specs=pl.BlockSpec((None, hpo, wpo, c_out), lambda i: (i, 0, 0, 0)),
        scratch_shapes=[
            pltpu.VMEM((hp, wp, c_in), jnp.float32),   # zero-padded image
            pltpu.VMEM((wo_e, c_out), jnp.float32),    # row-pooled conv row
        ],
        compiler_params=pltpu.CompilerParams(
            dimension_semantics=("parallel",),         # batch -> both v7x TensorCores
            vmem_limit_bytes=32 * 1024 * 1024,
        ),
    )(x, w_mat, b.reshape(1, c_out))


# ---------------------------------------------------------------------------
# Fused fc1 + ReLU + fc2 + ReLU kernel (fc1 weight streamed in column tiles)
# ---------------------------------------------------------------------------
def _fc_fused_kernel(x_ref, w1_ref, b1_ref, w2_ref, b2_ref, o_ref, acc_ref):
    @pl.when(pl.program_id(0) == 0)
    def _():
        acc_ref[...] = jnp.zeros_like(acc_ref)

    h = jnp.dot(x_ref[...], w1_ref[...], preferred_element_type=jnp.float32)
    h = jnp.maximum(h + b1_ref[...], 0.0)            # fc1 + ReLU, never written to HBM
    acc_ref[...] += jnp.dot(h, w2_ref[...], preferred_element_type=jnp.float32)

    @pl.when(pl.program_id(0) == pl.num_programs(0) - 1)
    def _():
        o_ref[...] = jnp.maximum(acc_ref[...] + b2_ref[...], 0.0).astype(o_ref.dtype)


def fc_fused(x, w1, b1, w2, b2, *, tn=512):
    """relu(relu(x @ w1 + b1) @ w2 + b2) in a single pallas_call.

    The grid streams fc1's weight in (F, tn) lane-dense column tiles (double
    buffered); the matching fc2 row tile's contribution is accumulated in VMEM.
    """
    n, f = x.shape
    r = w2.shape[1]
    tn = min(tn, f)
    assert f % tn == 0, "feature dim must be divisible by the fc1 column tile"
    return pl.pallas_call(
        _fc_fused_kernel,
        out_shape=jax.ShapeDtypeStruct((n, r), x.dtype),
        grid=(f // tn,),
        in_specs=[
            pl.BlockSpec((n, f), lambda j: (0, 0)),      # activations stay resident
            pl.BlockSpec((f, tn), lambda j: (0, j)),     # fc1 weight column tile
            pl.BlockSpec((1, tn), lambda j: (0, j)),
            pl.BlockSpec((tn, r), lambda j: (j, 0)),     # matching fc2 row tile
            pl.BlockSpec((1, r), lambda j: (0, 0)),
        ],
        out_specs=pl.BlockSpec((n, r), lambda j: (0, 0)),
        scratch_shapes=[pltpu.VMEM((n, r), jnp.float32)],
        compiler_params=pltpu.CompilerParams(
            dimension_semantics=("arbitrary",),          # reduction over fc1-out tiles
            vmem_limit_bytes=32 * 1024 * 1024,
        ),
    )(x, w1, b1.reshape(1, f), w2, b2.reshape(1, r))


# ---------------------------------------------------------------------------
# Network: parameters + forward
# ---------------------------------------------------------------------------
def init_params(key, mult=4, in_size=16, conv_layers=3, regression_out=8):
    """Deterministic synthetic parameters following PerspectiveNetwork.__init__."""
    convs = []
    c_in, c_out = 3, mult
    for _ in range(conv_layers):
        key, k_w, k_b = jax.random.split(key, 3)
        scale = 1.0 / np.sqrt(c_in * 4 * 4)
        w = jax.random.normal(k_w, (4, 4, c_in, c_out), jnp.float32) * scale
        b = jax.random.normal(k_b, (c_out,), jnp.float32) * scale
        convs.append((w, b))
        c_in, c_out = c_out, c_out * 2
    total_vars = int((in_size / 2 ** conv_layers) ** 2 * c_in)
    key, k1, k2, k3, k4 = jax.random.split(key, 5)
    s = 1.0 / np.sqrt(total_vars)
    fc1 = (jax.random.normal(k1, (total_vars, total_vars), jnp.float32) * s,
           jax.random.normal(k2, (total_vars,), jnp.float32) * s)
    fc2 = (jax.random.normal(k3, (total_vars, regression_out), jnp.float32) * s,
           jax.random.normal(k4, (regression_out,), jnp.float32) * s)
    return {"convs": convs, "fc1": fc1, "fc2": fc2}


def perspective_forward(params, x_nchw):
    x = jnp.transpose(x_nchw, (0, 2, 3, 1))          # NCHW -> NHWC once at the boundary
    for w, b in params["convs"]:
        kh, kw, c_in, c_out = w.shape
        w_mat = w.reshape(kh * kw * c_in, c_out)     # matches the in-kernel tap order
        x = conv_relu_pool(x, w_mat, b, k=kh, pad=2)  # fused ConvUnit + MaxPool2d(2)
    n, hh, ww, cc = x.shape
    x = x.reshape(n, hh * ww * cc)                   # NHWC flatten: contiguous, free

    # Fold PyTorch's NCHW-flatten ordering into fc1's rows (one-time weight prep;
    # removes the runtime activation transpose).
    w1, b1 = params["fc1"]
    w2, b2 = params["fc2"]
    perm = jnp.arange(cc * hh * ww).reshape(cc, hh, ww).transpose(1, 2, 0).reshape(-1)
    w1_nhwc = jnp.take(w1, perm, axis=0)
    return fc_fused(x, w1_nhwc, b1, w2, b2)          # fc1 + ReLU + fc2 + ReLU


def reference_forward(params, x_nchw):
    """Pure-JAX reference of the same forward pass (PyTorch semantics)."""
    x = jnp.transpose(x_nchw, (0, 2, 3, 1))
    for w, b in params["convs"]:
        x = jax.lax.conv_general_dilated(
            x, w, window_strides=(1, 1), padding=[(2, 2), (2, 2)],
            dimension_numbers=("NHWC", "HWIO", "NHWC"))
        x = jnp.maximum(x + b, 0.0)
        x = jax.lax.reduce_window(x, -jnp.inf, jax.lax.max,
                                  (1, 2, 2, 1), (1, 2, 2, 1), "VALID")
    n = x.shape[0]
    x = jnp.transpose(x, (0, 3, 1, 2)).reshape(n, -1)   # nn.Flatten on NCHW
    w1, b1 = params["fc1"]
    w2, b2 = params["fc2"]
    x = jnp.maximum(x @ w1 + b1, 0.0)
    x = jnp.maximum(x @ w2 + b2, 0.0)
    return x


if __name__ == "__main__":
    key = jax.random.PRNGKey(0)
    pkey, xkey = jax.random.split(key)

    mult, in_size, conv_layers = 4, 16, 3            # small-scale config
    params = init_params(pkey, mult=mult, in_size=in_size,
                         conv_layers=conv_layers, regression_out=8)
    x = jax.random.normal(xkey, (2, 3, in_size, in_size), jnp.float32)

    out = jax.block_until_ready(jax.jit(perspective_forward)(params, x))

    ref = reference_forward(params, x)
    np.testing.assert_allclose(np.asarray(out), np.asarray(ref),
                               rtol=1e-4, atol=1e-4)
    assert out.shape == (2, 8)
    print("KERNEL_OK")
</pallas_src>

<mosaic_0001>
module attributes {stable_mosaic.version = 11 : i64} {
  func.func @kernel(%arg0: i32, %arg1: memref<1x16x16x3xf32, #tpu.memory_space<vmem>>, %arg2: memref<48x4xf32, #tpu.memory_space<vmem>>, %arg3: memref<1x4xf32, #tpu.memory_space<vmem>>, %arg4: memref<1x8x8x4xf32, #tpu.memory_space<vmem>>, %arg5: memref<20x20x3xf32, #tpu.memory_space<vmem>>, %arg6: memref<16x4xf32, #tpu.memory_space<vmem>>) attributes {dimension_semantics = [#tpu.dimension_semantics<parallel>], iteration_bounds = array<i64: 2>, scalar_prefetch = 0 : i64, scratch_operands = 2 : i64, tpu.core_type = #tpu.core_type<tc>, window_params = [{transform_indices = @transform_0, window_bounds = array<i64: 1, 16, 16, 3>}, {pipeline_mode = #tpu.pipeline_mode<synchronous>, transform_indices = @transform_1, window_bounds = array<i64: 48, 4>}, {pipeline_mode = #tpu.pipeline_mode<synchronous>, transform_indices = @transform_2, window_bounds = array<i64: 1, 4>}, {transform_indices = @transform_3, window_bounds = array<i64: 1, 8, 8, 4>}]} {
    %cst = arith.constant 0.000000e+00 : f32
    %0 = vector.broadcast %cst : f32 to vector<20x20x3xf32>
    %c0 = arith.constant 0 : index
    %c0_0 = arith.constant 0 : index
    %c0_1 = arith.constant 0 : index
    %1 = vector.load %arg5[%c0, %c0_0, %c0_1] : memref<20x20x3xf32, #tpu.memory_space<vmem>>, vector<20x20x3xf32>
    tpu.vector_store %arg5[%c0, %c0_0, %c0_1], %0 {strides = array<i32>} : memref<20x20x3xf32, #tpu.memory_space<vmem>>, vector<20x20x3xf32>,
    %c0_2 = arith.constant 0 : index
    %c0_3 = arith.constant 0 : index
    %c0_4 = arith.constant 0 : index
    %c0_5 = arith.constant 0 : index
    %2 = vector.load %arg1[%c0_2, %c0_3, %c0_4, %c0_5] : memref<1x16x16x3xf32, #tpu.memory_space<vmem>>, vector<1x16x16x3xf32>
    %3 = vector.shape_cast %2 : vector<1x16x16x3xf32> to vector<16x16x3xf32>
    %c2 = arith.constant 2 : index
    %c2_6 = arith.constant 2 : index
    %c0_7 = arith.constant 0 : index
    %4 = vector.load %arg5[%c2, %c2_6, %c0_7] : memref<20x20x3xf32, #tpu.memory_space<vmem>>, vector<16x16x3xf32>
    tpu.vector_store %arg5[%c2, %c2_6, %c0_7], %3 {strides = array<i32>} : memref<20x20x3xf32, #tpu.memory_space<vmem>>, vector<16x16x3xf32>,
    %c0_8 = arith.constant 0 : index
    %c0_9 = arith.constant 0 : index
    %5 = vector.load %arg2[%c0_8, %c0_9] : memref<48x4xf32, #tpu.memory_space<vmem>>, vector<48x4xf32>
    %c0_10 = arith.constant 0 : index
    %c0_11 = arith.constant 0 : index
    %6 = vector.load %arg3[%c0_10, %c0_11] : memref<1x4xf32, #tpu.memory_space<vmem>>, vector<1x4xf32>
    %7 = vector.shape_cast %6 : vector<1x4xf32> to vector<1x4xf32>
    %8 = vector.broadcast %7 : vector<1x4xf32> to vector<8x4xf32>
    %c0_i32 = arith.constant 0 : i32
    %c8_i32 = arith.constant 8 : i32
    %9 = arith.addi %c0_i32, %c8_i32 : i32
    %c1_i32 = arith.constant 1 : i32
    scf.for %arg7 = %c0_i32 to %9 step %c1_i32  : i32 {
      %c1_i32_13 = arith.constant 1 : i32
      %10 = arith.muli %arg7, %c1_i32_13 : i32
      %c0_i32_14 = arith.constant 0 : i32
      %11 = arith.addi %c0_i32_14, %10 : i32
      %c2_i32 = arith.constant 2 : i32
      %12 = arith.muli %c2_i32, %11 : i32
      %13 = tpu.assume_multiple %12, 2 : i32
      %14 = arith.index_cast %13 : i32 to index
      %c0_15 = arith.constant 0 : index
      %c0_16 = arith.constant 0 : index
      %15 = vector.load %arg5[%14, %c0_15, %c0_16] : memref<20x20x3xf32, #tpu.memory_space<vmem>>, vector<5x20x3xf32>
      %16 = vector.extract_strided_slice %15 {offsets = [0, 0, 0], sizes = [1, 16, 3], strides = [1, 1, 1]} : vector<5x20x3xf32> to vector<1x16x3xf32>
      %17 = vector.shape_cast %16 : vector<1x16x3xf32> to vector<16x3xf32>
      %18 = vector.extract_strided_slice %15 {offsets = [0, 1, 0], sizes = [1, 16, 3], strides = [1, 1, 1]} : vector<5x20x3xf32> to vector<1x16x3xf32>
      %19 = vector.shape_cast %18 : vector<1x16x3xf32> to vector<16x3xf32>
      %20 = vector.extract_strided_slice %15 {offsets = [0, 2, 0], sizes = [1, 16, 3], strides = [1, 1, 1]} : vector<5x20x3xf32> to vector<1x16x3xf32>
      %21 = vector.shape_cast %20 : vector<1x16x3xf32> to vector<16x3xf32>
      %22 = vector.extract_strided_slice %15 {offsets = [0, 3, 0], sizes = [1, 16, 3], strides = [1, 1, 1]} : vector<5x20x3xf32> to vector<1x16x3xf32>
      %23 = vector.shape_cast %22 : vector<1x16x3xf32> to vector<16x3xf32>
      %24 = vector.extract_strided_slice %15 {offsets = [1, 0, 0], sizes = [1, 16, 3], strides = [1, 1, 1]} : vector<5x20x3xf32> to vector<1x16x3xf32>
      %25 = vector.shape_cast %24 : vector<1x16x3xf32> to vector<16x3xf32>
      %26 = vector.extract_strided_slice %15 {offsets = [1, 1, 0], sizes = [1, 16, 3], strides = [1, 1, 1]} : vector<5x20x3xf32> to vector<1x16x3xf32>
      %27 = vector.shape_cast %26 : vector<1x16x3xf32> to vector<16x3xf32>
      %28 = vector.extract_strided_slice %15 {offsets = [1, 2, 0], sizes = [1, 16, 3], strides = [1, 1, 1]} : vector<5x20x3xf32> to vector<1x16x3xf32>
      %29 = vector.shape_cast %28 : vector<1x16x3xf32> to vector<16x3xf32>
      %30 = vector.extract_strided_slice %15 {offsets = [1, 3, 0], sizes = [1, 16, 3], strides = [1, 1, 1]} : vector<5x20x3xf32> to vector<1x16x3xf32>
      %31 = vector.shape_cast %30 : vector<1x16x3xf32> to vector<16x3xf32>
      %32 = vector.extract_strided_slice %15 {offsets = [2, 0, 0], sizes = [1, 16, 3], strides = [1, 1, 1]} : vector<5x20x3xf32> to vector<1x16x3xf32>
      %33 = vector.shape_cast %32 : vector<1x16x3xf32> to vector<16x3xf32>
      %34 = vector.extract_strided_slice %15 {offsets = [2, 1, 0], sizes = [1, 16, 3], strides = [1, 1, 1]} : vector<5x20x3xf32> to vector<1x16x3xf32>
      %35 = vector.shape_cast %34 : vector<1x16x3xf32> to vector<16x3xf32>
      %36 = vector.extract_strided_slice %15 {offsets = [2, 2, 0], sizes = [1, 16, 3], strides = [1, 1, 1]} : vector<5x20x3xf32> to vector<1x16x3xf32>
      %37 = vector.shape_cast %36 : vector<1x16x3xf32> to vector<16x3xf32>
      %38 = vector.extract_strided_slice %15 {offsets = [2, 3, 0], sizes = [1, 16, 3], strides = [1, 1, 1]} : vector<5x20x3xf32> to vector<1x16x3xf32>
      %39 = vector.shape_cast %38 : vector<1x16x3xf32> to vector<16x3xf32>
      %40 = vector.extract_strided_slice %15 {offsets = [3, 0, 0], sizes = [1, 16, 3], strides = [1, 1, 1]} : vector<5x20x3xf32> to vector<1x16x3xf32>
      %41 = vector.shape_cast %40 : vector<1x16x3xf32> to vector<16x3xf32>
      %42 = vector.extract_strided_slice %15 {offsets = [3, 1, 0], sizes = [1, 16, 3], strides = [1, 1, 1]} : vector<5x20x3xf32> to vector<1x16x3xf32>
      %43 = vector.shape_cast %42 : vector<1x16x3xf32> to vector<16x3xf32>
      %44 = vector.extract_strided_slice %15 {offsets = [3, 2, 0], sizes = [1, 16, 3], strides = [1, 1, 1]} : vector<5x20x3xf32> to vector<1x16x3xf32>
      %45 = vector.shape_cast %44 : vector<1x16x3xf32> to vector<16x3xf32>
      %46 = vector.extract_strided_slice %15 {offsets = [3, 3, 0], sizes = [1, 16, 3], strides = [1, 1, 1]} : vector<5x20x3xf32> to vector<1x16x3xf32>
      %47 = vector.shape_cast %46 : vector<1x16x3xf32> to vector<16x3xf32>
      %48 = tpu.concatenate %17, %19, %21, %23, %25, %27, %29, %31, %33, %35, %37, %39, %41, %43, %45, %47 in 1 : vector<16x3xf32>, vector<16x3xf32>, vector<16x3xf32>, vector<16x3xf32>, vector<16x3xf32>, vector<16x3xf32>, vector<16x3xf32>, vector<16x3xf32>, vector<16x3xf32>, vector<16x3xf32>, vector<16x3xf32>, vector<16x3xf32>, vector<16x3xf32>, vector<16x3xf32>, vector<16x3xf32>, vector<16x3xf32> -> vector<16x48xf32>
      %cst_17 = arith.constant dense<0.000000e+00> : vector<16x4xf32>
      %49 = tpu.matmul %48, %5, %cst_17 {dimension_numbers = #tpu.dot_dimension_numbers<[1], [0], [0], [1], [0, 0, 1, 1], [], []>} : vector<16x48xf32>, vector<48x4xf32>, vector<16x4xf32> -> vector<16x4xf32>
      %50 = vector.extract_strided_slice %15 {offsets = [1, 0, 0], sizes = [1, 16, 3], strides = [1, 1, 1]} : vector<5x20x3xf32> to vector<1x16x3xf32>
      %51 = vector.shape_cast %50 : vector<1x16x3xf32> to vector<16x3xf32>
      %52 = vector.extract_strided_slice %15 {offsets = [1, 1, 0], sizes = [1, 16, 3], strides = [1, 1, 1]} : vector<5x20x3xf32> to vector<1x16x3xf32>
      %53 = vector.shape_cast %52 : vector<1x16x3xf32> to vector<16x3xf32>
      %54 = vector.extract_strided_slice %15 {offsets = [1, 2, 0], sizes = [1, 16, 3], strides = [1, 1, 1]} : vector<5x20x3xf32> to vector<1x16x3xf32>
      %55 = vector.shape_cast %54 : vector<1x16x3xf32> to vector<16x3xf32>
      %56 = vector.extract_strided_slice %15 {offsets = [1, 3, 0], sizes = [1, 16, 3], strides = [1, 1, 1]} : vector<5x20x3xf32> to vector<1x16x3xf32>
      %57 = vector.shape_cast %56 : vector<1x16x3xf32> to vector<16x3xf32>
      %58 = vector.extract_strided_slice %15 {offsets = [2, 0, 0], sizes = [1, 16, 3], strides = [1, 1, 1]} : vector<5x20x3xf32> to vector<1x16x3xf32>
      %59 = vector.shape_cast %58 : vector<1x16x3xf32> to vector<16x3xf32>
      %60 = vector.extract_strided_slice %15 {offsets = [2, 1, 0], sizes = [1, 16, 3], strides = [1, 1, 1]} : vector<5x20x3xf32> to vector<1x16x3xf32>
      %61 = vector.shape_cast %60 : vector<1x16x3xf32> to vector<16x3xf32>
      %62 = vector.extract_strided_slice %15 {offsets = [2, 2, 0], sizes = [1, 16, 3], strides = [1, 1, 1]} : vector<5x20x3xf32> to vector<1x16x3xf32>
      %63 = vector.shape_cast %62 : vector<1x16x3xf32> to vector<16x3xf32>
      %64 = vector.extract_strided_slice %15 {offsets = [2, 3, 0], sizes = [1, 16, 3], strides = [1, 1, 1]} : vector<5x20x3xf32> to vector<1x16x3xf32>
      %65 = vector.shape_cast %64 : vector<1x16x3xf32> to vector<16x3xf32>
      %66 = vector.extract_strided_slice %15 {offsets = [3, 0, 0], sizes = [1, 16, 3], strides = [1, 1, 1]} : vector<5x20x3xf32> to vector<1x16x3xf32>
      %67 = vector.shape_cast %66 : vector<1x16x3xf32> to vector<16x3xf32>
      %68 = vector.extract_strided_slice %15 {offsets = [3, 1, 0], sizes = [1, 16, 3], strides = [1, 1, 1]} : vector<5x20x3xf32> to vector<1x16x3xf32>
      %69 = vector.shape_cast %68 : vector<1x16x3xf32> to vector<16x3xf32>
      %70 = vector.extract_strided_slice %15 {offsets = [3, 2, 0], sizes = [1, 16, 3], strides = [1, 1, 1]} : vector<5x20x3xf32> to vector<1x16x3xf32>
      %71 = vector.shape_cast %70 : vector<1x16x3xf32> to vector<16x3xf32>
      %72 = vector.extract_strided_slice %15 {offsets = [3, 3, 0], sizes = [1, 16, 3], strides = [1, 1, 1]} : vector<5x20x3xf32> to vector<1x16x3xf32>
      %73 = vector.shape_cast %72 : vector<1x16x3xf32> to vector<16x3xf32>
      %74 = vector.extract_strided_slice %15 {offsets = [4, 0, 0], sizes = [1, 16, 3], strides = [1, 1, 1]} : vector<5x20x3xf32> to vector<1x16x3xf32>
      %75 = vector.shape_cast %74 : vector<1x16x3xf32> to vector<16x3xf32>
      %76 = vector.extract_strided_slice %15 {offsets = [4, 1, 0], sizes = [1, 16, 3], strides = [1, 1, 1]} : vector<5x20x3xf32> to vector<1x16x3xf32>
      %77 = vector.shape_cast %76 : vector<1x16x3xf32> to vector<16x3xf32>
      %78 = vector.extract_strided_slice %15 {offsets = [4, 2, 0], sizes = [1, 16, 3], strides = [1, 1, 1]} : vector<5x20x3xf32> to vector<1x16x3xf32>
      %79 = vector.shape_cast %78 : vector<1x16x3xf32> to vector<16x3xf32>
      %80 = vector.extract_strided_slice %15 {offsets = [4, 3, 0], sizes = [1, 16, 3], strides = [1, 1, 1]} : vector<5x20x3xf32> to vector<1x16x3xf32>
      %81 = vector.shape_cast %80 : vector<1x16x3xf32> to vector<16x3xf32>
      %82 = tpu.concatenate %51, %53, %55, %57, %59, %61, %63, %65, %67, %69, %71, %73, %75, %77, %79, %81 in 1 : vector<16x3xf32>, vector<16x3xf32>, vector<16x3xf32>, vector<16x3xf32>, vector<16x3xf32>, vector<16x3xf32>, vector<16x3xf32>, vector<16x3xf32>, vector<16x3xf32>, vector<16x3xf32>, vector<16x3xf32>, vector<16x3xf32>, vector<16x3xf32>, vector<16x3xf32>, vector<16x3xf32>, vector<16x3xf32> -> vector<16x48xf32>
      %cst_18 = arith.constant dense<0.000000e+00> : vector<16x4xf32>
      %83 = tpu.matmul %82, %5, %cst_18 {dimension_numbers = #tpu.dot_dimension_numbers<[1], [0], [0], [1], [0, 0, 1, 1], [], []>} : vector<16x48xf32>, vector<48x4xf32>, vector<16x4xf32> -> vector<16x4xf32>
      %84 = arith.maximumf %49, %83 : vector<16x4xf32>
      %c0_19 = arith.constant 0 : index
      %c0_20 = arith.constant 0 : index
      %85 = vector.load %arg6[%c0_19, %c0_20] : memref<16x4xf32, #tpu.memory_space<vmem>>, vector<16x4xf32>
      tpu.vector_store %arg6[%c0_19, %c0_20], %84 {strides = array<i32>} : memref<16x4xf32, #tpu.memory_space<vmem>>, vector<16x4xf32>,
      %c0_21 = arith.constant 0 : index
      %c0_22 = arith.constant 0 : index
      %86 = tpu.strided_load %arg6[%c0_21, %c0_22] {strides = array<i32: 2, 1>} : memref<16x4xf32, #tpu.memory_space<vmem>>, vector<8x4xf32>
      %c1 = arith.constant 1 : index
      %c0_23 = arith.constant 0 : index
      %87 = tpu.strided_load %arg6[%c1, %c0_23] {strides = array<i32: 2, 1>} : memref<16x4xf32, #tpu.memory_space<vmem>>, vector<8x4xf32>
      %88 = arith.maximumf %86, %87 : vector<8x4xf32>
      %89 = arith.addf %88, %8 : vector<8x4xf32>
      %cst_24 = arith.constant 0.000000e+00 : f32
      %90 = vector.broadcast %cst_24 : f32 to vector<8x4xf32>
      %91 = arith.maximumf %89, %90 : vector<8x4xf32>
      %92 = vector.shape_cast %91 : vector<8x4xf32> to vector<1x8x4xf32>
      %c0_25 = arith.constant 0 : index
      %93 = arith.index_cast %11 : i32 to index
      %c0_26 = arith.constant 0 : index
      %c0_27 = arith.constant 0 : index
      %94 = vector.load %arg4[%c0_25, %93, %c0_26, %c0_27] : memref<1x8x8x4xf32, #tpu.memory_space<vmem>>, vector<1x1x8x4xf32>
      %95 = vector.shape_cast %94 : vector<1x1x8x4xf32> to vector<1x8x4xf32>
      %96 = vector.shape_cast %92 : vector<1x8x4xf32> to vector<1x1x8x4xf32>
      tpu.vector_store %arg4[%c0_25, %93, %c0_26, %c0_27], %96 {strides = array<i32>} : memref<1x8x8x4xf32, #tpu.memory_space<vmem>>, vector<1x1x8x4xf32>,
    }
    %c8_i32_12 = arith.constant 8 : i32
    return
  }
  func.func @transform_0(%arg0: i32) -> (i32, i32, i32, i32) {
    %c0_i32 = arith.constant 0 : i32
    %c0_i32_0 = arith.constant 0 : i32
    %c0_i32_1 = arith.constant 0 : i32
    %c0_i32_2 = arith.constant 0 : i32
    return %arg0, %c0_i32, %c0_i32_0, %c0_i32_1 : i32, i32, i32, i32
  }
  func.func @transform_1(%arg0: i32) -> (i32, i32) {
    %c0_i32 = arith.constant 0 : i32
    %c0_i32_0 = arith.constant 0 : i32
    %c0_i32_1 = arith.constant 0 : i32
    return %c0_i32, %c0_i32_0 : i32, i32
  }
  func.func @transform_2(%arg0: i32) -> (i32, i32) {
    %c0_i32 = arith.constant 0 : i32
    %c0_i32_0 = arith.constant 0 : i32
    %c0_i32_1 = arith.constant 0 : i32
    return %c0_i32, %c0_i32_0 : i32, i32
  }
  func.func @transform_3(%arg0: i32) -> (i32, i32, i32, i32) {
    %c0_i32 = arith.constant 0 : i32
    %c0_i32_0 = arith.constant 0 : i32
    %c0_i32_1 = arith.constant 0 : i32
    %c0_i32_2 = arith.constant 0 : i32
    return %arg0, %c0_i32, %c0_i32_0, %c0_i32_1 : i32, i32, i32, i32
  }
}

module attributes {stable_mosaic.version = 11 : i64} {
  func.func @kernel(%arg0: i32, %arg1: memref<1x8x8x4xf32, #tpu.memory_space<vmem>>, %arg2: memref<64x8xf32, #tpu.memory_space<vmem>>, %arg3: memref<1x8xf32, #tpu.memory_space<vmem>>, %arg4: memref<1x4x4x8xf32, #tpu.memory_space<vmem>>, %arg5: memref<12x12x4xf32, #tpu.memory_space<vmem>>, %arg6: memref<8x8xf32, #tpu.memory_space<vmem>>) attributes {dimension_semantics = [#tpu.dimension_semantics<parallel>], iteration_bounds = array<i64: 2>, scalar_prefetch = 0 : i64, scratch_operands = 2 : i64, tpu.core_type = #tpu.core_type<tc>, window_params = [{transform_indices = @transform_0, window_bounds = array<i64: 1, 8, 8, 4>}, {pipeline_mode = #tpu.pipeline_mode<synchronous>, transform_indices = @transform_1, window_bounds = array<i64: 64, 8>}, {pipeline_mode = #tpu.pipeline_mode<synchronous>, transform_indices = @transform_2, window_bounds = array<i64: 1, 8>}, {transform_indices = @transform_3, window_bounds = array<i64: 1, 4, 4, 8>}]} {
    %cst = arith.constant 0.000000e+00 : f32
    %0 = vector.broadcast %cst : f32 to vector<12x12x4xf32>
    %c0 = arith.constant 0 : index
    %c0_0 = arith.constant 0 : index
    %c0_1 = arith.constant 0 : index
    %1 = vector.load %arg5[%c0, %c0_0, %c0_1] : memref<12x12x4xf32, #tpu.memory_space<vmem>>, vector<12x12x4xf32>
    tpu.vector_store %arg5[%c0, %c0_0, %c0_1], %0 {strides = array<i32>} : memref<12x12x4xf32, #tpu.memory_space<vmem>>, vector<12x12x4xf32>,
    %c0_2 = arith.constant 0 : index
    %c0_3 = arith.constant 0 : index
    %c0_4 = arith.constant 0 : index
    %c0_5 = arith.constant 0 : index
    %2 = vector.load %arg1[%c0_2, %c0_3, %c0_4, %c0_5] : memref<1x8x8x4xf32, #tpu.memory_space<vmem>>, vector<1x8x8x4xf32>
    %3 = vector.shape_cast %2 : vector<1x8x8x4xf32> to vector<8x8x4xf32>
    %c2 = arith.constant 2 : index
    %c2_6 = arith.constant 2 : index
    %c0_7 = arith.constant 0 : index
    %4 = vector.load %arg5[%c2, %c2_6, %c0_7] : memref<12x12x4xf32, #tpu.memory_space<vmem>>, vector<8x8x4xf32>
    tpu.vector_store %arg5[%c2, %c2_6, %c0_7], %3 {strides = array<i32>} : memref<12x12x4xf32, #tpu.memory_space<vmem>>, vector<8x8x4xf32>,
    %c0_8 = arith.constant 0 : index
    %c0_9 = arith.constant 0 : index
    %5 = vector.load %arg2[%c0_8, %c0_9] : memref<64x8xf32, #tpu.memory_space<vmem>>, vector<64x8xf32>
    %c0_10 = arith.constant 0 : index
    %c0_11 = arith.constant 0 : index
    %6 = vector.load %arg3[%c0_10, %c0_11] : memref<1x8xf32, #tpu.memory_space<vmem>>, vector<1x8xf32>
    %7 = vector.shape_cast %6 : vector<1x8xf32> to vector<1x8xf32>
    %8 = vector.broadcast %7 : vector<1x8xf32> to vector<4x8xf32>
    %c0_i32 = arith.constant 0 : i32
    %c4_i32 = arith.constant 4 : i32
    %9 = arith.addi %c0_i32, %c4_i32 : i32
    %c1_i32 = arith.constant 1 : i32
    scf.for %arg7 = %c0_i32 to %9 step %c1_i32  : i32 {
      %c1_i32_13 = arith.constant 1 : i32
      %10 = arith.muli %arg7, %c1_i32_13 : i32
      %c0_i32_14 = arith.constant 0 : i32
      %11 = arith.addi %c0_i32_14, %10 : i32
      %c2_i32 = arith.constant 2 : i32
      %12 = arith.muli %c2_i32, %11 : i32
      %13 = tpu.assume_multiple %12, 2 : i32
      %14 = arith.index_cast %13 : i32 to index
      %c0_15 = arith.constant 0 : index
      %c0_16 = arith.constant 0 : index
      %15 = vector.load %arg5[%14, %c0_15, %c0_16] : memref<12x12x4xf32, #tpu.memory_space<vmem>>, vector<5x12x4xf32>
      %16 = vector.extract_strided_slice %15 {offsets = [0, 0, 0], sizes = [1, 8, 4], strides = [1, 1, 1]} : vector<5x12x4xf32> to vector<1x8x4xf32>
      %17 = vector.shape_cast %16 : vector<1x8x4xf32> to vector<8x4xf32>
      %18 = vector.extract_strided_slice %15 {offsets = [0, 1, 0], sizes = [1, 8, 4], strides = [1, 1, 1]} : vector<5x12x4xf32> to vector<1x8x4xf32>
      %19 = vector.shape_cast %18 : vector<1x8x4xf32> to vector<8x4xf32>
      %20 = vector.extract_strided_slice %15 {offsets = [0, 2, 0], sizes = [1, 8, 4], strides = [1, 1, 1]} : vector<5x12x4xf32> to vector<1x8x4xf32>
      %21 = vector.shape_cast %20 : vector<1x8x4xf32> to vector<8x4xf32>
      %22 = vector.extract_strided_slice %15 {offsets = [0, 3, 0], sizes = [1, 8, 4], strides = [1, 1, 1]} : vector<5x12x4xf32> to vector<1x8x4xf32>
      %23 = vector.shape_cast %22 : vector<1x8x4xf32> to vector<8x4xf32>
      %24 = vector.extract_strided_slice %15 {offsets = [1, 0, 0], sizes = [1, 8, 4], strides = [1, 1, 1]} : vector<5x12x4xf32> to vector<1x8x4xf32>
      %25 = vector.shape_cast %24 : vector<1x8x4xf32> to vector<8x4xf32>
      %26 = vector.extract_strided_slice %15 {offsets = [1, 1, 0], sizes = [1, 8, 4], strides = [1, 1, 1]} : vector<5x12x4xf32> to vector<1x8x4xf32>
      %27 = vector.shape_cast %26 : vector<1x8x4xf32> to vector<8x4xf32>
      %28 = vector.extract_strided_slice %15 {offsets = [1, 2, 0], sizes = [1, 8, 4], strides = [1, 1, 1]} : vector<5x12x4xf32> to vector<1x8x4xf32>
      %29 = vector.shape_cast %28 : vector<1x8x4xf32> to vector<8x4xf32>
      %30 = vector.extract_strided_slice %15 {offsets = [1, 3, 0], sizes = [1, 8, 4], strides = [1, 1, 1]} : vector<5x12x4xf32> to vector<1x8x4xf32>
      %31 = vector.shape_cast %30 : vector<1x8x4xf32> to vector<8x4xf32>
      %32 = vector.extract_strided_slice %15 {offsets = [2, 0, 0], sizes = [1, 8, 4], strides = [1, 1, 1]} : vector<5x12x4xf32> to vector<1x8x4xf32>
      %33 = vector.shape_cast %32 : vector<1x8x4xf32> to vector<8x4xf32>
      %34 = vector.extract_strided_slice %15 {offsets = [2, 1, 0], sizes = [1, 8, 4], strides = [1, 1, 1]} : vector<5x12x4xf32> to vector<1x8x4xf32>
      %35 = vector.shape_cast %34 : vector<1x8x4xf32> to vector<8x4xf32>
      %36 = vector.extract_strided_slice %15 {offsets = [2, 2, 0], sizes = [1, 8, 4], strides = [1, 1, 1]} : vector<5x12x4xf32> to vector<1x8x4xf32>
      %37 = vector.shape_cast %36 : vector<1x8x4xf32> to vector<8x4xf32>
      %38 = vector.extract_strided_slice %15 {offsets = [2, 3, 0], sizes = [1, 8, 4], strides = [1, 1, 1]} : vector<5x12x4xf32> to vector<1x8x4xf32>
      %39 = vector.shape_cast %38 : vector<1x8x4xf32> to vector<8x4xf32>
      %40 = vector.extract_strided_slice %15 {offsets = [3, 0, 0], sizes = [1, 8, 4], strides = [1, 1, 1]} : vector<5x12x4xf32> to vector<1x8x4xf32>
      %41 = vector.shape_cast %40 : vector<1x8x4xf32> to vector<8x4xf32>
      %42 = vector.extract_strided_slice %15 {offsets = [3, 1, 0], sizes = [1, 8, 4], strides = [1, 1, 1]} : vector<5x12x4xf32> to vector<1x8x4xf32>
      %43 = vector.shape_cast %42 : vector<1x8x4xf32> to vector<8x4xf32>
      %44 = vector.extract_strided_slice %15 {offsets = [3, 2, 0], sizes = [1, 8, 4], strides = [1, 1, 1]} : vector<5x12x4xf32> to vector<1x8x4xf32>
      %45 = vector.shape_cast %44 : vector<1x8x4xf32> to vector<8x4xf32>
      %46 = vector.extract_strided_slice %15 {offsets = [3, 3, 0], sizes = [1, 8, 4], strides = [1, 1, 1]} : vector<5x12x4xf32> to vector<1x8x4xf32>
      %47 = vector.shape_cast %46 : vector<1x8x4xf32> to vector<8x4xf32>
      %48 = tpu.concatenate %17, %19, %21, %23, %25, %27, %29, %31, %33, %35, %37, %39, %41, %43, %45, %47 in 1 : vector<8x4xf32>, vector<8x4xf32>, vector<8x4xf32>, vector<8x4xf32>, vector<8x4xf32>, vector<8x4xf32>, vector<8x4xf32>, vector<8x4xf32>, vector<8x4xf32>, vector<8x4xf32>, vector<8x4xf32>, vector<8x4xf32>, vector<8x4xf32>, vector<8x4xf32>, vector<8x4xf32>, vector<8x4xf32> -> vector<8x64xf32>
      %cst_17 = arith.constant dense<0.000000e+00> : vector<8x8xf32>
      %49 = tpu.matmul %48, %5, %cst_17 {dimension_numbers = #tpu.dot_dimension_numbers<[1], [0], [0], [1], [0, 0, 1, 1], [], []>} : vector<8x64xf32>, vector<64x8xf32>, vector<8x8xf32> -> vector<8x8xf32>
      %50 = vector.extract_strided_slice %15 {offsets = [1, 0, 0], sizes = [1, 8, 4], strides = [1, 1, 1]} : vector<5x12x4xf32> to vector<1x8x4xf32>
      %51 = vector.shape_cast %50 : vector<1x8x4xf32> to vector<8x4xf32>
      %52 = vector.extract_strided_slice %15 {offsets = [1, 1, 0], sizes = [1, 8, 4], strides = [1, 1, 1]} : vector<5x12x4xf32> to vector<1x8x4xf32>
      %53 = vector.shape_cast %52 : vector<1x8x4xf32> to vector<8x4xf32>
      %54 = vector.extract_strided_slice %15 {offsets = [1, 2, 0], sizes = [1, 8, 4], strides = [1, 1, 1]} : vector<5x12x4xf32> to vector<1x8x4xf32>
      %55 = vector.shape_cast %54 : vector<1x8x4xf32> to vector<8x4xf32>
      %56 = vector.extract_strided_slice %15 {offsets = [1, 3, 0], sizes = [1, 8, 4], strides = [1, 1, 1]} : vector<5x12x4xf32> to vector<1x8x4xf32>
      %57 = vector.shape_cast %56 : vector<1x8x4xf32> to vector<8x4xf32>
      %58 = vector.extract_strided_slice %15 {offsets = [2, 0, 0], sizes = [1, 8, 4], strides = [1, 1, 1]} : vector<5x12x4xf32> to vector<1x8x4xf32>
      %59 = vector.shape_cast %58 : vector<1x8x4xf32> to vector<8x4xf32>
      %60 = vector.extract_strided_slice %15 {offsets = [2, 1, 0], sizes = [1, 8, 4], strides = [1, 1, 1]} : vector<5x12x4xf32> to vector<1x8x4xf32>
      %61 = vector.shape_cast %60 : vector<1x8x4xf32> to vector<8x4xf32>
      %62 = vector.extract_strided_slice %15 {offsets = [2, 2, 0], sizes = [1, 8, 4], strides = [1, 1, 1]} : vector<5x12x4xf32> to vector<1x8x4xf32>
      %63 = vector.shape_cast %62 : vector<1x8x4xf32> to vector<8x4xf32>
      %64 = vector.extract_strided_slice %15 {offsets = [2, 3, 0], sizes = [1, 8, 4], strides = [1, 1, 1]} : vector<5x12x4xf32> to vector<1x8x4xf32>
      %65 = vector.shape_cast %64 : vector<1x8x4xf32> to vector<8x4xf32>
      %66 = vector.extract_strided_slice %15 {offsets = [3, 0, 0], sizes = [1, 8, 4], strides = [1, 1, 1]} : vector<5x12x4xf32> to vector<1x8x4xf32>
      %67 = vector.shape_cast %66 : vector<1x8x4xf32> to vector<8x4xf32>
      %68 = vector.extract_strided_slice %15 {offsets = [3, 1, 0], sizes = [1, 8, 4], strides = [1, 1, 1]} : vector<5x12x4xf32> to vector<1x8x4xf32>
      %69 = vector.shape_cast %68 : vector<1x8x4xf32> to vector<8x4xf32>
      %70 = vector.extract_strided_slice %15 {offsets = [3, 2, 0], sizes = [1, 8, 4], strides = [1, 1, 1]} : vector<5x12x4xf32> to vector<1x8x4xf32>
      %71 = vector.shape_cast %70 : vector<1x8x4xf32> to vector<8x4xf32>
      %72 = vector.extract_strided_slice %15 {offsets = [3, 3, 0], sizes = [1, 8, 4], strides = [1, 1, 1]} : vector<5x12x4xf32> to vector<1x8x4xf32>
      %73 = vector.shape_cast %72 : vector<1x8x4xf32> to vector<8x4xf32>
      %74 = vector.extract_strided_slice %15 {offsets = [4, 0, 0], sizes = [1, 8, 4], strides = [1, 1, 1]} : vector<5x12x4xf32> to vector<1x8x4xf32>
      %75 = vector.shape_cast %74 : vector<1x8x4xf32> to vector<8x4xf32>
      %76 = vector.extract_strided_slice %15 {offsets = [4, 1, 0], sizes = [1, 8, 4], strides = [1, 1, 1]} : vector<5x12x4xf32> to vector<1x8x4xf32>
      %77 = vector.shape_cast %76 : vector<1x8x4xf32> to vector<8x4xf32>
      %78 = vector.extract_strided_slice %15 {offsets = [4, 2, 0], sizes = [1, 8, 4], strides = [1, 1, 1]} : vector<5x12x4xf32> to vector<1x8x4xf32>
      %79 = vector.shape_cast %78 : vector<1x8x4xf32> to vector<8x4xf32>
      %80 = vector.extract_strided_slice %15 {offsets = [4, 3, 0], sizes = [1, 8, 4], strides = [1, 1, 1]} : vector<5x12x4xf32> to vector<1x8x4xf32>
      %81 = vector.shape_cast %80 : vector<1x8x4xf32> to vector<8x4xf32>
      %82 = tpu.concatenate %51, %53, %55, %57, %59, %61, %63, %65, %67, %69, %71, %73, %75, %77, %79, %81 in 1 : vector<8x4xf32>, vector<8x4xf32>, vector<8x4xf32>, vector<8x4xf32>, vector<8x4xf32>, vector<8x4xf32>, vector<8x4xf32>, vector<8x4xf32>, vector<8x4xf32>, vector<8x4xf32>, vector<8x4xf32>, vector<8x4xf32>, vector<8x4xf32>, vector<8x4xf32>, vector<8x4xf32>, vector<8x4xf32> -> vector<8x64xf32>
      %cst_18 = arith.constant dense<0.000000e+00> : vector<8x8xf32>
      %83 = tpu.matmul %82, %5, %cst_18 {dimension_numbers = #tpu.dot_dimension_numbers<[1], [0], [0], [1], [0, 0, 1, 1], [], []>} : vector<8x64xf32>, vector<64x8xf32>, vector<8x8xf32> -> vector<8x8xf32>
      %84 = arith.maximumf %49, %83 : vector<8x8xf32>
      %c0_19 = arith.constant 0 : index
      %c0_20 = arith.constant 0 : index
      %85 = vector.load %arg6[%c0_19, %c0_20] : memref<8x8xf32, #tpu.memory_space<vmem>>, vector<8x8xf32>
      tpu.vector_store %arg6[%c0_19, %c0_20], %84 {strides = array<i32>} : memref<8x8xf32, #tpu.memory_space<vmem>>, vector<8x8xf32>,
      %c0_21 = arith.constant 0 : index
      %c0_22 = arith.constant 0 : index
      %86 = tpu.strided_load %arg6[%c0_21, %c0_22] {strides = array<i32: 2, 1>} : memref<8x8xf32, #tpu.memory_space<vmem>>, vector<4x8xf32>
      %c1 = arith.constant 1 : index
      %c0_23 = arith.constant 0 : index
      %87 = tpu.strided_load %arg6[%c1, %c0_23] {strides = array<i32: 2, 1>} : memref<8x8xf32, #tpu.memory_space<vmem>>, vector<4x8xf32>
      %88 = arith.maximumf %86, %87 : vector<4x8xf32>
      %89 = arith.addf %88, %8 : vector<4x8xf32>
      %cst_24 = arith.constant 0.000000e+00 : f32
      %90 = vector.broadcast %cst_24 : f32 to vector<4x8xf32>
      %91 = arith.maximumf %89, %90 : vector<4x8xf32>
      %92 = vector.shape_cast %91 : vector<4x8xf32> to vector<1x4x8xf32>
      %c0_25 = arith.constant 0 : index
      %93 = arith.index_cast %11 : i32 to index
      %c0_26 = arith.constant 0 : index
      %c0_27 = arith.constant 0 : index
      %94 = vector.load %arg4[%c0_25, %93, %c0_26, %c0_27] : memref<1x4x4x8xf32, #tpu.memory_space<vmem>>, vector<1x1x4x8xf32>
      %95 = vector.shape_cast %94 : vector<1x1x4x8xf32> to vector<1x4x8xf32>
      %96 = vector.shape_cast %92 : vector<1x4x8xf32> to vector<1x1x4x8xf32>
      tpu.vector_store %arg4[%c0_25, %93, %c0_26, %c0_27], %96 {strides = array<i32>} : memref<1x4x4x8xf32, #tpu.memory_space<vmem>>, vector<1x1x4x8xf32>,
    }
    %c4_i32_12 = arith.constant 4 : i32
    return
  }
  func.func @transform_0(%arg0: i32) -> (i32, i32, i32, i32) {
    %c0_i32 = arith.constant 0 : i32
    %c0_i32_0 = arith.constant 0 : i32
    %c0_i32_1 = arith.constant 0 : i32
    %c0_i32_2 = arith.constant 0 : i32
    return %arg0, %c0_i32, %c0_i32_0, %c0_i32_1 : i32, i32, i32, i32
  }
  func.func @transform_1(%arg0: i32) -> (i32, i32) {
    %c0_i32 = arith.constant 0 : i32
    %c0_i32_0 = arith.constant 0 : i32
    %c0_i32_1 = arith.constant 0 : i32
    return %c0_i32, %c0_i32_0 : i32, i32
  }
  func.func @transform_2(%arg0: i32) -> (i32, i32) {
    %c0_i32 = arith.constant 0 : i32
    %c0_i32_0 = arith.constant 0 : i32
    %c0_i32_1 = arith.constant 0 : i32
    return %c0_i32, %c0_i32_0 : i32, i32
  }
  func.func @transform_3(%arg0: i32) -> (i32, i32, i32, i32) {
    %c0_i32 = arith.constant 0 : i32
    %c0_i32_0 = arith.constant 0 : i32
    %c0_i32_1 = arith.constant 0 : i32
    %c0_i32_2 = arith.constant 0 : i32
    return %arg0, %c0_i32, %c0_i32_0, %c0_i32_1 : i32, i32, i32, i32
  }
}

module attributes {stable_mosaic.version = 11 : i64} {
  func.func @kernel(%arg0: i32, %arg1: memref<1x4x4x8xf32, #tpu.memory_space<vmem>>, %arg2: memref<128x16xf32, #tpu.memory_space<vmem>>, %arg3: memref<1x16xf32, #tpu.memory_space<vmem>>, %arg4: memref<1x2x2x16xf32, #tpu.memory_space<vmem>>, %arg5: memref<8x8x8xf32, #tpu.memory_space<vmem>>, %arg6: memref<4x16xf32, #tpu.memory_space<vmem>>) attributes {dimension_semantics = [#tpu.dimension_semantics<parallel>], iteration_bounds = array<i64: 2>, scalar_prefetch = 0 : i64, scratch_operands = 2 : i64, tpu.core_type = #tpu.core_type<tc>, window_params = [{transform_indices = @transform_0, window_bounds = array<i64: 1, 4, 4, 8>}, {pipeline_mode = #tpu.pipeline_mode<synchronous>, transform_indices = @transform_1, window_bounds = array<i64: 128, 16>}, {pipeline_mode = #tpu.pipeline_mode<synchronous>, transform_indices = @transform_2, window_bounds = array<i64: 1, 16>}, {transform_indices = @transform_3, window_bounds = array<i64: 1, 2, 2, 16>}]} {
    %cst = arith.constant 0.000000e+00 : f32
    %0 = vector.broadcast %cst : f32 to vector<8x8x8xf32>
    %c0 = arith.constant 0 : index
    %c0_0 = arith.constant 0 : index
    %c0_1 = arith.constant 0 : index
    %1 = vector.load %arg5[%c0, %c0_0, %c0_1] : memref<8x8x8xf32, #tpu.memory_space<vmem>>, vector<8x8x8xf32>
    tpu.vector_store %arg5[%c0, %c0_0, %c0_1], %0 {strides = array<i32>} : memref<8x8x8xf32, #tpu.memory_space<vmem>>, vector<8x8x8xf32>,
    %c0_2 = arith.constant 0 : index
    %c0_3 = arith.constant 0 : index
    %c0_4 = arith.constant 0 : index
    %c0_5 = arith.constant 0 : index
    %2 = vector.load %arg1[%c0_2, %c0_3, %c0_4, %c0_5] : memref<1x4x4x8xf32, #tpu.memory_space<vmem>>, vector<1x4x4x8xf32>
    %3 = vector.shape_cast %2 : vector<1x4x4x8xf32> to vector<4x4x8xf32>
    %c2 = arith.constant 2 : index
    %c2_6 = arith.constant 2 : index
    %c0_7 = arith.constant 0 : index
    %4 = vector.load %arg5[%c2, %c2_6, %c0_7] : memref<8x8x8xf32, #tpu.memory_space<vmem>>, vector<4x4x8xf32>
    tpu.vector_store %arg5[%c2, %c2_6, %c0_7], %3 {strides = array<i32>} : memref<8x8x8xf32, #tpu.memory_space<vmem>>, vector<4x4x8xf32>,
    %c0_8 = arith.constant 0 : index
    %c0_9 = arith.constant 0 : index
    %5 = vector.load %arg2[%c0_8, %c0_9] : memref<128x16xf32, #tpu.memory_space<vmem>>, vector<128x16xf32>
    %c0_10 = arith.constant 0 : index
    %c0_11 = arith.constant 0 : index
    %6 = vector.load %arg3[%c0_10, %c0_11] : memref<1x16xf32, #tpu.memory_space<vmem>>, vector<1x16xf32>
    %7 = vector.shape_cast %6 : vector<1x16xf32> to vector<1x16xf32>
    %8 = vector.broadcast %7 : vector<1x16xf32> to vector<2x16xf32>
    %c0_i32 = arith.constant 0 : i32
    %c2_i32 = arith.constant 2 : i32
    %9 = arith.addi %c0_i32, %c2_i32 : i32
    %c1_i32 = arith.constant 1 : i32
    scf.for %arg7 = %c0_i32 to %9 step %c1_i32  : i32 {
      %c1_i32_13 = arith.constant 1 : i32
      %10 = arith.muli %arg7, %c1_i32_13 : i32
      %c0_i32_14 = arith.constant 0 : i32
      %11 = arith.addi %c0_i32_14, %10 : i32
      %c2_i32_15 = arith.constant 2 : i32
      %12 = arith.muli %c2_i32_15, %11 : i32
      %13 = tpu.assume_multiple %12, 2 : i32
      %14 = arith.index_cast %13 : i32 to index
      %c0_16 = arith.constant 0 : index
      %c0_17 = arith.constant 0 : index
      %15 = vector.load %arg5[%14, %c0_16, %c0_17] : memref<8x8x8xf32, #tpu.memory_space<vmem>>, vector<5x8x8xf32>
      %16 = vector.extract_strided_slice %15 {offsets = [0, 0, 0], sizes = [1, 4, 8], strides = [1, 1, 1]} : vector<5x8x8xf32> to vector<1x4x8xf32>
      %17 = vector.shape_cast %16 : vector<1x4x8xf32> to vector<4x8xf32>
      %18 = vector.extract_strided_slice %15 {offsets = [0, 1, 0], sizes = [1, 4, 8], strides = [1, 1, 1]} : vector<5x8x8xf32> to vector<1x4x8xf32>
      %19 = vector.shape_cast %18 : vector<1x4x8xf32> to vector<4x8xf32>
      %20 = vector.extract_strided_slice %15 {offsets = [0, 2, 0], sizes = [1, 4, 8], strides = [1, 1, 1]} : vector<5x8x8xf32> to vector<1x4x8xf32>
      %21 = vector.shape_cast %20 : vector<1x4x8xf32> to vector<4x8xf32>
      %22 = vector.extract_strided_slice %15 {offsets = [0, 3, 0], sizes = [1, 4, 8], strides = [1, 1, 1]} : vector<5x8x8xf32> to vector<1x4x8xf32>
      %23 = vector.shape_cast %22 : vector<1x4x8xf32> to vector<4x8xf32>
      %24 = vector.extract_strided_slice %15 {offsets = [1, 0, 0], sizes = [1, 4, 8], strides = [1, 1, 1]} : vector<5x8x8xf32> to vector<1x4x8xf32>
      %25 = vector.shape_cast %24 : vector<1x4x8xf32> to vector<4x8xf32>
      %26 = vector.extract_strided_slice %15 {offsets = [1, 1, 0], sizes = [1, 4, 8], strides = [1, 1, 1]} : vector<5x8x8xf32> to vector<1x4x8xf32>
      %27 = vector.shape_cast %26 : vector<1x4x8xf32> to vector<4x8xf32>
      %28 = vector.extract_strided_slice %15 {offsets = [1, 2, 0], sizes = [1, 4, 8], strides = [1, 1, 1]} : vector<5x8x8xf32> to vector<1x4x8xf32>
      %29 = vector.shape_cast %28 : vector<1x4x8xf32> to vector<4x8xf32>
      %30 = vector.extract_strided_slice %15 {offsets = [1, 3, 0], sizes = [1, 4, 8], strides = [1, 1, 1]} : vector<5x8x8xf32> to vector<1x4x8xf32>
      %31 = vector.shape_cast %30 : vector<1x4x8xf32> to vector<4x8xf32>
      %32 = vector.extract_strided_slice %15 {offsets = [2, 0, 0], sizes = [1, 4, 8], strides = [1, 1, 1]} : vector<5x8x8xf32> to vector<1x4x8xf32>
      %33 = vector.shape_cast %32 : vector<1x4x8xf32> to vector<4x8xf32>
      %34 = vector.extract_strided_slice %15 {offsets = [2, 1, 0], sizes = [1, 4, 8], strides = [1, 1, 1]} : vector<5x8x8xf32> to vector<1x4x8xf32>
      %35 = vector.shape_cast %34 : vector<1x4x8xf32> to vector<4x8xf32>
      %36 = vector.extract_strided_slice %15 {offsets = [2, 2, 0], sizes = [1, 4, 8], strides = [1, 1, 1]} : vector<5x8x8xf32> to vector<1x4x8xf32>
      %37 = vector.shape_cast %36 : vector<1x4x8xf32> to vector<4x8xf32>
      %38 = vector.extract_strided_slice %15 {offsets = [2, 3, 0], sizes = [1, 4, 8], strides = [1, 1, 1]} : vector<5x8x8xf32> to vector<1x4x8xf32>
      %39 = vector.shape_cast %38 : vector<1x4x8xf32> to vector<4x8xf32>
      %40 = vector.extract_strided_slice %15 {offsets = [3, 0, 0], sizes = [1, 4, 8], strides = [1, 1, 1]} : vector<5x8x8xf32> to vector<1x4x8xf32>
      %41 = vector.shape_cast %40 : vector<1x4x8xf32> to vector<4x8xf32>
      %42 = vector.extract_strided_slice %15 {offsets = [3, 1, 0], sizes = [1, 4, 8], strides = [1, 1, 1]} : vector<5x8x8xf32> to vector<1x4x8xf32>
      %43 = vector.shape_cast %42 : vector<1x4x8xf32> to vector<4x8xf32>
      %44 = vector.extract_strided_slice %15 {offsets = [3, 2, 0], sizes = [1, 4, 8], strides = [1, 1, 1]} : vector<5x8x8xf32> to vector<1x4x8xf32>
      %45 = vector.shape_cast %44 : vector<1x4x8xf32> to vector<4x8xf32>
      %46 = vector.extract_strided_slice %15 {offsets = [3, 3, 0], sizes = [1, 4, 8], strides = [1, 1, 1]} : vector<5x8x8xf32> to vector<1x4x8xf32>
      %47 = vector.shape_cast %46 : vector<1x4x8xf32> to vector<4x8xf32>
      %48 = tpu.concatenate %17, %19, %21, %23, %25, %27, %29, %31, %33, %35, %37, %39, %41, %43, %45, %47 in 1 : vector<4x8xf32>, vector<4x8xf32>, vector<4x8xf32>, vector<4x8xf32>, vector<4x8xf32>, vector<4x8xf32>, vector<4x8xf32>, vector<4x8xf32>, vector<4x8xf32>, vector<4x8xf32>, vector<4x8xf32>, vector<4x8xf32>, vector<4x8xf32>, vector<4x8xf32>, vector<4x8xf32>, vector<4x8xf32> -> vector<4x128xf32>
      %cst_18 = arith.constant dense<0.000000e+00> : vector<4x16xf32>
      %49 = tpu.matmul %48, %5, %cst_18 {dimension_numbers = #tpu.dot_dimension_numbers<[1], [0], [0], [1], [0, 0, 1, 1], [], []>} : vector<4x128xf32>, vector<128x16xf32>, vector<4x16xf32> -> vector<4x16xf32>
      %50 = vector.extract_strided_slice %15 {offsets = [1, 0, 0], sizes = [1, 4, 8], strides = [1, 1, 1]} : vector<5x8x8xf32> to vector<1x4x8xf32>
      %51 = vector.shape_cast %50 : vector<1x4x8xf32> to vector<4x8xf32>
      %52 = vector.extract_strided_slice %15 {offsets = [1, 1, 0], sizes = [1, 4, 8], strides = [1, 1, 1]} : vector<5x8x8xf32> to vector<1x4x8xf32>
      %53 = vector.shape_cast %52 : vector<1x4x8xf32> to vector<4x8xf32>
      %54 = vector.extract_strided_slice %15 {offsets = [1, 2, 0], sizes = [1, 4, 8], strides = [1, 1, 1]} : vector<5x8x8xf32> to vector<1x4x8xf32>
      %55 = vector.shape_cast %54 : vector<1x4x8xf32> to vector<4x8xf32>
      %56 = vector.extract_strided_slice %15 {offsets = [1, 3, 0], sizes = [1, 4, 8], strides = [1, 1, 1]} : vector<5x8x8xf32> to vector<1x4x8xf32>
      %57 = vector.shape_cast %56 : vector<1x4x8xf32> to vector<4x8xf32>
      %58 = vector.extract_strided_slice %15 {offsets = [2, 0, 0], sizes = [1, 4, 8], strides = [1, 1, 1]} : vector<5x8x8xf32> to vector<1x4x8xf32>
      %59 = vector.shape_cast %58 : vector<1x4x8xf32> to vector<4x8xf32>
      %60 = vector.extract_strided_slice %15 {offsets = [2, 1, 0], sizes = [1, 4, 8], strides = [1, 1, 1]} : vector<5x8x8xf32> to vector<1x4x8xf32>
      %61 = vector.shape_cast %60 : vector<1x4x8xf32> to vector<4x8xf32>
      %62 = vector.extract_strided_slice %15 {offsets = [2, 2, 0], sizes = [1, 4, 8], strides = [1, 1, 1]} : vector<5x8x8xf32> to vector<1x4x8xf32>
      %63 = vector.shape_cast %62 : vector<1x4x8xf32> to vector<4x8xf32>
      %64 = vector.extract_strided_slice %15 {offsets = [2, 3, 0], sizes = [1, 4, 8], strides = [1, 1, 1]} : vector<5x8x8xf32> to vector<1x4x8xf32>
      %65 = vector.shape_cast %64 : vector<1x4x8xf32> to vector<4x8xf32>
      %66 = vector.extract_strided_slice %15 {offsets = [3, 0, 0], sizes = [1, 4, 8], strides = [1, 1, 1]} : vector<5x8x8xf32> to vector<1x4x8xf32>
      %67 = vector.shape_cast %66 : vector<1x4x8xf32> to vector<4x8xf32>
      %68 = vector.extract_strided_slice %15 {offsets = [3, 1, 0], sizes = [1, 4, 8], strides = [1, 1, 1]} : vector<5x8x8xf32> to vector<1x4x8xf32>
      %69 = vector.shape_cast %68 : vector<1x4x8xf32> to vector<4x8xf32>
      %70 = vector.extract_strided_slice %15 {offsets = [3, 2, 0], sizes = [1, 4, 8], strides = [1, 1, 1]} : vector<5x8x8xf32> to vector<1x4x8xf32>
      %71 = vector.shape_cast %70 : vector<1x4x8xf32> to vector<4x8xf32>
      %72 = vector.extract_strided_slice %15 {offsets = [3, 3, 0], sizes = [1, 4, 8], strides = [1, 1, 1]} : vector<5x8x8xf32> to vector<1x4x8xf32>
      %73 = vector.shape_cast %72 : vector<1x4x8xf32> to vector<4x8xf32>
      %74 = vector.extract_strided_slice %15 {offsets = [4, 0, 0], sizes = [1, 4, 8], strides = [1, 1, 1]} : vector<5x8x8xf32> to vector<1x4x8xf32>
      %75 = vector.shape_cast %74 : vector<1x4x8xf32> to vector<4x8xf32>
      %76 = vector.extract_strided_slice %15 {offsets = [4, 1, 0], sizes = [1, 4, 8], strides = [1, 1, 1]} : vector<5x8x8xf32> to vector<1x4x8xf32>
      %77 = vector.shape_cast %76 : vector<1x4x8xf32> to vector<4x8xf32>
      %78 = vector.extract_strided_slice %15 {offsets = [4, 2, 0], sizes = [1, 4, 8], strides = [1, 1, 1]} : vector<5x8x8xf32> to vector<1x4x8xf32>
      %79 = vector.shape_cast %78 : vector<1x4x8xf32> to vector<4x8xf32>
      %80 = vector.extract_strided_slice %15 {offsets = [4, 3, 0], sizes = [1, 4, 8], strides = [1, 1, 1]} : vector<5x8x8xf32> to vector<1x4x8xf32>
      %81 = vector.shape_cast %80 : vector<1x4x8xf32> to vector<4x8xf32>
      %82 = tpu.concatenate %51, %53, %55, %57, %59, %61, %63, %65, %67, %69, %71, %73, %75, %77, %79, %81 in 1 : vector<4x8xf32>, vector<4x8xf32>, vector<4x8xf32>, vector<4x8xf32>, vector<4x8xf32>, vector<4x8xf32>, vector<4x8xf32>, vector<4x8xf32>, vector<4x8xf32>, vector<4x8xf32>, vector<4x8xf32>, vector<4x8xf32>, vector<4x8xf32>, vector<4x8xf32>, vector<4x8xf32>, vector<4x8xf32> -> vector<4x128xf32>
      %cst_19 = arith.constant dense<0.000000e+00> : vector<4x16xf32>
      %83 = tpu.matmul %82, %5, %cst_19 {dimension_numbers = #tpu.dot_dimension_numbers<[1], [0], [0], [1], [0, 0, 1, 1], [], []>} : vector<4x128xf32>, vector<128x16xf32>, vector<4x16xf32> -> vector<4x16xf32>
      %84 = arith.maximumf %49, %83 : vector<4x16xf32>
      %c0_20 = arith.constant 0 : index
      %c0_21 = arith.constant 0 : index
      %85 = vector.load %arg6[%c0_20, %c0_21] : memref<4x16xf32, #tpu.memory_space<vmem>>, vector<4x16xf32>
      tpu.vector_store %arg6[%c0_20, %c0_21], %84 {strides = array<i32>} : memref<4x16xf32, #tpu.memory_space<vmem>>, vector<4x16xf32>,
      %c0_22 = arith.constant 0 : index
      %c0_23 = arith.constant 0 : index
      %86 = tpu.strided_load %arg6[%c0_22, %c0_23] {strides = array<i32: 2, 1>} : memref<4x16xf32, #tpu.memory_space<vmem>>, vector<2x16xf32>
      %c1 = arith.constant 1 : index
      %c0_24 = arith.constant 0 : index
      %87 = tpu.strided_load %arg6[%c1, %c0_24] {strides = array<i32: 2, 1>} : memref<4x16xf32, #tpu.memory_space<vmem>>, vector<2x16xf32>
      %88 = arith.maximumf %86, %87 : vector<2x16xf32>
      %89 = arith.addf %88, %8 : vector<2x16xf32>
      %cst_25 = arith.constant 0.000000e+00 : f32
      %90 = vector.broadcast %cst_25 : f32 to vector<2x16xf32>
      %91 = arith.maximumf %89, %90 : vector<2x16xf32>
      %92 = vector.shape_cast %91 : vector<2x16xf32> to vector<1x2x16xf32>
      %c0_26 = arith.constant 0 : index
      %93 = arith.index_cast %11 : i32 to index
      %c0_27 = arith.constant 0 : index
      %c0_28 = arith.constant 0 : index
      %94 = vector.load %arg4[%c0_26, %93, %c0_27, %c0_28] : memref<1x2x2x16xf32, #tpu.memory_space<vmem>>, vector<1x1x2x16xf32>
      %95 = vector.shape_cast %94 : vector<1x1x2x16xf32> to vector<1x2x16xf32>
      %96 = vector.shape_cast %92 : vector<1x2x16xf32> to vector<1x1x2x16xf32>
      tpu.vector_store %arg4[%c0_26, %93, %c0_27, %c0_28], %96 {strides = array<i32>} : memref<1x2x2x16xf32, #tpu.memory_space<vmem>>, vector<1x1x2x16xf32>,
    }
    %c2_i32_12 = arith.constant 2 : i32
    return
  }
  func.func @transform_0(%arg0: i32) -> (i32, i32, i32, i32) {
    %c0_i32 = arith.constant 0 : i32
    %c0_i32_0 = arith.constant 0 : i32
    %c0_i32_1 = arith.constant 0 : i32
    %c0_i32_2 = arith.constant 0 : i32
    return %arg0, %c0_i32, %c0_i32_0, %c0_i32_1 : i32, i32, i32, i32
  }
  func.func @transform_1(%arg0: i32) -> (i32, i32) {
    %c0_i32 = arith.constant 0 : i32
    %c0_i32_0 = arith.constant 0 : i32
    %c0_i32_1 = arith.constant 0 : i32
    return %c0_i32, %c0_i32_0 : i32, i32
  }
  func.func @transform_2(%arg0: i32) -> (i32, i32) {
    %c0_i32 = arith.constant 0 : i32
    %c0_i32_0 = arith.constant 0 : i32
    %c0_i32_1 = arith.constant 0 : i32
    return %c0_i32, %c0_i32_0 : i32, i32
  }
  func.func @transform_3(%arg0: i32) -> (i32, i32, i32, i32) {
    %c0_i32 = arith.constant 0 : i32
    %c0_i32_0 = arith.constant 0 : i32
    %c0_i32_1 = arith.constant 0 : i32
    %c0_i32_2 = arith.constant 0 : i32
    return %arg0, %c0_i32, %c0_i32_0, %c0_i32_1 : i32, i32, i32, i32
  }
}

module attributes {stable_mosaic.version = 11 : i64} {
  func.func @_fc_fused_kernel(%arg0: i32, %arg1: memref<2x64xf32, #tpu.memory_space<vmem>>, %arg2: memref<64x64xf32, #tpu.memory_space<vmem>>, %arg3: memref<1x64xf32, #tpu.memory_space<vmem>>, %arg4: memref<64x8xf32, #tpu.memory_space<vmem>>, %arg5: memref<1x8xf32, #tpu.memory_space<vmem>>, %arg6: memref<2x8xf32, #tpu.memory_space<vmem>>, %arg7: memref<2x8xf32, #tpu.memory_space<vmem>>) attributes {dimension_semantics = [#tpu.dimension_semantics<arbitrary>], iteration_bounds = array<i64: 1>, scalar_prefetch = 0 : i64, scratch_operands = 1 : i64, tpu.core_type = #tpu.core_type<tc>, window_params = [{pipeline_mode = #tpu.pipeline_mode<synchronous>, transform_indices = @transform_0, window_bounds = array<i64: 2, 64>}, {transform_indices = @transform_1, window_bounds = array<i64: 64, 64>}, {transform_indices = @transform_2, window_bounds = array<i64: 1, 64>}, {transform_indices = @transform_3, window_bounds = array<i64: 64, 8>}, {pipeline_mode = #tpu.pipeline_mode<synchronous>, transform_indices = @transform_4, window_bounds = array<i64: 1, 8>}, {pipeline_mode = #tpu.pipeline_mode<synchronous>, transform_indices = @transform_5, window_bounds = array<i64: 2, 8>}]} {
    %c0_i32 = arith.constant 0 : i32
    %0 = arith.cmpi eq, %arg0, %c0_i32 : i32
    %1 = arith.extui %0 : i1 to i32
    %c0_i32_0 = arith.constant 0 : i32
    %2 = arith.cmpi ne, %1, %c0_i32_0 : i32
    scf.if %2 {
      %cst_16 = arith.constant 0.000000e+00 : f32
      %19 = vector.broadcast %cst_16 : f32 to vector<2x8xf32>
      %c0_17 = arith.constant 0 : index
      %c0_18 = arith.constant 0 : index
      %20 = vector.load %arg7[%c0_17, %c0_18] : memref<2x8xf32, #tpu.memory_space<vmem>>, vector<2x8xf32>
      tpu.vector_store %arg7[%c0_17, %c0_18], %19 {strides = array<i32>} : memref<2x8xf32, #tpu.memory_space<vmem>>, vector<2x8xf32>,
    } else {
    }
    %c0 = arith.constant 0 : index
    %c0_1 = arith.constant 0 : index
    %3 = vector.load %arg1[%c0, %c0_1] : memref<2x64xf32, #tpu.memory_space<vmem>>, vector<2x64xf32>
    %c0_2 = arith.constant 0 : index
    %c0_3 = arith.constant 0 : index
    %4 = vector.load %arg2[%c0_2, %c0_3] : memref<64x64xf32, #tpu.memory_space<vmem>>, vector<64x64xf32>
    %cst = arith.constant dense<0.000000e+00> : vector<2x64xf32>
    %5 = tpu.matmul %3, %4, %cst {dimension_numbers = #tpu.dot_dimension_numbers<[1], [0], [0], [1], [0, 0, 1, 1], [], []>} : vector<2x64xf32>, vector<64x64xf32>, vector<2x64xf32> -> vector<2x64xf32>
    %c0_4 = arith.constant 0 : index
    %c0_5 = arith.constant 0 : index
    %6 = vector.load %arg3[%c0_4, %c0_5] : memref<1x64xf32, #tpu.memory_space<vmem>>, vector<1x64xf32>
    %7 = vector.broadcast %6 : vector<1x64xf32> to vector<2x64xf32>
    %8 = arith.addf %5, %7 : vector<2x64xf32>
    %cst_6 = arith.constant 0.000000e+00 : f32
    %9 = vector.broadcast %cst_6 : f32 to vector<2x64xf32>
    %10 = arith.maximumf %8, %9 : vector<2x64xf32>
    %c0_7 = arith.constant 0 : index
    %c0_8 = arith.constant 0 : index
    %11 = vector.load %arg7[%c0_7, %c0_8] : memref<2x8xf32, #tpu.memory_space<vmem>>, vector<2x8xf32>
    %c0_9 = arith.constant 0 : index
    %c0_10 = arith.constant 0 : index
    %12 = vector.load %arg4[%c0_9, %c0_10] : memref<64x8xf32, #tpu.memory_space<vmem>>, vector<64x8xf32>
    %cst_11 = arith.constant dense<0.000000e+00> : vector<2x8xf32>
    %13 = tpu.matmul %10, %12, %cst_11 {dimension_numbers = #tpu.dot_dimension_numbers<[1], [0], [0], [1], [0, 0, 1, 1], [], []>} : vector<2x64xf32>, vector<64x8xf32>, vector<2x8xf32> -> vector<2x8xf32>
    %14 = arith.addf %11, %13 : vector<2x8xf32>
    %c0_12 = arith.constant 0 : index
    %c0_13 = arith.constant 0 : index
    %15 = vector.load %arg7[%c0_12, %c0_13] : memref<2x8xf32, #tpu.memory_space<vmem>>, vector<2x8xf32>
    tpu.vector_store %arg7[%c0_12, %c0_13], %14 {strides = array<i32>} : memref<2x8xf32, #tpu.memory_space<vmem>>, vector<2x8xf32>,
    %c0_i32_14 = arith.constant 0 : i32
    %16 = arith.cmpi eq, %arg0, %c0_i32_14 : i32
    %17 = arith.extui %16 : i1 to i32
    %c0_i32_15 = arith.constant 0 : i32
    %18 = arith.cmpi ne, %17, %c0_i32_15 : i32
    scf.if %18 {
      %c0_16 = arith.constant 0 : index
      %c0_17 = arith.constant 0 : index
      %19 = vector.load %arg7[%c0_16, %c0_17] : memref<2x8xf32, #tpu.memory_space<vmem>>, vector<2x8xf32>
      %c0_18 = arith.constant 0 : index
      %c0_19 = arith.constant 0 : index
      %20 = vector.load %arg5[%c0_18, %c0_19] : memref<1x8xf32, #tpu.memory_space<vmem>>, vector<1x8xf32>
      %21 = vector.broadcast %20 : vector<1x8xf32> to vector<2x8xf32>
      %22 = arith.addf %19, %21 : vector<2x8xf32>
      %cst_20 = arith.constant 0.000000e+00 : f32
      %23 = vector.broadcast %cst_20 : f32 to vector<2x8xf32>
      %24 = arith.maximumf %22, %23 : vector<2x8xf32>
      %c0_21 = arith.constant 0 : index
      %c0_22 = arith.constant 0 : index
      %25 = vector.load %arg6[%c0_21, %c0_22] : memref<2x8xf32, #tpu.memory_space<vmem>>, vector<2x8xf32>
      tpu.vector_store %arg6[%c0_21, %c0_22], %24 {strides = array<i32>} : memref<2x8xf32, #tpu.memory_space<vmem>>, vector<2x8xf32>,
    } else {
    }
    return
  }
  func.func @transform_0(%arg0: i32) -> (i32, i32) {
    %c0_i32 = arith.constant 0 : i32
    %c0_i32_0 = arith.constant 0 : i32
    %c0_i32_1 = arith.constant 0 : i32
    return %c0_i32, %c0_i32_0 : i32, i32
  }
  func.func @transform_1(%arg0: i32) -> (i32, i32) {
    %c0_i32 = arith.constant 0 : i32
    %c0_i32_0 = arith.constant 0 : i32
    return %c0_i32, %arg0 : i32, i32
  }
  func.func @transform_2(%arg0: i32) -> (i32, i32) {
    %c0_i32 = arith.constant 0 : i32
    %c0_i32_0 = arith.constant 0 : i32
    return %c0_i32, %arg0 : i32, i32
  }
  func.func @transform_3(%arg0: i32) -> (i32, i32) {
    %c0_i32 = arith.constant 0 : i32
    %c0_i32_0 = arith.constant 0 : i32
    return %arg0, %c0_i32 : i32, i32
  }
  func.func @transform_4(%arg0: i32) -> (i32, i32) {
    %c0_i32 = arith.constant 0 : i32
    %c0_i32_0 = arith.constant 0 : i32
    %c0_i32_1 = arith.constant 0 : i32
    return %c0_i32, %c0_i32_0 : i32, i32
  }
  func.func @transform_5(%arg0: i32) -> (i32, i32) {
    %c0_i32 = arith.constant 0 : i32
    %c0_i32_0 = arith.constant 0 : i32
    %c0_i32_1 = arith.constant 0 : i32
    return %c0_i32, %c0_i32_0 : i32, i32
  }
}

</mosaic_0001>

<llo_original>
// kernel: perspective_forward.5
$region0: #{perspective_forward.5}
  #allocation0 [shape = 'u32[]', space=smem, size = 0x4, offset = 0x4, fixed_abs, tag = 'smem constant byte address 0x4 - core index']
  #allocation1 [shape = 'u32[144,128]{1,0:T(1,128)}', space=vmem, size = 0x12000, scoped, tag = 'internal scratch']
  #allocation2 [shape = 'f32[12,12,4]{2,1,0:T(8,128)}', space=vmem, size = 0x18000, scoped, tag = 'scratch operand']
  #allocation3 [shape = 'f32[8,8]{1,0:T(8,128)}', space=vmem, size = 0x1000, scoped, tag = 'scratch operand']
  %s0 = inlined_call_operand.vmem [shape: f32[2,8,8,4], index: 0, kind: input, shape index: {}]
  %s1 = inlined_call_operand.vmem [shape: f32[64,8], index: 1, kind: input, shape index: {}]
  %s2 = inlined_call_operand.vmem [shape: f32[1,8], index: 2, kind: input, shape index: {}]
  %s3 = inlined_call_operand.vmem [shape: f32[2,4,4,8], index: 3, kind: output, shape index: {}]
  %s4 = sld [smem:[#allocation0]]
  $region52: #{perspective_forward.5} parent=0
    _
  %s6 = ssub.s32 1, %s4
  %s7 = scalar_select 0, %s6, %s4
  loop: start=0, step=1, limit=4
  $region2: #{perspective_forward.5} parent=0 // loop_pre_header
    _
  $region3: #{perspective_forward.5} parent=0 // loop_header
    %s9 = sphi 0, %s13
    %p10 = scmp.ge.s32.totalorder %s9, 4
    %s19 = sphi 0, %s21
    %s22 = sphi 0, %s19
    %s23 = sphi 0, %s22
    %s39 = sphi 0, %s23
    %s43 = sphi 0, %s43
    %s45 = sphi 0, %s43
    %s46 = sphi 0, %s45
    %s60 = sphi 0, %s46
    %s64 = sphi 0, %s64
    %s66 = sphi 0, %s64
    %s67 = sphi 0, %s66
    %s81 = sphi 0, %s67
    %s87 = sphi 0, %s89
    %s90 = sphi 0, %s87
    %s91 = sphi 0, %s90
    %s107 = sphi 0, %s91
  $region4: #{perspective_forward.5} parent=0 // loop_header_branch
    %12 = sbr.rel (%p10) target = $region8
  $region5: #{perspective_forward.5} parent=0 // loop_body
    %s14 = ssub.s32 %s9, 1
    %s15 = ssub.s32 %s9, 2
    %s16 = sadd.s32 %s9, 1
    %s17 = ssub.s32 %s9, %s16
    %p18 = scmp.eq.s32.totalorder %s17, 0
    %s20 = sadd.s32 %s19, 1
    %s21 = scalar_select %p18, %s19, %s20
    %p24 = pneg %p18
    %p25 = scmp.eq.s32.totalorder %s9, 1
    %p26 = por %p24, %p25
    %p27 = scmp.ne.s32.totalorder %s19, %s22
    %p28 = scmp.eq.s32.totalorder %s9, 0
    %p29 = por %p27, %p28
    %p30 = scmp.ne.s32.totalorder %s19, %s22
    %p31 = scmp.eq.s32.totalorder %s14, 1
    %p32 = por %p30, %p31
    %p33 = scmp.ne.s32.totalorder %s22, %s23
    %p34 = scmp.eq.s32.totalorder %s14, 0
    %p35 = por %p33, %p34
    %p36 = scmp.ne.s32.totalorder %s22, %s23
    %p37 = scmp.eq.s32.totalorder %s15, 1
    %p38 = por %p36, %p37
    %p40 = scmp.ne.s32.totalorder %s23, %s39
    %p41 = scmp.eq.s32.totalorder %s15, 0
    %p42 = por %p40, %p41
    %s44 = sadd.s32 %s43, 1
    %p47 = scmp.eq.s32.totalorder %s9, 1
    %p48 = scmp.ne.s32.totalorder %s43, %s45
    %p49 = scmp.eq.s32.totalorder %s9, 0
    %p50 = por %p48, %p49
    %p51 = scmp.ne.s32.totalorder %s43, %s45
    %p52 = scmp.eq.s32.totalorder %s14, 1
    %p53 = por %p51, %p52
    %p54 = scmp.ne.s32.totalorder %s45, %s46
    %p55 = scmp.eq.s32.totalorder %s14, 0
    %p56 = por %p54, %p55
    %p57 = scmp.ne.s32.totalorder %s45, %s46
    %p58 = scmp.eq.s32.totalorder %s15, 1
    %p59 = por %p57, %p58
    %p61 = scmp.ne.s32.totalorder %s46, %s60
    %p62 = scmp.eq.s32.totalorder %s15, 0
    %p63 = por %p61, %p62
    %s65 = sadd.s32 %s64, 1
    %p68 = scmp.eq.s32.totalorder %s9, 1
    %p69 = scmp.ne.s32.totalorder %s64, %s66
    %p70 = scmp.eq.s32.totalorder %s9, 0
    %p71 = por %p69, %p70
    %p72 = scmp.ne.s32.totalorder %s64, %s66
    %p73 = scmp.eq.s32.totalorder %s14, 1
    %p74 = por %p72, %p73
    %p75 = scmp.ne.s32.totalorder %s66, %s67
    %p76 = scmp.eq.s32.totalorder %s14, 0
    %p77 = por %p75, %p76
    %p78 = scmp.ne.s32.totalorder %s66, %s67
    %p79 = scmp.eq.s32.totalorder %s15, 1
    %p80 = por %p78, %p79
    %p82 = scmp.ne.s32.totalorder %s67, %s81
    %p83 = scmp.eq.s32.totalorder %s15, 0
    %p84 = por %p82, %p83
    %s85 = ssub.s32 %s9, %s16
    %p86 = scmp.eq.s32.totalorder %s85, 0
    %s88 = sadd.s32 %s87, 1
    %s89 = scalar_select %p86, %s87, %s88
    %p92 = pneg %p86
    %p93 = scmp.eq.s32.totalorder %s9, 1
    %p94 = por %p92, %p93
    %p95 = scmp.ne.s32.totalorder %s87, %s90
    %p96 = scmp.eq.s32.totalorder %s9, 0
    %p97 = por %p95, %p96
    %p98 = scmp.ne.s32.totalorder %s87, %s90
    %p99 = scmp.eq.s32.totalorder %s14, 1
    %p100 = por %p98, %p99
    %p101 = scmp.ne.s32.totalorder %s90, %s91
    %p102 = scmp.eq.s32.totalorder %s14, 0
    %p103 = por %p101, %p102
    %p104 = scmp.ne.s32.totalorder %s90, %s91
    %p105 = scmp.eq.s32.totalorder %s15, 1
    %p106 = por %p104, %p105
    %p108 = scmp.ne.s32.totalorder %s91, %s107
    %p109 = scmp.eq.s32.totalorder %s15, 0
    %p110 = por %p108, %p109
    %p111 = scmp.le.s32.totalorder 1, %s9
    %p112 = scmp.lt.s32.totalorder %s9, 3
    %p113 = pnand %p111, %p112
    %p114 = pneg %p113
    // Predicated region
    $region9: #{perspective_forward.5} parent=5 // pred_check
      _
    $region10: #{perspective_forward.5} parent=5 // pred_check_branch
      %116 = sbr.rel (%p113) target = $region12
    $region11: #{perspective_forward.5} parent=5 // pred_region
      %s117 = ssub.s32 %s9, 1
      // Predicated region
      $region13: #{perspective_forward.5} parent=11 // pred_check
        %p118 = pneg %p56
      $region14: #{perspective_forward.5} parent=11 // pred_check_branch
        %120 = sbr.rel (%p118) target = $region16
      $region15: #{perspective_forward.5} parent=11 // pred_region
        _
      $region16: #{perspective_forward.5} parent=11 // pred_fallthru
        _
      // Predicated region
      $region17: #{perspective_forward.5} parent=11 // pred_check
        %p121 = pneg %p77
      $region18: #{perspective_forward.5} parent=11 // pred_check_branch
        %123 = sbr.rel (%p121) target = $region20
      $region19: #{perspective_forward.5} parent=11 // pred_region
        _
      $region20: #{perspective_forward.5} parent=11 // pred_fallthru
        _
    $region12: #{perspective_forward.5} parent=5 // pred_fallthru
      _
    %p124 = scmp.lt.s32.totalorder %s9, 2
    // Predicated region
    $region21: #{perspective_forward.5} parent=5 // pred_check
      %p125 = pneg %p124
    $region22: #{perspective_forward.5} parent=5 // pred_check_branch
      %127 = sbr.rel (%p125) target = $region24
    $region23: #{perspective_forward.5} parent=5 // pred_region
      // Predicated region
      $region25: #{perspective_forward.5} parent=23 // pred_check
        %p128 = pneg %p29
      $region26: #{perspective_forward.5} parent=23 // pred_check_branch
        %130 = sbr.rel (%p128) target = $region28
      $region27: #{perspective_forward.5} parent=23 // pred_region
        %p131 = scmp.lt.s32.totalorder %s9, 1
        %s132 = scalar_select %p131, %s9, 1
        %s133 = smul.addr %s132, 8
        %s134 = smul.addr %s133, 8
        %s135 = scalar_lea.vmem %s0, %s134
      $region28: #{perspective_forward.5} parent=23 // pred_fallthru
        _
    $region24: #{perspective_forward.5} parent=5 // pred_fallthru
      _
    %p136 = scmp.le.s32.totalorder 1, %s9
    %p137 = scmp.lt.s32.totalorder %s9, 3
    %p138 = pnand %p136, %p137
    %p139 = pneg %p138
    // Predicated region
    $region29: #{perspective_forward.5} parent=5 // pred_check
      _
    $region30: #{perspective_forward.5} parent=5 // pred_check_branch
      %141 = sbr.rel (%p138) target = $region32
    $region31: #{perspective_forward.5} parent=5 // pred_region
      %s142 = ssub.s32 %s9, 1
      %p143 = scmp.lt.s32.totalorder %s14, 1
      %s144 = scalar_select %p143, %s14, 1
      %s145 = smul.addr %s144, 8
      %s146 = smul.addr %s145, 8
      %s147 = scalar_lea.vmem %s0, %s146
      %p148 = pneg %p35
      %p149 = pneg %p32
      %p150 = pneg %p56
      %p151 = pneg %p53
      %p152 = pneg %p77
      %p153 = pneg %p74
      %p154 = pneg %p103
      %p155 = pneg %p100
      %p156 = scmp.lt.s32.totalorder %s14, 1
      %s157 = scalar_select %p156, %s14, 1
      %s158 = smul.addr %s157, 4
      %s159 = smul.addr %s158, 4
      %s160 = scalar_lea.vmem %s3, %s159
      %p161 = scmp.lt.s32.totalorder %s14, 1
      %s162 = scalar_select %p161, %s14, 1
      %s163 = smul.addr %s162, 8
      %s164 = smul.addr %s163, 8
      %s165 = scalar_lea.vmem %s0, %s164
      %p166 = scmp.lt.s32.totalorder %s14, 1
      %s167 = scalar_select %p166, %s14, 1
      %s168 = smul.addr %s167, 4
      %s169 = smul.addr %s168, 4
      %s170 = scalar_lea.vmem %s3, %s169
      %vm171 = vcmask 31744
      %172 = vst.msk [vmem:[#allocation2] sm:$0xff] %vm171, 0.0
      %vm173 = vcmask 27648
      %174 = vst.msk [vmem:[#allocation2 + $0x8] sm:$0xf] %vm173, 0.0
      %175 = vst.msk [vmem:[#allocation2 + $0x10] sm:$0xff] %vm171, 0.0
      %176 = vst.msk [vmem:[#allocation2 + $0x18] sm:$0xf] %vm173, 0.0
      %177 = vst.msk [vmem:[#allocation2 + $0x20] sm:$0xff] %vm171, 0.0
      %178 = vst.msk [vmem:[#allocation2 + $0x28] sm:$0xf] %vm173, 0.0
      %179 = vst.msk [vmem:[#allocation2 + $0x30] sm:$0xff] %vm171, 0.0
      %180 = vst.msk [vmem:[#allocation2 + $0x38] sm:$0xf] %vm173, 0.0
      %181 = vst.msk [vmem:[#allocation2 + $0x40] sm:$0xff] %vm171, 0.0
      %182 = vst.msk [vmem:[#allocation2 + $0x48] sm:$0xf] %vm173, 0.0
      %183 = vst.msk [vmem:[#allocation2 + $0x50] sm:$0xff] %vm171, 0.0
      %184 = vst.msk [vmem:[#allocation2 + $0x58] sm:$0xf] %vm173, 0.0
      %185 = vst.msk [vmem:[#allocation2 + $0x60] sm:$0xff] %vm171, 0.0
      %186 = vst.msk [vmem:[#allocation2 + $0x68] sm:$0xf] %vm173, 0.0
      %187 = vst.msk [vmem:[#allocation2 + $0x70] sm:$0xff] %vm171, 0.0
      %188 = vst.msk [vmem:[#allocation2 + $0x78] sm:$0xf] %vm173, 0.0
      %189 = vst.msk [vmem:[#allocation2 + $0x80] sm:$0xff] %vm171, 0.0
      %190 = vst.msk [vmem:[#allocation2 + $0x88] sm:$0xf] %vm173, 0.0
      %191 = vst.msk [vmem:[#allocation2 + $0x90] sm:$0xff] %vm171, 0.0
      %192 = vst.msk [vmem:[#allocation2 + $0x98] sm:$0xf] %vm173, 0.0
      %193 = vst.msk [vmem:[#allocation2 + $0xa0] sm:$0xff] %vm171, 0.0
      %194 = vst.msk [vmem:[#allocation2 + $0xa8] sm:$0xf] %vm173, 0.0
      %195 = vst.msk [vmem:[#allocation2 + $0xb0] sm:$0xff] %vm171, 0.0
      %196 = vst.msk [vmem:[#allocation2 + $0xb8] sm:$0xf] %vm173, 0.0
      %v197 = vld [vmem:[%s165] sm:$0xff]
      %v198 = vld [vmem:[%s165 + $0x8] sm:$0xff]
      %v199 = vld [vmem:[%s165 + $0x10] sm:$0xff]
      %v200 = vld [vmem:[%s165 + $0x18] sm:$0xff]
      %v201 = vld [vmem:[%s165 + $0x20] sm:$0xff]
      %v202 = vld [vmem:[%s165 + $0x28] sm:$0xff]
      %v203 = vld [vmem:[%s165 + $0x30] sm:$0xff]
      %v204 = vld [vmem:[%s165 + $0x38] sm:$0xff]
      %s205 = scalar_lea.vmem [#allocation2], 32
      %206 = vst.msk [vmem:[%s205 + $0x2] sm:$0xff] %vm171, %v197
      %207 = vst.msk [vmem:[%s205 + $0x12] sm:$0xff] %vm171, %v198
      %208 = vst.msk [vmem:[%s205 + $0x22] sm:$0xff] %vm171, %v199
      %209 = vst.msk [vmem:[%s205 + $0x32] sm:$0xff] %vm171, %v200
      %210 = vst.msk [vmem:[%s205 + $0x42] sm:$0xff] %vm171, %v201
      %211 = vst.msk [vmem:[%s205 + $0x52] sm:$0xff] %vm171, %v202
      %212 = vst.msk [vmem:[%s205 + $0x62] sm:$0xff] %vm171, %v203
      %213 = vst.msk [vmem:[%s205 + $0x72] sm:$0xff] %vm171, %v204
      %v214 = vld [vmem:[%s1] sm:$0xff]
      %v215 = vld [vmem:[%s1 + $0x8] sm:$0xff]
      %v216 = vld [vmem:[%s1 + $0x10] sm:$0xff]
      %v217 = vld [vmem:[%s1 + $0x18] sm:$0xff]
      %v218 = vld [vmem:[%s1 + $0x20] sm:$0xff]
      %v219 = vld [vmem:[%s1 + $0x28] sm:$0xff]
      %v220 = vld [vmem:[%s1 + $0x30] sm:$0xff]
      %v221 = vld [vmem:[%s1 + $0x38] sm:$0xff]
      %v222 = vld [vmem:[%s2] sm:$0x1]
      %v224 = vlaneseq
      %v225 = vshrl.u32 %v224, 7
      %v226 = vsub.s32 0, %v225
      %v227 = vrot.slane %v222, %v226
      loop: start=0, step=1, limit=4
      $region33: #{perspective_forward.5} parent=31 // loop_pre_header
        _
      $region34: #{perspective_forward.5} parent=31 // loop_header
        %s230 = sphi 0, %s234
        %p231 = scmp.ge.s32.totalorder %s230, 4
      $region35: #{perspective_forward.5} parent=31 // loop_header_branch
        %233 = sbr.rel (%p231) target = $region39
      $region36: #{perspective_forward.5} parent=31 // loop_body
        %s235 = smul.u32 %s230, 2
        %s236 = smul.u32 %s235, 16
        %s237 = scalar_lea.vmem [#allocation2], %s236
        %v238 = vld [vmem:[%s237] sm:$0xff]
        %v239 = vld [vmem:[%s237 + $0x8] sm:$0xf]
        %v240 = vld [vmem:[%s237 + $0x10] sm:$0xff]
        %v241 = vld [vmem:[%s237 + $0x18] sm:$0xf]
        %v242 = vld [vmem:[%s237 + $0x20] sm:$0xff]
        %v243 = vld [vmem:[%s237 + $0x28] sm:$0xf]
        %v244 = vld [vmem:[%s237 + $0x30] sm:$0xff]
        %v245 = vld [vmem:[%s237 + $0x38] sm:$0xf]
        %v246 = vld [vmem:[%s237 + $0x40] sm:$0xff]
        %v247 = vld [vmem:[%s237 + $0x48] sm:$0xf]
        %vm250 = vcmask 1046528
        %v251 = vrot.slane %v238, 1
        %v252 = vrot.slane %v239, 1
        %v253 = vsel %vm250, %v251, %v252
        %254 = vrot.lane.b32.xlu0 %v253, 4
        %v255 = vpop.permute.xlu0 %254
        %vm257 = vcmask 1045504
        %v258 = vrot.slane %v238, 2
        %v259 = vrot.slane %v239, 2
        %v260 = vsel %vm257, %v258, %v259
        %261 = vrot.lane.b32.xlu0 %v260, 8
        %v262 = vpop.permute.xlu0 %261
        %vm264 = vcmask 1044480
        %v265 = vrot.slane %v238, 3
        %v266 = vrot.slane %v239, 3
        %v267 = vsel %vm264, %v265, %v266
        %268 = vrot.lane.b32.xlu0 %v267, 12
        %v269 = vpop.permute.xlu0 %268
        %272 = vrot.lane.b32.xlu0 %v240, 16
        %v273 = vpop.permute.xlu0 %272
        %v276 = vrot.slane %v240, 1
        %v277 = vrot.slane %v241, 1
        %v278 = vsel %vm250, %v276, %v277
        %279 = vrot.lane.b32.xlu0 %v278, 20
        %v280 = vpop.permute.xlu0 %279
        %v282 = vrot.slane %v240, 2
        %v283 = vrot.slane %v241, 2
        %v284 = vsel %vm257, %v282, %v283
        %285 = vrot.lane.b32.xlu0 %v284, 24
        %v286 = vpop.permute.xlu0 %285
        %v288 = vrot.slane %v240, 3
        %v289 = vrot.slane %v241, 3
        %v290 = vsel %vm264, %v288, %v289
        %291 = vrot.lane.b32.xlu0 %v290, 28
        %v292 = vpop.permute.xlu0 %291
        %295 = vrot.lane.b32.xlu0 %v242, 32
        %v296 = vpop.permute.xlu0 %295
        %v299 = vrot.slane %v242, 1
        %v300 = vrot.slane %v243, 1
        %v301 = vsel %vm250, %v299, %v300
        %302 = vrot.lane.b32.xlu0 %v301, 36
        %v303 = vpop.permute.xlu0 %302
        %v305 = vrot.slane %v242, 2
        %v306 = vrot.slane %v243, 2
        %v307 = vsel %vm257, %v305, %v306
        %308 = vrot.lane.b32.xlu0 %v307, 40
        %v309 = vpop.permute.xlu0 %308
        %v311 = vrot.slane %v242, 3
        %v312 = vrot.slane %v243, 3
        %v313 = vsel %vm264, %v311, %v312
        %314 = vrot.lane.b32.xlu0 %v313, 44
        %v315 = vpop.permute.xlu0 %314
        %318 = vrot.lane.b32.xlu0 %v244, 48
        %v319 = vpop.permute.xlu0 %318
        %v322 = vrot.slane %v244, 1
        %v323 = vrot.slane %v245, 1
        %v324 = vsel %vm250, %v322, %v323
        %325 = vrot.lane.b32.xlu0 %v324, 52
        %v326 = vpop.permute.xlu0 %325
        %v328 = vrot.slane %v244, 2
        %v329 = vrot.slane %v245, 2
        %v330 = vsel %vm257, %v328, %v329
        %331 = vrot.lane.b32.xlu0 %v330, 56
        %v332 = vpop.permute.xlu0 %331
        %v334 = vrot.slane %v244, 3
        %v335 = vrot.slane %v245, 3
        %v336 = vsel %vm264, %v334, %v335
        %337 = vrot.lane.b32.xlu0 %v336, 60
        %v338 = vpop.permute.xlu0 %337
        %v340 = vsel %vm171, %v238, %v255
        %vm341 = vcmask 64512
        %v342 = vsel %vm341, %v340, %v262
        %vm343 = vcmask 97280
        %v344 = vsel %vm343, %v342, %v269
        %vm345 = vcmask 130048
        %v346 = vsel %vm345, %v344, %v273
        %vm347 = vcmask 162816
        %v348 = vsel %vm347, %v346, %v280
        %vm349 = vcmask 195584
        %v350 = vsel %vm349, %v348, %v286
        %vm351 = vcmask 228352
        %v352 = vsel %vm351, %v350, %v292
        %vm353 = vcmask 261120
        %v354 = vsel %vm353, %v352, %v296
        %vm355 = vcmask 293888
        %v356 = vsel %vm355, %v354, %v303
        %vm357 = vcmask 326656
        %v358 = vsel %vm357, %v356, %v309
        %vm359 = vcmask 359424
        %v360 = vsel %vm359, %v358, %v315
        %vm361 = vcmask 392192
        %v362 = vsel %vm361, %v360, %v319
        %vm363 = vcmask 424960
        %v364 = vsel %vm363, %v362, %v326
        %vm365 = vcmask 457728
        %v366 = vsel %vm365, %v364, %v332
        %vm367 = vcmask 490496
        %v368 = vsel %vm367, %v366, %v338
        %vm369 = vcmask 523264
        %v371 = vsel %vm369, %v368, 0
        %373 = vmatprep.subr.mxu0 0.0
        %374 = vmatpush1.msra.mxu0 0.0
        %375 = vmatprep.subr.mxu0 0.0
        %376 = vmatpush1.msra.mxu0 0.0
        %377 = vmatprep.subr.mxu0 0.0
        %378 = vmatpush1.msra.mxu0 0.0
        %379 = vmatprep.subr.mxu0 0.0
        %380 = vmatpush1.msra.mxu0 0.0
        %381 = vmatprep.subr.mxu0 0.0
        %382 = vmatpush1.msra.mxu0 0.0
        %383 = vmatprep.subr.mxu0 0.0
        %384 = vmatpush1.msra.mxu0 0.0
        %385 = vmatprep.subr.mxu0 0.0
        %386 = vmatpush1.msra.mxu0 0.0
        %387 = vmatprep.subr.mxu0 0.0
        %388 = vmatpush1.msra.mxu0 0.0
        %389 = vmatprep.subr.mxu0 0.0
        %390 = vmatpush1.msra.mxu0 %v221
        %391 = vmatprep.subr.mxu0 0.0
        %392 = vmatpush1.msra.mxu0 %v220
        %393 = vmatprep.subr.mxu0 0.0
        %394 = vmatpush1.msra.mxu0 %v219
        %395 = vmatprep.subr.mxu0 0.0
        %396 = vmatpush1.msra.mxu0 %v218
        %397 = vmatprep.subr.mxu0 0.0
        %398 = vmatpush1.msra.mxu0 %v217
        %399 = vmatprep.subr.mxu0 0.0
        %400 = vmatpush1.msra.mxu0 %v216
        %401 = vmatprep.subr.mxu0 0.0
        %402 = vmatpush1.msra.mxu0 %v215
        %403 = vmatprep.subr.mxu0 0.0
        %404 = vmatpush1.msra.mxu0 %v214
        %405 = vmatprep.subr.mxu0 0.0
        %406 = vmatpush2.msra.mxu0 0.0
        %407 = vmatprep.subr.mxu0 0.0
        %408 = vmatpush2.msra.mxu0 0.0
        %409 = vmatprep.subr.mxu0 0.0
        %410 = vmatpush2.msra.mxu0 0.0
        %411 = vmatprep.subr.mxu0 0.0
        %412 = vmatpush2.msra.mxu0 0.0
        %413 = vmatprep.subr.mxu0 0.0
        %414 = vmatpush2.msra.mxu0 0.0
        %415 = vmatprep.subr.mxu0 0.0
        %416 = vmatpush2.msra.mxu0 0.0
        %417 = vmatprep.subr.mxu0 0.0
        %418 = vmatpush2.msra.mxu0 0.0
        %419 = vmatprep.subr.mxu0 0.0
        %420 = vmatpush2.msra.mxu0 0.0
        %421 = vmatprep.subr.mxu0 0.0
        %422 = vmatpush2.msra.mxu0 0.0
        %423 = vmatprep.subr.mxu0 0.0
        %424 = vmatpush2.msra.mxu0 0.0
        %425 = vmatprep.subr.mxu0 0.0
        %426 = vmatpush2.msra.mxu0 0.0
        %427 = vmatprep.subr.mxu0 0.0
        %428 = vmatpush2.msra.mxu0 0.0
        %429 = vmatprep.subr.mxu0 0.0
        %430 = vmatpush2.msra.mxu0 0.0
        %431 = vmatprep.subr.mxu0 0.0
        %432 = vmatpush2.msra.mxu0 0.0
        %433 = vmatprep.subr.mxu0 0.0
        %434 = vmatpush2.msra.mxu0 0.0
        %435 = vmatprep.subr.mxu0 0.0
        %436 = vmatpush2.msra.mxu0 0.0
        %437 = vmatprep.mubr.f32.mxu0 0.0
        %438 = vmatmul.mubr.f32.gmra.mxu0 %v371
        %v439 = vpop.f32.mrf.mxu0
        %v440 = vadd.f32 0.0, %v439
        %v441 = vpop.f32.mrf.mxu0
        %442 = vdwg.mxu0
        %443 = vrot.lane.b32.xlu0 %v278, 4
        %v444 = vpop.permute.xlu0 %443
        %446 = vrot.lane.b32.xlu0 %v284, 8
        %v447 = vpop.permute.xlu0 %446
        %449 = vrot.lane.b32.xlu0 %v290, 12
        %v450 = vpop.permute.xlu0 %449
        %452 = vrot.lane.b32.xlu0 %v242, 16
        %v453 = vpop.permute.xlu0 %452
        %455 = vrot.lane.b32.xlu0 %v301, 20
        %v456 = vpop.permute.xlu0 %455
        %458 = vrot.lane.b32.xlu0 %v307, 24
        %v459 = vpop.permute.xlu0 %458
        %461 = vrot.lane.b32.xlu0 %v313, 28
        %v462 = vpop.permute.xlu0 %461
        %464 = vrot.lane.b32.xlu0 %v244, 32
        %v465 = vpop.permute.xlu0 %464
        %467 = vrot.lane.b32.xlu0 %v324, 36
        %v468 = vpop.permute.xlu0 %467
        %470 = vrot.lane.b32.xlu0 %v330, 40
        %v471 = vpop.permute.xlu0 %470
        %473 = vrot.lane.b32.xlu0 %v336, 44
        %v474 = vpop.permute.xlu0 %473
        %477 = vrot.lane.b32.xlu0 %v246, 48
        %v478 = vpop.permute.xlu0 %477
        %v481 = vrot.slane %v246, 1
        %v482 = vrot.slane %v247, 1
        %v483 = vsel %vm250, %v481, %v482
        %484 = vrot.lane.b32.xlu0 %v483, 52
        %v485 = vpop.permute.xlu0 %484
        %v487 = vrot.slane %v246, 2
        %v488 = vrot.slane %v247, 2
        %v489 = vsel %vm257, %v487, %v488
        %490 = vrot.lane.b32.xlu0 %v489, 56
        %v491 = vpop.permute.xlu0 %490
        %v493 = vrot.slane %v246, 3
        %v494 = vrot.slane %v247, 3
        %v495 = vsel %vm264, %v493, %v494
        %496 = vrot.lane.b32.xlu0 %v495, 60
        %v497 = vpop.permute.xlu0 %496
        %v499 = vsel %vm171, %v240, %v444
        %v500 = vsel %vm341, %v499, %v447
        %v501 = vsel %vm343, %v500, %v450
        %v502 = vsel %vm345, %v501, %v453
        %v503 = vsel %vm347, %v502, %v456
        %v504 = vsel %vm349, %v503, %v459
        %v505 = vsel %vm351, %v504, %v462
        %v506 = vsel %vm353, %v505, %v465
        %v507 = vsel %vm355, %v506, %v468
        %v508 = vsel %vm357, %v507, %v471
        %v509 = vsel %vm359, %v508, %v474
        %v510 = vsel %vm361, %v509, %v478
        %v511 = vsel %vm363, %v510, %v485
        %v512 = vsel %vm365, %v511, %v491
        %v513 = vsel %vm367, %v512, %v497
        %v515 = vsel %vm369, %v513, 0
        %517 = vmatprep.subr.mxu0 0.0
        %518 = vmatpush1.msra.mxu0 0.0
        %519 = vmatprep.subr.mxu0 0.0
        %520 = vmatpush1.msra.mxu0 0.0
        %521 = vmatprep.subr.mxu0 0.0
        %522 = vmatpush1.msra.mxu0 0.0
        %523 = vmatprep.subr.mxu0 0.0
        %524 = vmatpush1.msra.mxu0 0.0
        %525 = vmatprep.subr.mxu0 0.0
        %526 = vmatpush1.msra.mxu0 0.0
        %527 = vmatprep.subr.mxu0 0.0
        %528 = vmatpush1.msra.mxu0 0.0
        %529 = vmatprep.subr.mxu0 0.0
        %530 = vmatpush1.msra.mxu0 0.0
        %531 = vmatprep.subr.mxu0 0.0
        %532 = vmatpush1.msra.mxu0 0.0
        %533 = vmatprep.subr.mxu0 0.0
        %534 = vmatpush1.msra.mxu0 %v221
        %535 = vmatprep.subr.mxu0 0.0
        %536 = vmatpush1.msra.mxu0 %v220
        %537 = vmatprep.subr.mxu0 0.0
        %538 = vmatpush1.msra.mxu0 %v219
        %539 = vmatprep.subr.mxu0 0.0
        %540 = vmatpush1.msra.mxu0 %v218
        %541 = vmatprep.subr.mxu0 0.0
        %542 = vmatpush1.msra.mxu0 %v217
        %543 = vmatprep.subr.mxu0 0.0
        %544 = vmatpush1.msra.mxu0 %v216
        %545 = vmatprep.subr.mxu0 0.0
        %546 = vmatpush1.msra.mxu0 %v215
        %547 = vmatprep.subr.mxu0 0.0
        %548 = vmatpush1.msra.mxu0 %v214
        %549 = vmatprep.subr.mxu0 0.0
        %550 = vmatpush2.msra.mxu0 0.0
        %551 = vmatprep.subr.mxu0 0.0
        %552 = vmatpush2.msra.mxu0 0.0
        %553 = vmatprep.subr.mxu0 0.0
        %554 = vmatpush2.msra.mxu0 0.0
        %555 = vmatprep.subr.mxu0 0.0
        %556 = vmatpush2.msra.mxu0 0.0
        %557 = vmatprep.subr.mxu0 0.0
        %558 = vmatpush2.msra.mxu0 0.0
        %559 = vmatprep.subr.mxu0 0.0
        %560 = vmatpush2.msra.mxu0 0.0
        %561 = vmatprep.subr.mxu0 0.0
        %562 = vmatpush2.msra.mxu0 0.0
        %563 = vmatprep.subr.mxu0 0.0
        %564 = vmatpush2.msra.mxu0 0.0
        %565 = vmatprep.subr.mxu0 0.0
        %566 = vmatpush2.msra.mxu0 0.0
        %567 = vmatprep.subr.mxu0 0.0
        %568 = vmatpush2.msra.mxu0 0.0
        %569 = vmatprep.subr.mxu0 0.0
        %570 = vmatpush2.msra.mxu0 0.0
        %571 = vmatprep.subr.mxu0 0.0
        %572 = vmatpush2.msra.mxu0 0.0
        %573 = vmatprep.subr.mxu0 0.0
        %574 = vmatpush2.msra.mxu0 0.0
        %575 = vmatprep.subr.mxu0 0.0
        %576 = vmatpush2.msra.mxu0 0.0
        %577 = vmatprep.subr.mxu0 0.0
        %578 = vmatpush2.msra.mxu0 0.0
        %579 = vmatprep.subr.mxu0 0.0
        %580 = vmatpush2.msra.mxu0 0.0
        %581 = vmatprep.mubr.f32.mxu0 0.0
        %582 = vmatmul.mubr.f32.gmra.mxu0 %v515
        %v583 = vpop.f32.mrf.mxu0
        %v584 = vadd.f32 0.0, %v583
        %v585 = vpop.f32.mrf.mxu0
        %586 = vdwg.mxu0
        %v587 = vmax.f32 %v440, %v584
        %588 = vst.msk [vmem:[#allocation3] sm:$0xff] %vm341, %v587
        %v589 = vld [vmem:[#allocation3] ss:$2 sm:$0xf]
        %s590 = scalar_lea.vmem [#allocation3], 1
        %v591 = vld [vmem:[%s590] ss:$2 sm:$0xf]
        %v592 = vmax.f32 %v589, %v591
        %v593 = vadd.f32 %v592, %v227
        %v594 = vmax.f32 %v593, 0.0
        %s595 = smul.u32 %s230, 4
        %s596 = scalar_lea.vmem %s170, %s595
        %vm597 = vcmask 60416
        %598 = vst.msk [vmem:[%s596] sm:$0xf] %vm597, %v594
      $region37: #{perspective_forward.5} parent=31 // loop_footer
        %s234 = sadd.s32 1, %s230
      $region38: #{perspective_forward.5} parent=31 // loop_footer_branch
        %229 = sbr.rel target = $region34
      $region39: #{perspective_forward.5} parent=31 // loop_exit
        _
      %p599 = scmp.lt.s32.totalorder %s14, 1
      %s600 = scalar_select %p599, %s14, 1
      %s601 = smul.addr %s600, 4
      %s602 = smul.addr %s601, 4
      %s603 = scalar_lea.vmem %s3, %s602
      // Predicated region
      $region40: #{perspective_forward.5} parent=31 // pred_check
        %p604 = pneg %p100
      $region41: #{perspective_forward.5} parent=31 // pred_check_branch
        %606 = sbr.rel (%p604) target = $region43
      $region42: #{perspective_forward.5} parent=31 // pred_region
        _
      $region43: #{perspective_forward.5} parent=31 // pred_fallthru
        _
    $region32: #{perspective_forward.5} parent=5 // pred_fallthru
      _
    %p607 = scmp.le.s32.totalorder 2, %s9
    // Predicated region
    $region44: #{perspective_forward.5} parent=5 // pred_check
      %p608 = pneg %p607
    $region45: #{perspective_forward.5} parent=5 // pred_check_branch
      %610 = sbr.rel (%p608) target = $region47
    $region46: #{perspective_forward.5} parent=5 // pred_region
      %s611 = ssub.s32 %s9, 2
      // Predicated region
      $region48: #{perspective_forward.5} parent=46 // pred_check
        %p612 = pneg %p106
      $region49: #{perspective_forward.5} parent=46 // pred_check_branch
        %614 = sbr.rel (%p612) target = $region51
      $region50: #{perspective_forward.5} parent=46 // pred_region
        %p615 = scmp.lt.s32.totalorder %s15, 1
        %s616 = scalar_select %p615, %s15, 1
        %s617 = smul.addr %s616, 4
        %s618 = smul.addr %s617, 4
        %s619 = scalar_lea.vmem %s3, %s618
      $region51: #{perspective_forward.5} parent=46 // pred_fallthru
        _
    $region47: #{perspective_forward.5} parent=5 // pred_fallthru
      _
  $region6: #{perspective_forward.5} parent=0 // loop_footer
    %s13 = sadd.s32 1, %s9
  $region7: #{perspective_forward.5} parent=0 // loop_footer_branch
    %8 = sbr.rel target = $region3
  $region8: #{perspective_forward.5} parent=0 // loop_exit
    _

// kernel: perspective_forward.4
$region0: #{perspective_forward.4}
  #allocation0 [shape = 'u32[]', space=smem, size = 0x4, offset = 0x4, fixed_abs, tag = 'smem constant byte address 0x4 - core index']
  #allocation1 [shape = 'u32[144,128]{1,0:T(1,128)}', space=vmem, size = 0x12000, scoped, tag = 'internal scratch']
  #allocation2 [shape = 'f32[20,20,3]{2,1,0:T(8,128)}', space=vmem, size = 0x3c000, scoped, tag = 'scratch operand']
  #allocation3 [shape = 'f32[16,4]{1,0:T(8,128)}', space=vmem, size = 0x2000, scoped, tag = 'scratch operand']
  %s0 = inlined_call_operand.vmem [shape: f32[2,16,16,3], index: 0, kind: input, shape index: {}]
  %s1 = inlined_call_operand.vmem [shape: f32[48,4], index: 1, kind: input, shape index: {}]
  %s2 = inlined_call_operand.vmem [shape: f32[1,4], index: 2, kind: input, shape index: {}]
  %s3 = inlined_call_operand.vmem [shape: f32[2,8,8,4], index: 3, kind: output, shape index: {}]
  %s4 = sld [smem:[#allocation0]]
  $region52: #{perspective_forward.4} parent=0
    _
  %s6 = ssub.s32 1, %s4
  %s7 = scalar_select 0, %s6, %s4
  loop: start=0, step=1, limit=4
  $region2: #{perspective_forward.4} parent=0 // loop_pre_header
    _
  $region3: #{perspective_forward.4} parent=0 // loop_header
    %s9 = sphi 0, %s13
    %p10 = scmp.ge.s32.totalorder %s9, 4
    %s19 = sphi 0, %s21
    %s22 = sphi 0, %s19
    %s23 = sphi 0, %s22
    %s39 = sphi 0, %s23
    %s43 = sphi 0, %s43
    %s45 = sphi 0, %s43
    %s46 = sphi 0, %s45
    %s60 = sphi 0, %s46
    %s64 = sphi 0, %s64
    %s66 = sphi 0, %s64
    %s67 = sphi 0, %s66
    %s81 = sphi 0, %s67
    %s87 = sphi 0, %s89
    %s90 = sphi 0, %s87
    %s91 = sphi 0, %s90
    %s107 = sphi 0, %s91
  $region4: #{perspective_forward.4} parent=0 // loop_header_branch
    %12 = sbr.rel (%p10) target = $region8
  $region5: #{perspective_forward.4} parent=0 // loop_body
    %s14 = ssub.s32 %s9, 1
    %s15 = ssub.s32 %s9, 2
    %s16 = sadd.s32 %s9, 1
    %s17 = ssub.s32 %s9, %s16
    %p18 = scmp.eq.s32.totalorder %s17, 0
    %s20 = sadd.s32 %s19, 1
    %s21 = scalar_select %p18, %s19, %s20
    %p24 = pneg %p18
    %p25 = scmp.eq.s32.totalorder %s9, 1
    %p26 = por %p24, %p25
    %p27 = scmp.ne.s32.totalorder %s19, %s22
    %p28 = scmp.eq.s32.totalorder %s9, 0
    %p29 = por %p27, %p28
    %p30 = scmp.ne.s32.totalorder %s19, %s22
    %p31 = scmp.eq.s32.totalorder %s14, 1
    %p32 = por %p30, %p31
    %p33 = scmp.ne.s32.totalorder %s22, %s23
    %p34 = scmp.eq.s32.totalorder %s14, 0
    %p35 = por %p33, %p34
    %p36 = scmp.ne.s32.totalorder %s22, %s23
    %p37 = scmp.eq.s32.totalorder %s15, 1
    %p38 = por %p36, %p37
    %p40 = scmp.ne.s32.totalorder %s23, %s39
    %p41 = scmp.eq.s32.totalorder %s15, 0
    %p42 = por %p40, %p41
    %s44 = sadd.s32 %s43, 1
    %p47 = scmp.eq.s32.totalorder %s9, 1
    %p48 = scmp.ne.s32.totalorder %s43, %s45
    %p49 = scmp.eq.s32.totalorder %s9, 0
    %p50 = por %p48, %p49
    %p51 = scmp.ne.s32.totalorder %s43, %s45
    %p52 = scmp.eq.s32.totalorder %s14, 1
    %p53 = por %p51, %p52
    %p54 = scmp.ne.s32.totalorder %s45, %s46
    %p55 = scmp.eq.s32.totalorder %s14, 0
    %p56 = por %p54, %p55
    %p57 = scmp.ne.s32.totalorder %s45, %s46
    %p58 = scmp.eq.s32.totalorder %s15, 1
    %p59 = por %p57, %p58
    %p61 = scmp.ne.s32.totalorder %s46, %s60
    %p62 = scmp.eq.s32.totalorder %s15, 0
    %p63 = por %p61, %p62
    %s65 = sadd.s32 %s64, 1
    %p68 = scmp.eq.s32.totalorder %s9, 1
    %p69 = scmp.ne.s32.totalorder %s64, %s66
    %p70 = scmp.eq.s32.totalorder %s9, 0
    %p71 = por %p69, %p70
    %p72 = scmp.ne.s32.totalorder %s64, %s66
    %p73 = scmp.eq.s32.totalorder %s14, 1
    %p74 = por %p72, %p73
    %p75 = scmp.ne.s32.totalorder %s66, %s67
    %p76 = scmp.eq.s32.totalorder %s14, 0
    %p77 = por %p75, %p76
    %p78 = scmp.ne.s32.totalorder %s66, %s67
    %p79 = scmp.eq.s32.totalorder %s15, 1
    %p80 = por %p78, %p79
    %p82 = scmp.ne.s32.totalorder %s67, %s81
    %p83 = scmp.eq.s32.totalorder %s15, 0
    %p84 = por %p82, %p83
    %s85 = ssub.s32 %s9, %s16
    %p86 = scmp.eq.s32.totalorder %s85, 0
    %s88 = sadd.s32 %s87, 1
    %s89 = scalar_select %p86, %s87, %s88
    %p92 = pneg %p86
    %p93 = scmp.eq.s32.totalorder %s9, 1
    %p94 = por %p92, %p93
    %p95 = scmp.ne.s32.totalorder %s87, %s90
    %p96 = scmp.eq.s32.totalorder %s9, 0
    %p97 = por %p95, %p96
    %p98 = scmp.ne.s32.totalorder %s87, %s90
    %p99 = scmp.eq.s32.totalorder %s14, 1
    %p100 = por %p98, %p99
    %p101 = scmp.ne.s32.totalorder %s90, %s91
    %p102 = scmp.eq.s32.totalorder %s14, 0
    %p103 = por %p101, %p102
    %p104 = scmp.ne.s32.totalorder %s90, %s91
    %p105 = scmp.eq.s32.totalorder %s15, 1
    %p106 = por %p104, %p105
    %p108 = scmp.ne.s32.totalorder %s91, %s107
    %p109 = scmp.eq.s32.totalorder %s15, 0
    %p110 = por %p108, %p109
    %p111 = scmp.le.s32.totalorder 1, %s9
    %p112 = scmp.lt.s32.totalorder %s9, 3
    %p113 = pnand %p111, %p112
    %p114 = pneg %p113
    // Predicated region
    $region9: #{perspective_forward.4} parent=5 // pred_check
      _
    $region10: #{perspective_forward.4} parent=5 // pred_check_branch
      %116 = sbr.rel (%p113) target = $region12
    $region11: #{perspective_forward.4} parent=5 // pred_region
      %s117 = ssub.s32 %s9, 1
      // Predicated region
      $region13: #{perspective_forward.4} parent=11 // pred_check
        %p118 = pneg %p56
      $region14: #{perspective_forward.4} parent=11 // pred_check_branch
        %120 = sbr.rel (%p118) target = $region16
      $region15: #{perspective_forward.4} parent=11 // pred_region
        _
      $region16: #{perspective_forward.4} parent=11 // pred_fallthru
        _
      // Predicated region
      $region17: #{perspective_forward.4} parent=11 // pred_check
        %p121 = pneg %p77
      $region18: #{perspective_forward.4} parent=11 // pred_check_branch
        %123 = sbr.rel (%p121) target = $region20
      $region19: #{perspective_forward.4} parent=11 // pred_region
        _
      $region20: #{perspective_forward.4} parent=11 // pred_fallthru
        _
    $region12: #{perspective_forward.4} parent=5 // pred_fallthru
      _
    %p124 = scmp.lt.s32.totalorder %s9, 2
    // Predicated region
    $region21: #{perspective_forward.4} parent=5 // pred_check
      %p125 = pneg %p124
    $region22: #{perspective_forward.4} parent=5 // pred_check_branch
      %127 = sbr.rel (%p125) target = $region24
    $region23: #{perspective_forward.4} parent=5 // pred_region
      // Predicated region
      $region25: #{perspective_forward.4} parent=23 // pred_check
        %p128 = pneg %p29
      $region26: #{perspective_forward.4} parent=23 // pred_check_branch
        %130 = sbr.rel (%p128) target = $region28
      $region27: #{perspective_forward.4} parent=23 // pred_region
        %p131 = scmp.lt.s32.totalorder %s9, 1
        %s132 = scalar_select %p131, %s9, 1
        %s133 = smul.addr %s132, 32
        %s134 = smul.addr %s133, 8
        %s135 = scalar_lea.vmem %s0, %s134
      $region28: #{perspective_forward.4} parent=23 // pred_fallthru
        _
    $region24: #{perspective_forward.4} parent=5 // pred_fallthru
      _
    %p136 = scmp.le.s32.totalorder 1, %s9
    %p137 = scmp.lt.s32.totalorder %s9, 3
    %p138 = pnand %p136, %p137
    %p139 = pneg %p138
    // Predicated region
    $region29: #{perspective_forward.4} parent=5 // pred_check
      _
    $region30: #{perspective_forward.4} parent=5 // pred_check_branch
      %141 = sbr.rel (%p138) target = $region32
    $region31: #{perspective_forward.4} parent=5 // pred_region
      %s142 = ssub.s32 %s9, 1
      %p143 = scmp.lt.s32.totalorder %s14, 1
      %s144 = scalar_select %p143, %s14, 1
      %s145 = smul.addr %s144, 32
      %s146 = smul.addr %s145, 8
      %s147 = scalar_lea.vmem %s0, %s146
      %p148 = pneg %p35
      %p149 = pneg %p32
      %p150 = pneg %p56
      %p151 = pneg %p53
      %p152 = pneg %p77
      %p153 = pneg %p74
      %p154 = pneg %p103
      %p155 = pneg %p100
      %p156 = scmp.lt.s32.totalorder %s14, 1
      %s157 = scalar_select %p156, %s14, 1
      %s158 = smul.addr %s157, 8
      %s159 = smul.addr %s158, 8
      %s160 = scalar_lea.vmem %s3, %s159
      %p161 = scmp.lt.s32.totalorder %s14, 1
      %s162 = scalar_select %p161, %s14, 1
      %s163 = smul.addr %s162, 32
      %s164 = smul.addr %s163, 8
      %s165 = scalar_lea.vmem %s0, %s164
      %p166 = scmp.lt.s32.totalorder %s14, 1
      %s167 = scalar_select %p166, %s14, 1
      %s168 = smul.addr %s167, 8
      %s169 = smul.addr %s168, 8
      %s170 = scalar_lea.vmem %s3, %s169
      %vm171 = vcmask 23552
      %172 = vst.msk [vmem:[#allocation2] sm:$0xff] %vm171, 0.0
      %173 = vst.msk [vmem:[#allocation2 + $0x8] sm:$0xff] %vm171, 0.0
      %vm174 = vcmask 19456
      %175 = vst.msk [vmem:[#allocation2 + $0x10] sm:$0xf] %vm174, 0.0
      %176 = vst.msk [vmem:[#allocation2 + $0x18] sm:$0xff] %vm171, 0.0
      %177 = vst.msk [vmem:[#allocation2 + $0x20] sm:$0xff] %vm171, 0.0
      %178 = vst.msk [vmem:[#allocation2 + $0x28] sm:$0xf] %vm174, 0.0
      %179 = vst.msk [vmem:[#allocation2 + $0x30] sm:$0xff] %vm171, 0.0
      %180 = vst.msk [vmem:[#allocation2 + $0x38] sm:$0xff] %vm171, 0.0
      %181 = vst.msk [vmem:[#allocation2 + $0x40] sm:$0xf] %vm174, 0.0
      %182 = vst.msk [vmem:[#allocation2 + $0x48] sm:$0xff] %vm171, 0.0
      %183 = vst.msk [vmem:[#allocation2 + $0x50] sm:$0xff] %vm171, 0.0
      %184 = vst.msk [vmem:[#allocation2 + $0x58] sm:$0xf] %vm174, 0.0
      %185 = vst.msk [vmem:[#allocation2 + $0x60] sm:$0xff] %vm171, 0.0
      %186 = vst.msk [vmem:[#allocation2 + $0x68] sm:$0xff] %vm171, 0.0
      %187 = vst.msk [vmem:[#allocation2 + $0x70] sm:$0xf] %vm174, 0.0
      %188 = vst.msk [vmem:[#allocation2 + $0x78] sm:$0xff] %vm171, 0.0
      %189 = vst.msk [vmem:[#allocation2 + $0x80] sm:$0xff] %vm171, 0.0
      %190 = vst.msk [vmem:[#allocation2 + $0x88] sm:$0xf] %vm174, 0.0
      %191 = vst.msk [vmem:[#allocation2 + $0x90] sm:$0xff] %vm171, 0.0
      %192 = vst.msk [vmem:[#allocation2 + $0x98] sm:$0xff] %vm171, 0.0
      %193 = vst.msk [vmem:[#allocation2 + $0xa0] sm:$0xf] %vm174, 0.0
      %194 = vst.msk [vmem:[#allocation2 + $0xa8] sm:$0xff] %vm171, 0.0
      %195 = vst.msk [vmem:[#allocation2 + $0xb0] sm:$0xff] %vm171, 0.0
      %196 = vst.msk [vmem:[#allocation2 + $0xb8] sm:$0xf] %vm174, 0.0
      %197 = vst.msk [vmem:[#allocation2 + $0xc0] sm:$0xff] %vm171, 0.0
      %198 = vst.msk [vmem:[#allocation2 + $0xc8] sm:$0xff] %vm171, 0.0
      %199 = vst.msk [vmem:[#allocation2 + $0xd0] sm:$0xf] %vm174, 0.0
      %200 = vst.msk [vmem:[#allocation2 + $0xd8] sm:$0xff] %vm171, 0.0
      %201 = vst.msk [vmem:[#allocation2 + $0xe0] sm:$0xff] %vm171, 0.0
      %202 = vst.msk [vmem:[#allocation2 + $0xe8] sm:$0xf] %vm174, 0.0
      %203 = vst.msk [vmem:[#allocation2 + $0xf0] sm:$0xff] %vm171, 0.0
      %204 = vst.msk [vmem:[#allocation2 + $0xf8] sm:$0xff] %vm171, 0.0
      %205 = vst.msk [vmem:[#allocation2 + $0x100] sm:$0xf] %vm174, 0.0
      %206 = vst.msk [vmem:[#allocation2 + $0x108] sm:$0xff] %vm171, 0.0
      %207 = vst.msk [vmem:[#allocation2 + $0x110] sm:$0xff] %vm171, 0.0
      %208 = vst.msk [vmem:[#allocation2 + $0x118] sm:$0xf] %vm174, 0.0
      %209 = vst.msk [vmem:[#allocation2 + $0x120] sm:$0xff] %vm171, 0.0
      %210 = vst.msk [vmem:[#allocation2 + $0x128] sm:$0xff] %vm171, 0.0
      %211 = vst.msk [vmem:[#allocation2 + $0x130] sm:$0xf] %vm174, 0.0
      %212 = vst.msk [vmem:[#allocation2 + $0x138] sm:$0xff] %vm171, 0.0
      %213 = vst.msk [vmem:[#allocation2 + $0x140] sm:$0xff] %vm171, 0.0
      %214 = vst.msk [vmem:[#allocation2 + $0x148] sm:$0xf] %vm174, 0.0
      %215 = vst.msk [vmem:[#allocation2 + $0x150] sm:$0xff] %vm171, 0.0
      %216 = vst.msk [vmem:[#allocation2 + $0x158] sm:$0xff] %vm171, 0.0
      %217 = vst.msk [vmem:[#allocation2 + $0x160] sm:$0xf] %vm174, 0.0
      %218 = vst.msk [vmem:[#allocation2 + $0x168] sm:$0xff] %vm171, 0.0
      %219 = vst.msk [vmem:[#allocation2 + $0x170] sm:$0xff] %vm171, 0.0
      %220 = vst.msk [vmem:[#allocation2 + $0x178] sm:$0xf] %vm174, 0.0
      %221 = vst.msk [vmem:[#allocation2 + $0x180] sm:$0xff] %vm171, 0.0
      %222 = vst.msk [vmem:[#allocation2 + $0x188] sm:$0xff] %vm171, 0.0
      %223 = vst.msk [vmem:[#allocation2 + $0x190] sm:$0xf] %vm174, 0.0
      %224 = vst.msk [vmem:[#allocation2 + $0x198] sm:$0xff] %vm171, 0.0
      %225 = vst.msk [vmem:[#allocation2 + $0x1a0] sm:$0xff] %vm171, 0.0
      %226 = vst.msk [vmem:[#allocation2 + $0x1a8] sm:$0xf] %vm174, 0.0
      %227 = vst.msk [vmem:[#allocation2 + $0x1b0] sm:$0xff] %vm171, 0.0
      %228 = vst.msk [vmem:[#allocation2 + $0x1b8] sm:$0xff] %vm171, 0.0
      %229 = vst.msk [vmem:[#allocation2 + $0x1c0] sm:$0xf] %vm174, 0.0
      %230 = vst.msk [vmem:[#allocation2 + $0x1c8] sm:$0xff] %vm171, 0.0
      %231 = vst.msk [vmem:[#allocation2 + $0x1d0] sm:$0xff] %vm171, 0.0
      %232 = vst.msk [vmem:[#allocation2 + $0x1d8] sm:$0xf] %vm174, 0.0
      %v233 = vld [vmem:[%s165] sm:$0xff]
      %v234 = vld [vmem:[%s165 + $0x8] sm:$0xff]
      %v235 = vld [vmem:[%s165 + $0x10] sm:$0xff]
      %v236 = vld [vmem:[%s165 + $0x18] sm:$0xff]
      %v237 = vld [vmem:[%s165 + $0x20] sm:$0xff]
      %v238 = vld [vmem:[%s165 + $0x28] sm:$0xff]
      %v239 = vld [vmem:[%s165 + $0x30] sm:$0xff]
      %v240 = vld [vmem:[%s165 + $0x38] sm:$0xff]
      %v241 = vld [vmem:[%s165 + $0x40] sm:$0xff]
      %v242 = vld [vmem:[%s165 + $0x48] sm:$0xff]
      %v243 = vld [vmem:[%s165 + $0x50] sm:$0xff]
      %v244 = vld [vmem:[%s165 + $0x58] sm:$0xff]
      %v245 = vld [vmem:[%s165 + $0x60] sm:$0xff]
      %v246 = vld [vmem:[%s165 + $0x68] sm:$0xff]
      %v247 = vld [vmem:[%s165 + $0x70] sm:$0xff]
      %v248 = vld [vmem:[%s165 + $0x78] sm:$0xff]
      %v249 = vld [vmem:[%s165 + $0x80] sm:$0xff]
      %v250 = vld [vmem:[%s165 + $0x88] sm:$0xff]
      %v251 = vld [vmem:[%s165 + $0x90] sm:$0xff]
      %v252 = vld [vmem:[%s165 + $0x98] sm:$0xff]
      %v253 = vld [vmem:[%s165 + $0xa0] sm:$0xff]
      %v254 = vld [vmem:[%s165 + $0xa8] sm:$0xff]
      %v255 = vld [vmem:[%s165 + $0xb0] sm:$0xff]
      %v256 = vld [vmem:[%s165 + $0xb8] sm:$0xff]
      %v257 = vld [vmem:[%s165 + $0xc0] sm:$0xff]
      %v258 = vld [vmem:[%s165 + $0xc8] sm:$0xff]
      %v259 = vld [vmem:[%s165 + $0xd0] sm:$0xff]
      %v260 = vld [vmem:[%s165 + $0xd8] sm:$0xff]
      %v261 = vld [vmem:[%s165 + $0xe0] sm:$0xff]
      %v262 = vld [vmem:[%s165 + $0xe8] sm:$0xff]
      %v263 = vld [vmem:[%s165 + $0xf0] sm:$0xff]
      %v264 = vld [vmem:[%s165 + $0xf8] sm:$0xff]
      %s265 = scalar_lea.vmem [#allocation2], 48
      %266 = vst.msk [vmem:[%s265 + $0x2] sm:$0xff] %vm171, %v233
      %267 = vst.msk [vmem:[%s265 + $0xa] sm:$0xff] %vm171, %v234
      %268 = vst.msk [vmem:[%s265 + $0x1a] sm:$0xff] %vm171, %v235
      %269 = vst.msk [vmem:[%s265 + $0x22] sm:$0xff] %vm171, %v236
      %270 = vst.msk [vmem:[%s265 + $0x32] sm:$0xff] %vm171, %v237
      %271 = vst.msk [vmem:[%s265 + $0x3a] sm:$0xff] %vm171, %v238
      %272 = vst.msk [vmem:[%s265 + $0x4a] sm:$0xff] %vm171, %v239
      %273 = vst.msk [vmem:[%s265 + $0x52] sm:$0xff] %vm171, %v240
      %274 = vst.msk [vmem:[%s265 + $0x62] sm:$0xff] %vm171, %v241
      %275 = vst.msk [vmem:[%s265 + $0x6a] sm:$0xff] %vm171, %v242
      %276 = vst.msk [vmem:[%s265 + $0x7a] sm:$0xff] %vm171, %v243
      %277 = vst.msk [vmem:[%s265 + $0x82] sm:$0xff] %vm171, %v244
      %278 = vst.msk [vmem:[%s265 + $0x92] sm:$0xff] %vm171, %v245
      %279 = vst.msk [vmem:[%s265 + $0x9a] sm:$0xff] %vm171, %v246
      %280 = vst.msk [vmem:[%s265 + $0xaa] sm:$0xff] %vm171, %v247
      %281 = vst.msk [vmem:[%s265 + $0xb2] sm:$0xff] %vm171, %v248
      %282 = vst.msk [vmem:[%s265 + $0xc2] sm:$0xff] %vm171, %v249
      %283 = vst.msk [vmem:[%s265 + $0xca] sm:$0xff] %vm171, %v250
      %284 = vst.msk [vmem:[%s265 + $0xda] sm:$0xff] %vm171, %v251
      %285 = vst.msk [vmem:[%s265 + $0xe2] sm:$0xff] %vm171, %v252
      %286 = vst.msk [vmem:[%s265 + $0xf2] sm:$0xff] %vm171, %v253
      %287 = vst.msk [vmem:[%s265 + $0xfa] sm:$0xff] %vm171, %v254
      %288 = vst.msk [vmem:[%s265 + $0x10a] sm:$0xff] %vm171, %v255
      %289 = vst.msk [vmem:[%s265 + $0x112] sm:$0xff] %vm171, %v256
      %290 = vst.msk [vmem:[%s265 + $0x122] sm:$0xff] %vm171, %v257
      %291 = vst.msk [vmem:[%s265 + $0x12a] sm:$0xff] %vm171, %v258
      %292 = vst.msk [vmem:[%s265 + $0x13a] sm:$0xff] %vm171, %v259
      %293 = vst.msk [vmem:[%s265 + $0x142] sm:$0xff] %vm171, %v260
      %294 = vst.msk [vmem:[%s265 + $0x152] sm:$0xff] %vm171, %v261
      %295 = vst.msk [vmem:[%s265 + $0x15a] sm:$0xff] %vm171, %v262
      %296 = vst.msk [vmem:[%s265 + $0x16a] sm:$0xff] %vm171, %v263
      %297 = vst.msk [vmem:[%s265 + $0x172] sm:$0xff] %vm171, %v264
      %v298 = vld [vmem:[%s1] sm:$0xff]
      %v299 = vld [vmem:[%s1 + $0x8] sm:$0xff]
      %v300 = vld [vmem:[%s1 + $0x10] sm:$0xff]
      %v301 = vld [vmem:[%s1 + $0x18] sm:$0xff]
      %v302 = vld [vmem:[%s1 + $0x20] sm:$0xff]
      %v303 = vld [vmem:[%s1 + $0x28] sm:$0xff]
      %v304 = vld [vmem:[%s2] sm:$0x1]
      %v306 = vlaneseq
      %v307 = vshrl.u32 %v306, 7
      %v308 = vsub.s32 0, %v307
      %v309 = vrot.slane %v304, %v308
      loop: start=0, step=1, limit=8
      $region33: #{perspective_forward.4} parent=31 // loop_pre_header
        _
      $region34: #{perspective_forward.4} parent=31 // loop_header
        %s312 = sphi 0, %s316
        %p313 = scmp.ge.s32.totalorder %s312, 8
      $region35: #{perspective_forward.4} parent=31 // loop_header_branch
        %315 = sbr.rel (%p313) target = $region39
      $region36: #{perspective_forward.4} parent=31 // loop_body
        %s317 = smul.u32 %s312, 2
        %s318 = smul.u32 %s317, 24
        %s319 = scalar_lea.vmem [#allocation2], %s318
        %v320 = vld [vmem:[%s319] sm:$0xff]
        %v321 = vld [vmem:[%s319 + $0x8] sm:$0xff]
        %v322 = vld [vmem:[%s319 + $0x10] sm:$0xf]
        %v323 = vld [vmem:[%s319 + $0x18] sm:$0xff]
        %v324 = vld [vmem:[%s319 + $0x20] sm:$0xff]
        %v325 = vld [vmem:[%s319 + $0x28] sm:$0xf]
        %v326 = vld [vmem:[%s319 + $0x30] sm:$0xff]
        %v327 = vld [vmem:[%s319 + $0x38] sm:$0xff]
        %v328 = vld [vmem:[%s319 + $0x40] sm:$0xf]
        %v329 = vld [vmem:[%s319 + $0x48] sm:$0xff]
        %v330 = vld [vmem:[%s319 + $0x50] sm:$0xff]
        %v331 = vld [vmem:[%s319 + $0x58] sm:$0xf]
        %v332 = vld [vmem:[%s319 + $0x60] sm:$0xff]
        %v333 = vld [vmem:[%s319 + $0x68] sm:$0xff]
        %v334 = vld [vmem:[%s319 + $0x70] sm:$0xf]
        %vm338 = vcmask 1046528
        %v339 = vrot.slane %v320, 1
        %v340 = vrot.slane %v321, 1
        %v341 = vsel %vm338, %v339, %v340
        %v342 = vrot.slane %v322, 1
        %v343 = vsel %vm338, %v340, %v342
        %344 = vrot.lane.b32.xlu0 %v341, 3
        %v345 = vpop.permute.xlu0 %344
        %346 = vrot.lane.b32.xlu0 %v343, 3
        %v347 = vpop.permute.xlu0 %346
        %vm350 = vcmask 1045504
        %v351 = vrot.slane %v320, 2
        %v352 = vrot.slane %v321, 2
        %v353 = vsel %vm350, %v351, %v352
        %v354 = vrot.slane %v322, 2
        %v355 = vsel %vm350, %v352, %v354
        %356 = vrot.lane.b32.xlu0 %v353, 6
        %v357 = vpop.permute.xlu0 %356
        %358 = vrot.lane.b32.xlu0 %v355, 6
        %v359 = vpop.permute.xlu0 %358
        %vm362 = vcmask 1044480
        %v363 = vrot.slane %v320, 3
        %v364 = vrot.slane %v321, 3
        %v365 = vsel %vm362, %v363, %v364
        %v366 = vrot.slane %v322, 3
        %v367 = vsel %vm362, %v364, %v366
        %368 = vrot.lane.b32.xlu0 %v365, 9
        %v369 = vpop.permute.xlu0 %368
        %370 = vrot.lane.b32.xlu0 %v367, 9
        %v371 = vpop.permute.xlu0 %370
        %376 = vrot.lane.b32.xlu0 %v323, 12
        %v377 = vpop.permute.xlu0 %376
        %378 = vrot.lane.b32.xlu0 %v324, 12
        %v379 = vpop.permute.xlu0 %378
        %v383 = vrot.slane %v323, 1
        %v384 = vrot.slane %v324, 1
        %v385 = vsel %vm338, %v383, %v384
        %v386 = vrot.slane %v325, 1
        %v387 = vsel %vm338, %v384, %v386
        %388 = vrot.lane.b32.xlu0 %v385, 15
        %v389 = vpop.permute.xlu0 %388
        %390 = vrot.lane.b32.xlu0 %v387, 15
        %v391 = vpop.permute.xlu0 %390
        %v394 = vrot.slane %v323, 2
        %v395 = vrot.slane %v324, 2
        %v396 = vsel %vm350, %v394, %v395
        %v397 = vrot.slane %v325, 2
        %v398 = vsel %vm350, %v395, %v397
        %399 = vrot.lane.b32.xlu0 %v396, 18
        %v400 = vpop.permute.xlu0 %399
        %401 = vrot.lane.b32.xlu0 %v398, 18
        %v402 = vpop.permute.xlu0 %401
        %v405 = vrot.slane %v323, 3
        %v406 = vrot.slane %v324, 3
        %v407 = vsel %vm362, %v405, %v406
        %v408 = vrot.slane %v325, 3
        %v409 = vsel %vm362, %v406, %v408
        %410 = vrot.lane.b32.xlu0 %v407, 21
        %v411 = vpop.permute.xlu0 %410
        %412 = vrot.lane.b32.xlu0 %v409, 21
        %v413 = vpop.permute.xlu0 %412
        %418 = vrot.lane.b32.xlu0 %v326, 24
        %v419 = vpop.permute.xlu0 %418
        %420 = vrot.lane.b32.xlu0 %v327, 24
        %v421 = vpop.permute.xlu0 %420
        %v425 = vrot.slane %v326, 1
        %v426 = vrot.slane %v327, 1
        %v427 = vsel %vm338, %v425, %v426
        %v428 = vrot.slane %v328, 1
        %v429 = vsel %vm338, %v426, %v428
        %430 = vrot.lane.b32.xlu0 %v427, 27
        %v431 = vpop.permute.xlu0 %430
        %432 = vrot.lane.b32.xlu0 %v429, 27
        %v433 = vpop.permute.xlu0 %432
        %v436 = vrot.slane %v326, 2
        %v437 = vrot.slane %v327, 2
        %v438 = vsel %vm350, %v436, %v437
        %v439 = vrot.slane %v328, 2
        %v440 = vsel %vm350, %v437, %v439
        %441 = vrot.lane.b32.xlu0 %v438, 30
        %v442 = vpop.permute.xlu0 %441
        %443 = vrot.lane.b32.xlu0 %v440, 30
        %v444 = vpop.permute.xlu0 %443
        %v447 = vrot.slane %v326, 3
        %v448 = vrot.slane %v327, 3
        %v449 = vsel %vm362, %v447, %v448
        %v450 = vrot.slane %v328, 3
        %v451 = vsel %vm362, %v448, %v450
        %452 = vrot.lane.b32.xlu0 %v449, 33
        %v453 = vpop.permute.xlu0 %452
        %454 = vrot.lane.b32.xlu0 %v451, 33
        %v455 = vpop.permute.xlu0 %454
        %460 = vrot.lane.b32.xlu0 %v329, 36
        %v461 = vpop.permute.xlu0 %460
        %462 = vrot.lane.b32.xlu0 %v330, 36
        %v463 = vpop.permute.xlu0 %462
        %v467 = vrot.slane %v329, 1
        %v468 = vrot.slane %v330, 1
        %v469 = vsel %vm338, %v467, %v468
        %v470 = vrot.slane %v331, 1
        %v471 = vsel %vm338, %v468, %v470
        %472 = vrot.lane.b32.xlu0 %v469, 39
        %v473 = vpop.permute.xlu0 %472
        %474 = vrot.lane.b32.xlu0 %v471, 39
        %v475 = vpop.permute.xlu0 %474
        %v478 = vrot.slane %v329, 2
        %v479 = vrot.slane %v330, 2
        %v480 = vsel %vm350, %v478, %v479
        %v481 = vrot.slane %v331, 2
        %v482 = vsel %vm350, %v479, %v481
        %483 = vrot.lane.b32.xlu0 %v480, 42
        %v484 = vpop.permute.xlu0 %483
        %485 = vrot.lane.b32.xlu0 %v482, 42
        %v486 = vpop.permute.xlu0 %485
        %v489 = vrot.slane %v329, 3
        %v490 = vrot.slane %v330, 3
        %v491 = vsel %vm362, %v489, %v490
        %v492 = vrot.slane %v331, 3
        %v493 = vsel %vm362, %v490, %v492
        %494 = vrot.lane.b32.xlu0 %v491, 45
        %v495 = vpop.permute.xlu0 %494
        %496 = vrot.lane.b32.xlu0 %v493, 45
        %v497 = vpop.permute.xlu0 %496
        %v500 = vsel %vm171, %v320, %v345
        %v501 = vsel %vm171, %v321, %v347
        %vm502 = vcmask 48128
        %v503 = vsel %vm502, %v500, %v357
        %v504 = vsel %vm502, %v501, %v359
        %vm505 = vcmask 72704
        %v506 = vsel %vm505, %v503, %v369
        %v507 = vsel %vm505, %v504, %v371
        %vm508 = vcmask 97280
        %v509 = vsel %vm508, %v506, %v377
        %v510 = vsel %vm508, %v507, %v379
        %vm511 = vcmask 121856
        %v512 = vsel %vm511, %v509, %v389
        %v513 = vsel %vm511, %v510, %v391
        %vm514 = vcmask 146432
        %v515 = vsel %vm514, %v512, %v400
        %v516 = vsel %vm514, %v513, %v402
        %vm517 = vcmask 171008
        %v518 = vsel %vm517, %v515, %v411
        %v519 = vsel %vm517, %v516, %v413
        %vm520 = vcmask 195584
        %v521 = vsel %vm520, %v518, %v419
        %v522 = vsel %vm520, %v519, %v421
        %vm523 = vcmask 220160
        %v524 = vsel %vm523, %v521, %v431
        %v525 = vsel %vm523, %v522, %v433
        %vm526 = vcmask 244736
        %v527 = vsel %vm526, %v524, %v442
        %v528 = vsel %vm526, %v525, %v444
        %vm529 = vcmask 269312
        %v530 = vsel %vm529, %v527, %v453
        %v531 = vsel %vm529, %v528, %v455
        %vm532 = vcmask 293888
        %v533 = vsel %vm532, %v530, %v461
        %v534 = vsel %vm532, %v531, %v463
        %vm535 = vcmask 318464
        %v536 = vsel %vm535, %v533, %v473
        %v537 = vsel %vm535, %v534, %v475
        %vm538 = vcmask 343040
        %v539 = vsel %vm538, %v536, %v484
        %v540 = vsel %vm538, %v537, %v486
        %vm541 = vcmask 367616
        %v542 = vsel %vm541, %v539, %v495
        %v543 = vsel %vm541, %v540, %v497
        %vm544 = vcmask 392192
        %v546 = vsel %vm544, %v542, 0
        %v549 = vsel %vm544, %v543, 0
        %551 = vmatprep.subr.mxu0 0.0
        %552 = vmatpush1.msra.mxu0 0.0
        %553 = vmatprep.subr.mxu0 0.0
        %554 = vmatpush1.msra.mxu0 0.0
        %555 = vmatprep.subr.mxu0 0.0
        %556 = vmatpush1.msra.mxu0 0.0
        %557 = vmatprep.subr.mxu0 0.0
        %558 = vmatpush1.msra.mxu0 0.0
        %559 = vmatprep.subr.mxu0 0.0
        %560 = vmatpush1.msra.mxu0 0.0
        %561 = vmatprep.subr.mxu0 0.0
        %562 = vmatpush1.msra.mxu0 0.0
        %563 = vmatprep.subr.mxu0 0.0
        %564 = vmatpush1.msra.mxu0 0.0
        %565 = vmatprep.subr.mxu0 0.0
        %566 = vmatpush1.msra.mxu0 0.0
        %567 = vmatprep.subr.mxu0 0.0
        %568 = vmatpush1.msra.mxu0 0.0
        %569 = vmatprep.subr.mxu0 0.0
        %570 = vmatpush1.msra.mxu0 0.0
        %571 = vmatprep.subr.mxu0 0.0
        %572 = vmatpush1.msra.mxu0 %v303
        %573 = vmatprep.subr.mxu0 0.0
        %574 = vmatpush1.msra.mxu0 %v302
        %575 = vmatprep.subr.mxu0 0.0
        %576 = vmatpush1.msra.mxu0 %v301
        %577 = vmatprep.subr.mxu0 0.0
        %578 = vmatpush1.msra.mxu0 %v300
        %579 = vmatprep.subr.mxu0 0.0
        %580 = vmatpush1.msra.mxu0 %v299
        %581 = vmatprep.subr.mxu0 0.0
        %582 = vmatpush1.msra.mxu0 %v298
        %583 = vmatprep.subr.mxu0 0.0
        %584 = vmatpush2.msra.mxu0 0.0
        %585 = vmatprep.subr.mxu0 0.0
        %586 = vmatpush2.msra.mxu0 0.0
        %587 = vmatprep.subr.mxu0 0.0
        %588 = vmatpush2.msra.mxu0 0.0
        %589 = vmatprep.subr.mxu0 0.0
        %590 = vmatpush2.msra.mxu0 0.0
        %591 = vmatprep.subr.mxu0 0.0
        %592 = vmatpush2.msra.mxu0 0.0
        %593 = vmatprep.subr.mxu0 0.0
        %594 = vmatpush2.msra.mxu0 0.0
        %595 = vmatprep.subr.mxu0 0.0
        %596 = vmatpush2.msra.mxu0 0.0
        %597 = vmatprep.subr.mxu0 0.0
        %598 = vmatpush2.msra.mxu0 0.0
        %599 = vmatprep.subr.mxu0 0.0
        %600 = vmatpush2.msra.mxu0 0.0
        %601 = vmatprep.subr.mxu0 0.0
        %602 = vmatpush2.msra.mxu0 0.0
        %603 = vmatprep.subr.mxu0 0.0
        %604 = vmatpush2.msra.mxu0 0.0
        %605 = vmatprep.subr.mxu0 0.0
        %606 = vmatpush2.msra.mxu0 0.0
        %607 = vmatprep.subr.mxu0 0.0
        %608 = vmatpush2.msra.mxu0 0.0
        %609 = vmatprep.subr.mxu0 0.0
        %610 = vmatpush2.msra.mxu0 0.0
        %611 = vmatprep.subr.mxu0 0.0
        %612 = vmatpush2.msra.mxu0 0.0
        %613 = vmatprep.subr.mxu0 0.0
        %614 = vmatpush2.msra.mxu0 0.0
        %615 = vmatprep.mubr.f32.mxu0 0.0
        %616 = vmatmul.mubr.f32.gmra.mxu0 %v546
        %v617 = vpop.f32.mrf.mxu0
        %v618 = vadd.f32 0.0, %v617
        %v619 = vpop.f32.mrf.mxu0
        %620 = vmatprep.mubr.f32.mxu0 0.0
        %621 = vmatmul.mubr.f32.gmra.mxu0 %v549
        %v622 = vpop.f32.mrf.mxu0
        %v623 = vadd.f32 0.0, %v622
        %v624 = vpop.f32.mrf.mxu0
        %625 = vdwg.mxu0
        %626 = vrot.lane.b32.xlu0 %v385, 3
        %v627 = vpop.permute.xlu0 %626
        %628 = vrot.lane.b32.xlu0 %v387, 3
        %v629 = vpop.permute.xlu0 %628
        %632 = vrot.lane.b32.xlu0 %v396, 6
        %v633 = vpop.permute.xlu0 %632
        %634 = vrot.lane.b32.xlu0 %v398, 6
        %v635 = vpop.permute.xlu0 %634
        %638 = vrot.lane.b32.xlu0 %v407, 9
        %v639 = vpop.permute.xlu0 %638
        %640 = vrot.lane.b32.xlu0 %v409, 9
        %v641 = vpop.permute.xlu0 %640
        %644 = vrot.lane.b32.xlu0 %v326, 12
        %v645 = vpop.permute.xlu0 %644
        %646 = vrot.lane.b32.xlu0 %v327, 12
        %v647 = vpop.permute.xlu0 %646
        %650 = vrot.lane.b32.xlu0 %v427, 15
        %v651 = vpop.permute.xlu0 %650
        %652 = vrot.lane.b32.xlu0 %v429, 15
        %v653 = vpop.permute.xlu0 %652
        %656 = vrot.lane.b32.xlu0 %v438, 18
        %v657 = vpop.permute.xlu0 %656
        %658 = vrot.lane.b32.xlu0 %v440, 18
        %v659 = vpop.permute.xlu0 %658
        %662 = vrot.lane.b32.xlu0 %v449, 21
        %v663 = vpop.permute.xlu0 %662
        %664 = vrot.lane.b32.xlu0 %v451, 21
        %v665 = vpop.permute.xlu0 %664
        %668 = vrot.lane.b32.xlu0 %v329, 24
        %v669 = vpop.permute.xlu0 %668
        %670 = vrot.lane.b32.xlu0 %v330, 24
        %v671 = vpop.permute.xlu0 %670
        %674 = vrot.lane.b32.xlu0 %v469, 27
        %v675 = vpop.permute.xlu0 %674
        %676 = vrot.lane.b32.xlu0 %v471, 27
        %v677 = vpop.permute.xlu0 %676
        %680 = vrot.lane.b32.xlu0 %v480, 30
        %v681 = vpop.permute.xlu0 %680
        %682 = vrot.lane.b32.xlu0 %v482, 30
        %v683 = vpop.permute.xlu0 %682
        %686 = vrot.lane.b32.xlu0 %v491, 33
        %v687 = vpop.permute.xlu0 %686
        %688 = vrot.lane.b32.xlu0 %v493, 33
        %v689 = vpop.permute.xlu0 %688
        %694 = vrot.lane.b32.xlu0 %v332, 36
        %v695 = vpop.permute.xlu0 %694
        %696 = vrot.lane.b32.xlu0 %v333, 36
        %v697 = vpop.permute.xlu0 %696
        %v701 = vrot.slane %v332, 1
        %v702 = vrot.slane %v333, 1
        %v703 = vsel %vm338, %v701, %v702
        %v704 = vrot.slane %v334, 1
        %v705 = vsel %vm338, %v702, %v704
        %706 = vrot.lane.b32.xlu0 %v703, 39
        %v707 = vpop.permute.xlu0 %706
        %708 = vrot.lane.b32.xlu0 %v705, 39
        %v709 = vpop.permute.xlu0 %708
        %v712 = vrot.slane %v332, 2
        %v713 = vrot.slane %v333, 2
        %v714 = vsel %vm350, %v712, %v713
        %v715 = vrot.slane %v334, 2
        %v716 = vsel %vm350, %v713, %v715
        %717 = vrot.lane.b32.xlu0 %v714, 42
        %v718 = vpop.permute.xlu0 %717
        %719 = vrot.lane.b32.xlu0 %v716, 42
        %v720 = vpop.permute.xlu0 %719
        %v723 = vrot.slane %v332, 3
        %v724 = vrot.slane %v333, 3
        %v725 = vsel %vm362, %v723, %v724
        %v726 = vrot.slane %v334, 3
        %v727 = vsel %vm362, %v724, %v726
        %728 = vrot.lane.b32.xlu0 %v725, 45
        %v729 = vpop.permute.xlu0 %728
        %730 = vrot.lane.b32.xlu0 %v727, 45
        %v731 = vpop.permute.xlu0 %730
        %v734 = vsel %vm171, %v323, %v627
        %v735 = vsel %vm171, %v324, %v629
        %v736 = vsel %vm502, %v734, %v633
        %v737 = vsel %vm502, %v735, %v635
        %v738 = vsel %vm505, %v736, %v639
        %v739 = vsel %vm505, %v737, %v641
        %v740 = vsel %vm508, %v738, %v645
        %v741 = vsel %vm508, %v739, %v647
        %v742 = vsel %vm511, %v740, %v651
        %v743 = vsel %vm511, %v741, %v653
        %v744 = vsel %vm514, %v742, %v657
        %v745 = vsel %vm514, %v743, %v659
        %v746 = vsel %vm517, %v744, %v663
        %v747 = vsel %vm517, %v745, %v665
        %v748 = vsel %vm520, %v746, %v669
        %v749 = vsel %vm520, %v747, %v671
        %v750 = vsel %vm523, %v748, %v675
        %v751 = vsel %vm523, %v749, %v677
        %v752 = vsel %vm526, %v750, %v681
        %v753 = vsel %vm526, %v751, %v683
        %v754 = vsel %vm529, %v752, %v687
        %v755 = vsel %vm529, %v753, %v689
        %v756 = vsel %vm532, %v754, %v695
        %v757 = vsel %vm532, %v755, %v697
        %v758 = vsel %vm535, %v756, %v707
        %v759 = vsel %vm535, %v757, %v709
        %v760 = vsel %vm538, %v758, %v718
        %v761 = vsel %vm538, %v759, %v720
        %v762 = vsel %vm541, %v760, %v729
        %v763 = vsel %vm541, %v761, %v731
        %v765 = vsel %vm544, %v762, 0
        %v768 = vsel %vm544, %v763, 0
        %770 = vmatprep.subr.mxu0 0.0
        %771 = vmatpush1.msra.mxu0 0.0
        %772 = vmatprep.subr.mxu0 0.0
        %773 = vmatpush1.msra.mxu0 0.0
        %774 = vmatprep.subr.mxu0 0.0
        %775 = vmatpush1.msra.mxu0 0.0
        %776 = vmatprep.subr.mxu0 0.0
        %777 = vmatpush1.msra.mxu0 0.0
        %778 = vmatprep.subr.mxu0 0.0
        %779 = vmatpush1.msra.mxu0 0.0
        %780 = vmatprep.subr.mxu0 0.0
        %781 = vmatpush1.msra.mxu0 0.0
        %782 = vmatprep.subr.mxu0 0.0
        %783 = vmatpush1.msra.mxu0 0.0
        %784 = vmatprep.subr.mxu0 0.0
        %785 = vmatpush1.msra.mxu0 0.0
        %786 = vmatprep.subr.mxu0 0.0
        %787 = vmatpush1.msra.mxu0 0.0
        %788 = vmatprep.subr.mxu0 0.0
        %789 = vmatpush1.msra.mxu0 0.0
        %790 = vmatprep.subr.mxu0 0.0
        %791 = vmatpush1.msra.mxu0 %v303
        %792 = vmatprep.subr.mxu0 0.0
        %793 = vmatpush1.msra.mxu0 %v302
        %794 = vmatprep.subr.mxu0 0.0
        %795 = vmatpush1.msra.mxu0 %v301
        %796 = vmatprep.subr.mxu0 0.0
        %797 = vmatpush1.msra.mxu0 %v300
        %798 = vmatprep.subr.mxu0 0.0
        %799 = vmatpush1.msra.mxu0 %v299
        %800 = vmatprep.subr.mxu0 0.0
        %801 = vmatpush1.msra.mxu0 %v298
        %802 = vmatprep.subr.mxu0 0.0
        %803 = vmatpush2.msra.mxu0 0.0
        %804 = vmatprep.subr.mxu0 0.0
        %805 = vmatpush2.msra.mxu0 0.0
        %806 = vmatprep.subr.mxu0 0.0
        %807 = vmatpush2.msra.mxu0 0.0
        %808 = vmatprep.subr.mxu0 0.0
        %809 = vmatpush2.msra.mxu0 0.0
        %810 = vmatprep.subr.mxu0 0.0
        %811 = vmatpush2.msra.mxu0 0.0
        %812 = vmatprep.subr.mxu0 0.0
        %813 = vmatpush2.msra.mxu0 0.0
        %814 = vmatprep.subr.mxu0 0.0
        %815 = vmatpush2.msra.mxu0 0.0
        %816 = vmatprep.subr.mxu0 0.0
        %817 = vmatpush2.msra.mxu0 0.0
        %818 = vmatprep.subr.mxu0 0.0
        %819 = vmatpush2.msra.mxu0 0.0
        %820 = vmatprep.subr.mxu0 0.0
        %821 = vmatpush2.msra.mxu0 0.0
        %822 = vmatprep.subr.mxu0 0.0
        %823 = vmatpush2.msra.mxu0 0.0
        %824 = vmatprep.subr.mxu0 0.0
        %825 = vmatpush2.msra.mxu0 0.0
        %826 = vmatprep.subr.mxu0 0.0
        %827 = vmatpush2.msra.mxu0 0.0
        %828 = vmatprep.subr.mxu0 0.0
        %829 = vmatpush2.msra.mxu0 0.0
        %830 = vmatprep.subr.mxu0 0.0
        %831 = vmatpush2.msra.mxu0 0.0
        %832 = vmatprep.subr.mxu0 0.0
        %833 = vmatpush2.msra.mxu0 0.0
        %834 = vmatprep.mubr.f32.mxu0 0.0
        %835 = vmatmul.mubr.f32.gmra.mxu0 %v765
        %v836 = vpop.f32.mrf.mxu0
        %v837 = vadd.f32 0.0, %v836
        %v838 = vpop.f32.mrf.mxu0
        %839 = vmatprep.mubr.f32.mxu0 0.0
        %840 = vmatmul.mubr.f32.gmra.mxu0 %v768
        %v841 = vpop.f32.mrf.mxu0
        %v842 = vadd.f32 0.0, %v841
        %v843 = vpop.f32.mrf.mxu0
        %844 = vdwg.mxu0
        %v845 = vmax.f32 %v618, %v837
        %v846 = vmax.f32 %v623, %v842
        %vm847 = vcmask 31744
        %848 = vst.msk [vmem:[#allocation3] sm:$0xff] %vm847, %v845
        %849 = vst.msk [vmem:[#allocation3 + $0x8] sm:$0xff] %vm847, %v846
        %v850 = vld [vmem:[#allocation3] ss:$2 sm:$0xff]
        %s851 = scalar_lea.vmem [#allocation3], 1
        %v852 = vld [vmem:[%s851] ss:$2 sm:$0xff]
        %v853 = vmax.f32 %v850, %v852
        %v854 = vadd.f32 %v853, %v309
        %v855 = vmax.f32 %v854, 0.0
        %s856 = smul.u32 %s312, 8
        %s857 = scalar_lea.vmem %s170, %s856
        %858 = vst.msk [vmem:[%s857] sm:$0xff] %vm847, %v855
      $region37: #{perspective_forward.4} parent=31 // loop_footer
        %s316 = sadd.s32 1, %s312
      $region38: #{perspective_forward.4} parent=31 // loop_footer_branch
        %311 = sbr.rel target = $region34
      $region39: #{perspective_forward.4} parent=31 // loop_exit
        _
      %p859 = scmp.lt.s32.totalorder %s14, 1
      %s860 = scalar_select %p859, %s14, 1
      %s861 = smul.addr %s860, 8
      %s862 = smul.addr %s861, 8
      %s863 = scalar_lea.vmem %s3, %s862
      // Predicated region
      $region40: #{perspective_forward.4} parent=31 // pred_check
        %p864 = pneg %p100
      $region41: #{perspective_forward.4} parent=31 // pred_check_branch
        %866 = sbr.rel (%p864) target = $region43
      $region42: #{perspective_forward.4} parent=31 // pred_region
        _
      $region43: #{perspective_forward.4} parent=31 // pred_fallthru
        _
    $region32: #{perspective_forward.4} parent=5 // pred_fallthru
      _
    %p867 = scmp.le.s32.totalorder 2, %s9
    // Predicated region
    $region44: #{perspective_forward.4} parent=5 // pred_check
      %p868 = pneg %p867
    $region45: #{perspective_forward.4} parent=5 // pred_check_branch
      %870 = sbr.rel (%p868) target = $region47
    $region46: #{perspective_forward.4} parent=5 // pred_region
      %s871 = ssub.s32 %s9, 2
      // Predicated region
      $region48: #{perspective_forward.4} parent=46 // pred_check
        %p872 = pneg %p106
      $region49: #{perspective_forward.4} parent=46 // pred_check_branch
        %874 = sbr.rel (%p872) target = $region51
      $region50: #{perspective_forward.4} parent=46 // pred_region
        %p875 = scmp.lt.s32.totalorder %s15, 1
        %s876 = scalar_select %p875, %s15, 1
        %s877 = smul.addr %s876, 8
        %s878 = smul.addr %s877, 8
        %s879 = scalar_lea.vmem %s3, %s878
      $region51: #{perspective_forward.4} parent=46 // pred_fallthru
        _
    $region47: #{perspective_forward.4} parent=5 // pred_fallthru
      _
  $region6: #{perspective_forward.4} parent=0 // loop_footer
    %s13 = sadd.s32 1, %s9
  $region7: #{perspective_forward.4} parent=0 // loop_footer_branch
    %8 = sbr.rel target = $region3
  $region8: #{perspective_forward.4} parent=0 // loop_exit
    _

// kernel: perspective_forward.6
$region0: #{perspective_forward.6}
  #allocation0 [shape = 'u32[]', space=smem, size = 0x4, offset = 0x4, fixed_abs, tag = 'smem constant byte address 0x4 - core index']
  #allocation1 [shape = 'u32[144,128]{1,0:T(1,128)}', space=vmem, size = 0x12000, scoped, tag = 'internal scratch']
  #allocation2 [shape = 'f32[8,8,8]{2,1,0:T(8,128)}', space=vmem, size = 0x8000, scoped, tag = 'scratch operand']
  #allocation3 [shape = 'f32[4,16]{1,0:T(4,128)}', space=vmem, size = 0x800, scoped, tag = 'scratch operand']
  %s0 = inlined_call_operand.vmem [shape: f32[2,4,4,8], index: 0, kind: input, shape index: {}]
  %s1 = inlined_call_operand.vmem [shape: f32[128,16], index: 1, kind: input, shape index: {}]
  %s2 = inlined_call_operand.vmem [shape: f32[1,16], index: 2, kind: input, shape index: {}]
  %s3 = inlined_call_operand.vmem [shape: f32[2,2,2,16], index: 3, kind: output, shape index: {}]
  %s4 = sld [smem:[#allocation0]]
  $region52: #{perspective_forward.6} parent=0
    _
  %s6 = ssub.s32 1, %s4
  %s7 = scalar_select 0, %s6, %s4
  loop: start=0, step=1, limit=4
  $region2: #{perspective_forward.6} parent=0 // loop_pre_header
    _
  $region3: #{perspective_forward.6} parent=0 // loop_header
    %s9 = sphi 0, %s13
    %p10 = scmp.ge.s32.totalorder %s9, 4
    %s19 = sphi 0, %s21
    %s22 = sphi 0, %s19
    %s23 = sphi 0, %s22
    %s39 = sphi 0, %s23
    %s43 = sphi 0, %s43
    %s45 = sphi 0, %s43
    %s46 = sphi 0, %s45
    %s60 = sphi 0, %s46
    %s64 = sphi 0, %s64
    %s66 = sphi 0, %s64
    %s67 = sphi 0, %s66
    %s81 = sphi 0, %s67
    %s87 = sphi 0, %s89
    %s90 = sphi 0, %s87
    %s91 = sphi 0, %s90
    %s107 = sphi 0, %s91
  $region4: #{perspective_forward.6} parent=0 // loop_header_branch
    %12 = sbr.rel (%p10) target = $region8
  $region5: #{perspective_forward.6} parent=0 // loop_body
    %s14 = ssub.s32 %s9, 1
    %s15 = ssub.s32 %s9, 2
    %s16 = sadd.s32 %s9, 1
    %s17 = ssub.s32 %s9, %s16
    %p18 = scmp.eq.s32.totalorder %s17, 0
    %s20 = sadd.s32 %s19, 1
    %s21 = scalar_select %p18, %s19, %s20
    %p24 = pneg %p18
    %p25 = scmp.eq.s32.totalorder %s9, 1
    %p26 = por %p24, %p25
    %p27 = scmp.ne.s32.totalorder %s19, %s22
    %p28 = scmp.eq.s32.totalorder %s9, 0
    %p29 = por %p27, %p28
    %p30 = scmp.ne.s32.totalorder %s19, %s22
    %p31 = scmp.eq.s32.totalorder %s14, 1
    %p32 = por %p30, %p31
    %p33 = scmp.ne.s32.totalorder %s22, %s23
    %p34 = scmp.eq.s32.totalorder %s14, 0
    %p35 = por %p33, %p34
    %p36 = scmp.ne.s32.totalorder %s22, %s23
    %p37 = scmp.eq.s32.totalorder %s15, 1
    %p38 = por %p36, %p37
    %p40 = scmp.ne.s32.totalorder %s23, %s39
    %p41 = scmp.eq.s32.totalorder %s15, 0
    %p42 = por %p40, %p41
    %s44 = sadd.s32 %s43, 1
    %p47 = scmp.eq.s32.totalorder %s9, 1
    %p48 = scmp.ne.s32.totalorder %s43, %s45
    %p49 = scmp.eq.s32.totalorder %s9, 0
    %p50 = por %p48, %p49
    %p51 = scmp.ne.s32.totalorder %s43, %s45
    %p52 = scmp.eq.s32.totalorder %s14, 1
    %p53 = por %p51, %p52
    %p54 = scmp.ne.s32.totalorder %s45, %s46
    %p55 = scmp.eq.s32.totalorder %s14, 0
    %p56 = por %p54, %p55
    %p57 = scmp.ne.s32.totalorder %s45, %s46
    %p58 = scmp.eq.s32.totalorder %s15, 1
    %p59 = por %p57, %p58
    %p61 = scmp.ne.s32.totalorder %s46, %s60
    %p62 = scmp.eq.s32.totalorder %s15, 0
    %p63 = por %p61, %p62
    %s65 = sadd.s32 %s64, 1
    %p68 = scmp.eq.s32.totalorder %s9, 1
    %p69 = scmp.ne.s32.totalorder %s64, %s66
    %p70 = scmp.eq.s32.totalorder %s9, 0
    %p71 = por %p69, %p70
    %p72 = scmp.ne.s32.totalorder %s64, %s66
    %p73 = scmp.eq.s32.totalorder %s14, 1
    %p74 = por %p72, %p73
    %p75 = scmp.ne.s32.totalorder %s66, %s67
    %p76 = scmp.eq.s32.totalorder %s14, 0
    %p77 = por %p75, %p76
    %p78 = scmp.ne.s32.totalorder %s66, %s67
    %p79 = scmp.eq.s32.totalorder %s15, 1
    %p80 = por %p78, %p79
    %p82 = scmp.ne.s32.totalorder %s67, %s81
    %p83 = scmp.eq.s32.totalorder %s15, 0
    %p84 = por %p82, %p83
    %s85 = ssub.s32 %s9, %s16
    %p86 = scmp.eq.s32.totalorder %s85, 0
    %s88 = sadd.s32 %s87, 1
    %s89 = scalar_select %p86, %s87, %s88
    %p92 = pneg %p86
    %p93 = scmp.eq.s32.totalorder %s9, 1
    %p94 = por %p92, %p93
    %p95 = scmp.ne.s32.totalorder %s87, %s90
    %p96 = scmp.eq.s32.totalorder %s9, 0
    %p97 = por %p95, %p96
    %p98 = scmp.ne.s32.totalorder %s87, %s90
    %p99 = scmp.eq.s32.totalorder %s14, 1
    %p100 = por %p98, %p99
    %p101 = scmp.ne.s32.totalorder %s90, %s91
    %p102 = scmp.eq.s32.totalorder %s14, 0
    %p103 = por %p101, %p102
    %p104 = scmp.ne.s32.totalorder %s90, %s91
    %p105 = scmp.eq.s32.totalorder %s15, 1
    %p106 = por %p104, %p105
    %p108 = scmp.ne.s32.totalorder %s91, %s107
    %p109 = scmp.eq.s32.totalorder %s15, 0
    %p110 = por %p108, %p109
    %p111 = scmp.le.s32.totalorder 1, %s9
    %p112 = scmp.lt.s32.totalorder %s9, 3
    %p113 = pnand %p111, %p112
    %p114 = pneg %p113
    // Predicated region
    $region9: #{perspective_forward.6} parent=5 // pred_check
      _
    $region10: #{perspective_forward.6} parent=5 // pred_check_branch
      %116 = sbr.rel (%p113) target = $region12
    $region11: #{perspective_forward.6} parent=5 // pred_region
      %s117 = ssub.s32 %s9, 1
      // Predicated region
      $region13: #{perspective_forward.6} parent=11 // pred_check
        %p118 = pneg %p56
      $region14: #{perspective_forward.6} parent=11 // pred_check_branch
        %120 = sbr.rel (%p118) target = $region16
      $region15: #{perspective_forward.6} parent=11 // pred_region
        _
      $region16: #{perspective_forward.6} parent=11 // pred_fallthru
        _
      // Predicated region
      $region17: #{perspective_forward.6} parent=11 // pred_check
        %p121 = pneg %p77
      $region18: #{perspective_forward.6} parent=11 // pred_check_branch
        %123 = sbr.rel (%p121) target = $region20
      $region19: #{perspective_forward.6} parent=11 // pred_region
        _
      $region20: #{perspective_forward.6} parent=11 // pred_fallthru
        _
    $region12: #{perspective_forward.6} parent=5 // pred_fallthru
      _
    %p124 = scmp.lt.s32.totalorder %s9, 2
    // Predicated region
    $region21: #{perspective_forward.6} parent=5 // pred_check
      %p125 = pneg %p124
    $region22: #{perspective_forward.6} parent=5 // pred_check_branch
      %127 = sbr.rel (%p125) target = $region24
    $region23: #{perspective_forward.6} parent=5 // pred_region
      // Predicated region
      $region25: #{perspective_forward.6} parent=23 // pred_check
        %p128 = pneg %p29
      $region26: #{perspective_forward.6} parent=23 // pred_check_branch
        %130 = sbr.rel (%p128) target = $region28
      $region27: #{perspective_forward.6} parent=23 // pred_region
        %p131 = scmp.lt.s32.totalorder %s9, 1
        %s132 = scalar_select %p131, %s9, 1
        %s133 = smul.addr %s132, 4
        %s134 = smul.addr %s133, 4
        %s135 = scalar_lea.vmem %s0, %s134
      $region28: #{perspective_forward.6} parent=23 // pred_fallthru
        _
    $region24: #{perspective_forward.6} parent=5 // pred_fallthru
      _
    %p136 = scmp.le.s32.totalorder 1, %s9
    %p137 = scmp.lt.s32.totalorder %s9, 3
    %p138 = pnand %p136, %p137
    %p139 = pneg %p138
    // Predicated region
    $region29: #{perspective_forward.6} parent=5 // pred_check
      _
    $region30: #{perspective_forward.6} parent=5 // pred_check_branch
      %141 = sbr.rel (%p138) target = $region32
    $region31: #{perspective_forward.6} parent=5 // pred_region
      %s142 = ssub.s32 %s9, 1
      %p143 = scmp.lt.s32.totalorder %s14, 1
      %s144 = scalar_select %p143, %s14, 1
      %s145 = smul.addr %s144, 4
      %s146 = smul.addr %s145, 4
      %s147 = scalar_lea.vmem %s0, %s146
      %p148 = pneg %p35
      %p149 = pneg %p32
      %p150 = pneg %p56
      %p151 = pneg %p53
      %p152 = pneg %p77
      %p153 = pneg %p74
      %p154 = pneg %p103
      %p155 = pneg %p100
      %p156 = scmp.lt.s32.totalorder %s14, 1
      %s157 = scalar_select %p156, %s14, 1
      %s158 = smul.addr %s157, 2
      %s159 = smul.addr %s158, 2
      %s160 = scalar_lea.vmem %s3, %s159
      %p161 = scmp.lt.s32.totalorder %s14, 1
      %s162 = scalar_select %p161, %s14, 1
      %s163 = smul.addr %s162, 4
      %s164 = smul.addr %s163, 4
      %s165 = scalar_lea.vmem %s0, %s164
      %p166 = scmp.lt.s32.totalorder %s14, 1
      %s167 = scalar_select %p166, %s14, 1
      %s168 = smul.addr %s167, 2
      %s169 = smul.addr %s168, 2
      %s170 = scalar_lea.vmem %s3, %s169
      %vm171 = vcmask 64512
      %172 = vst.msk [vmem:[#allocation2] sm:$0xff] %vm171, 0.0
      %173 = vst.msk [vmem:[#allocation2 + $0x8] sm:$0xff] %vm171, 0.0
      %174 = vst.msk [vmem:[#allocation2 + $0x10] sm:$0xff] %vm171, 0.0
      %175 = vst.msk [vmem:[#allocation2 + $0x18] sm:$0xff] %vm171, 0.0
      %176 = vst.msk [vmem:[#allocation2 + $0x20] sm:$0xff] %vm171, 0.0
      %177 = vst.msk [vmem:[#allocation2 + $0x28] sm:$0xff] %vm171, 0.0
      %178 = vst.msk [vmem:[#allocation2 + $0x30] sm:$0xff] %vm171, 0.0
      %179 = vst.msk [vmem:[#allocation2 + $0x38] sm:$0xff] %vm171, 0.0
      %v180 = vld [vmem:[%s165] sm:$0xf]
      %v181 = vld [vmem:[%s165 + $0x4] sm:$0xf]
      %v182 = vld [vmem:[%s165 + $0x8] sm:$0xf]
      %v183 = vld [vmem:[%s165 + $0xc] sm:$0xf]
      %s184 = scalar_lea.vmem [#allocation2], 16
      %vm185 = vcmask 60416
      %186 = vst.msk [vmem:[%s184 + $0x2] sm:$0xf] %vm185, %v180
      %187 = vst.msk [vmem:[%s184 + $0xa] sm:$0xf] %vm185, %v181
      %188 = vst.msk [vmem:[%s184 + $0x12] sm:$0xf] %vm185, %v182
      %189 = vst.msk [vmem:[%s184 + $0x1a] sm:$0xf] %vm185, %v183
      %v190 = vld [vmem:[%s1] sm:$0xff]
      %v191 = vld [vmem:[%s1 + $0x8] sm:$0xff]
      %v192 = vld [vmem:[%s1 + $0x10] sm:$0xff]
      %v193 = vld [vmem:[%s1 + $0x18] sm:$0xff]
      %v194 = vld [vmem:[%s1 + $0x20] sm:$0xff]
      %v195 = vld [vmem:[%s1 + $0x28] sm:$0xff]
      %v196 = vld [vmem:[%s1 + $0x30] sm:$0xff]
      %v197 = vld [vmem:[%s1 + $0x38] sm:$0xff]
      %v198 = vld [vmem:[%s1 + $0x40] sm:$0xff]
      %v199 = vld [vmem:[%s1 + $0x48] sm:$0xff]
      %v200 = vld [vmem:[%s1 + $0x50] sm:$0xff]
      %v201 = vld [vmem:[%s1 + $0x58] sm:$0xff]
      %v202 = vld [vmem:[%s1 + $0x60] sm:$0xff]
      %v203 = vld [vmem:[%s1 + $0x68] sm:$0xff]
      %v204 = vld [vmem:[%s1 + $0x70] sm:$0xff]
      %v205 = vld [vmem:[%s1 + $0x78] sm:$0xff]
      %v206 = vld [vmem:[%s2] sm:$0x1]
      %v208 = vlaneseq
      %v209 = vshrl.u32 %v208, 7
      %v210 = vsub.s32 0, %v209
      %v211 = vrot.slane %v206, %v210
      loop: start=0, step=1, limit=2
      $region33: #{perspective_forward.6} parent=31 // loop_pre_header
        _
      $region34: #{perspective_forward.6} parent=31 // loop_header
        %s214 = sphi 0, %s218
        %p215 = scmp.ge.s32.totalorder %s214, 2
      $region35: #{perspective_forward.6} parent=31 // loop_header_branch
        %217 = sbr.rel (%p215) target = $region39
      $region36: #{perspective_forward.6} parent=31 // loop_body
        %s219 = smul.u32 %s214, 2
        %s220 = smul.u32 %s219, 8
        %s221 = scalar_lea.vmem [#allocation2], %s220
        %v222 = vld [vmem:[%s221] sm:$0xff]
        %v223 = vld [vmem:[%s221 + $0x8] sm:$0xff]
        %v224 = vld [vmem:[%s221 + $0x10] sm:$0xff]
        %v225 = vld [vmem:[%s221 + $0x18] sm:$0xff]
        %v226 = vld [vmem:[%s221 + $0x20] sm:$0xff]
        %v228 = vrot.slane %v222, 1
        %229 = vrot.lane.b32.xlu0 %v228, 8
        %v230 = vpop.permute.xlu0 %229
        %v232 = vrot.slane %v222, 2
        %233 = vrot.lane.b32.xlu0 %v232, 16
        %v234 = vpop.permute.xlu0 %233
        %v236 = vrot.slane %v222, 3
        %237 = vrot.lane.b32.xlu0 %v236, 24
        %v238 = vpop.permute.xlu0 %237
        %241 = vrot.lane.b32.xlu0 %v223, 32
        %v242 = vpop.permute.xlu0 %241
        %v244 = vrot.slane %v223, 1
        %245 = vrot.lane.b32.xlu0 %v244, 40
        %v246 = vpop.permute.xlu0 %245
        %v248 = vrot.slane %v223, 2
        %249 = vrot.lane.b32.xlu0 %v248, 48
        %v250 = vpop.permute.xlu0 %249
        %v252 = vrot.slane %v223, 3
        %253 = vrot.lane.b32.xlu0 %v252, 56
        %v254 = vpop.permute.xlu0 %253
        %257 = vrot.lane.b32.xlu0 %v224, 64
        %v258 = vpop.permute.xlu0 %257
        %v260 = vrot.slane %v224, 1
        %261 = vrot.lane.b32.xlu0 %v260, 72
        %v262 = vpop.permute.xlu0 %261
        %v264 = vrot.slane %v224, 2
        %265 = vrot.lane.b32.xlu0 %v264, 80
        %v266 = vpop.permute.xlu0 %265
        %v268 = vrot.slane %v224, 3
        %269 = vrot.lane.b32.xlu0 %v268, 88
        %v270 = vpop.permute.xlu0 %269
        %273 = vrot.lane.b32.xlu0 %v225, 96
        %v274 = vpop.permute.xlu0 %273
        %v276 = vrot.slane %v225, 1
        %277 = vrot.lane.b32.xlu0 %v276, 104
        %v278 = vpop.permute.xlu0 %277
        %v280 = vrot.slane %v225, 2
        %281 = vrot.lane.b32.xlu0 %v280, 112
        %v282 = vpop.permute.xlu0 %281
        %v284 = vrot.slane %v225, 3
        %285 = vrot.lane.b32.xlu0 %v284, 120
        %v286 = vpop.permute.xlu0 %285
        %v288 = vsel %vm171, %v222, %v230
        %vm289 = vcmask 130048
        %v290 = vsel %vm289, %v288, %v234
        %vm291 = vcmask 195584
        %v292 = vsel %vm291, %v290, %v238
        %vm293 = vcmask 261120
        %v294 = vsel %vm293, %v292, %v242
        %vm295 = vcmask 326656
        %v296 = vsel %vm295, %v294, %v246
        %vm297 = vcmask 392192
        %v298 = vsel %vm297, %v296, %v250
        %vm299 = vcmask 457728
        %v300 = vsel %vm299, %v298, %v254
        %vm301 = vcmask 523264
        %v302 = vsel %vm301, %v300, %v258
        %vm303 = vcmask 588800
        %v304 = vsel %vm303, %v302, %v262
        %vm305 = vcmask 654336
        %v306 = vsel %vm305, %v304, %v266
        %vm307 = vcmask 719872
        %v308 = vsel %vm307, %v306, %v270
        %vm309 = vcmask 785408
        %v310 = vsel %vm309, %v308, %v274
        %vm311 = vcmask 850944
        %v312 = vsel %vm311, %v310, %v278
        %vm313 = vcmask 916480
        %v314 = vsel %vm313, %v312, %v282
        %vm315 = vcmask 982016
        %v316 = vsel %vm315, %v314, %v286
        %317 = vmatprep.subr.mxu0 0.0
        %318 = vmatpush1.msra.mxu0 %v205
        %319 = vmatprep.subr.mxu0 0.0
        %320 = vmatpush1.msra.mxu0 %v204
        %321 = vmatprep.subr.mxu0 0.0
        %322 = vmatpush1.msra.mxu0 %v203
        %323 = vmatprep.subr.mxu0 0.0
        %324 = vmatpush1.msra.mxu0 %v202
        %325 = vmatprep.subr.mxu0 0.0
        %326 = vmatpush1.msra.mxu0 %v201
        %327 = vmatprep.subr.mxu0 0.0
        %328 = vmatpush1.msra.mxu0 %v200
        %329 = vmatprep.subr.mxu0 0.0
        %330 = vmatpush1.msra.mxu0 %v199
        %331 = vmatprep.subr.mxu0 0.0
        %332 = vmatpush1.msra.mxu0 %v198
        %333 = vmatprep.subr.mxu0 0.0
        %334 = vmatpush1.msra.mxu0 %v197
        %335 = vmatprep.subr.mxu0 0.0
        %336 = vmatpush1.msra.mxu0 %v196
        %337 = vmatprep.subr.mxu0 0.0
        %338 = vmatpush1.msra.mxu0 %v195
        %339 = vmatprep.subr.mxu0 0.0
        %340 = vmatpush1.msra.mxu0 %v194
        %341 = vmatprep.subr.mxu0 0.0
        %342 = vmatpush1.msra.mxu0 %v193
        %343 = vmatprep.subr.mxu0 0.0
        %344 = vmatpush1.msra.mxu0 %v192
        %345 = vmatprep.subr.mxu0 0.0
        %346 = vmatpush1.msra.mxu0 %v191
        %347 = vmatprep.subr.mxu0 0.0
        %348 = vmatpush1.msra.mxu0 %v190
        %349 = vmatprep.subr.mxu0 0.0
        %350 = vmatpush2.msra.mxu0 0.0
        %351 = vmatprep.subr.mxu0 0.0
        %352 = vmatpush2.msra.mxu0 0.0
        %353 = vmatprep.subr.mxu0 0.0
        %354 = vmatpush2.msra.mxu0 0.0
        %355 = vmatprep.subr.mxu0 0.0
        %356 = vmatpush2.msra.mxu0 0.0
        %357 = vmatprep.subr.mxu0 0.0
        %358 = vmatpush2.msra.mxu0 0.0
        %359 = vmatprep.subr.mxu0 0.0
        %360 = vmatpush2.msra.mxu0 0.0
        %361 = vmatprep.subr.mxu0 0.0
        %362 = vmatpush2.msra.mxu0 0.0
        %363 = vmatprep.subr.mxu0 0.0
        %364 = vmatpush2.msra.mxu0 0.0
        %365 = vmatprep.subr.mxu0 0.0
        %366 = vmatpush2.msra.mxu0 0.0
        %367 = vmatprep.subr.mxu0 0.0
        %368 = vmatpush2.msra.mxu0 0.0
        %369 = vmatprep.subr.mxu0 0.0
        %370 = vmatpush2.msra.mxu0 0.0
        %371 = vmatprep.subr.mxu0 0.0
        %372 = vmatpush2.msra.mxu0 0.0
        %373 = vmatprep.subr.mxu0 0.0
        %374 = vmatpush2.msra.mxu0 0.0
        %375 = vmatprep.subr.mxu0 0.0
        %376 = vmatpush2.msra.mxu0 0.0
        %377 = vmatprep.subr.mxu0 0.0
        %378 = vmatpush2.msra.mxu0 0.0
        %379 = vmatprep.subr.mxu0 0.0
        %380 = vmatpush2.msra.mxu0 0.0
        %381 = vmatprep.mubr.f32.mxu0 0.0
        %382 = vmatmul.mubr.f32.gmra.mxu0 %v316
        %v383 = vpop.f32.mrf.mxu0
        %v384 = vadd.f32 0.0, %v383
        %v385 = vpop.f32.mrf.mxu0
        %386 = vdwg.mxu0
        %387 = vrot.lane.b32.xlu0 %v244, 8
        %v388 = vpop.permute.xlu0 %387
        %390 = vrot.lane.b32.xlu0 %v248, 16
        %v391 = vpop.permute.xlu0 %390
        %393 = vrot.lane.b32.xlu0 %v252, 24
        %v394 = vpop.permute.xlu0 %393
        %396 = vrot.lane.b32.xlu0 %v224, 32
        %v397 = vpop.permute.xlu0 %396
        %399 = vrot.lane.b32.xlu0 %v260, 40
        %v400 = vpop.permute.xlu0 %399
        %402 = vrot.lane.b32.xlu0 %v264, 48
        %v403 = vpop.permute.xlu0 %402
        %405 = vrot.lane.b32.xlu0 %v268, 56
        %v406 = vpop.permute.xlu0 %405
        %408 = vrot.lane.b32.xlu0 %v225, 64
        %v409 = vpop.permute.xlu0 %408
        %411 = vrot.lane.b32.xlu0 %v276, 72
        %v412 = vpop.permute.xlu0 %411
        %414 = vrot.lane.b32.xlu0 %v280, 80
        %v415 = vpop.permute.xlu0 %414
        %417 = vrot.lane.b32.xlu0 %v284, 88
        %v418 = vpop.permute.xlu0 %417
        %421 = vrot.lane.b32.xlu0 %v226, 96
        %v422 = vpop.permute.xlu0 %421
        %v424 = vrot.slane %v226, 1
        %425 = vrot.lane.b32.xlu0 %v424, 104
        %v426 = vpop.permute.xlu0 %425
        %v428 = vrot.slane %v226, 2
        %429 = vrot.lane.b32.xlu0 %v428, 112
        %v430 = vpop.permute.xlu0 %429
        %v432 = vrot.slane %v226, 3
        %433 = vrot.lane.b32.xlu0 %v432, 120
        %v434 = vpop.permute.xlu0 %433
        %v436 = vsel %vm171, %v223, %v388
        %v437 = vsel %vm289, %v436, %v391
        %v438 = vsel %vm291, %v437, %v394
        %v439 = vsel %vm293, %v438, %v397
        %v440 = vsel %vm295, %v439, %v400
        %v441 = vsel %vm297, %v440, %v403
        %v442 = vsel %vm299, %v441, %v406
        %v443 = vsel %vm301, %v442, %v409
        %v444 = vsel %vm303, %v443, %v412
        %v445 = vsel %vm305, %v444, %v415
        %v446 = vsel %vm307, %v445, %v418
        %v447 = vsel %vm309, %v446, %v422
        %v448 = vsel %vm311, %v447, %v426
        %v449 = vsel %vm313, %v448, %v430
        %v450 = vsel %vm315, %v449, %v434
        %451 = vmatprep.subr.mxu0 0.0
        %452 = vmatpush1.msra.mxu0 %v205
        %453 = vmatprep.subr.mxu0 0.0
        %454 = vmatpush1.msra.mxu0 %v204
        %455 = vmatprep.subr.mxu0 0.0
        %456 = vmatpush1.msra.mxu0 %v203
        %457 = vmatprep.subr.mxu0 0.0
        %458 = vmatpush1.msra.mxu0 %v202
        %459 = vmatprep.subr.mxu0 0.0
        %460 = vmatpush1.msra.mxu0 %v201
        %461 = vmatprep.subr.mxu0 0.0
        %462 = vmatpush1.msra.mxu0 %v200
        %463 = vmatprep.subr.mxu0 0.0
        %464 = vmatpush1.msra.mxu0 %v199
        %465 = vmatprep.subr.mxu0 0.0
        %466 = vmatpush1.msra.mxu0 %v198
        %467 = vmatprep.subr.mxu0 0.0
        %468 = vmatpush1.msra.mxu0 %v197
        %469 = vmatprep.subr.mxu0 0.0
        %470 = vmatpush1.msra.mxu0 %v196
        %471 = vmatprep.subr.mxu0 0.0
        %472 = vmatpush1.msra.mxu0 %v195
        %473 = vmatprep.subr.mxu0 0.0
        %474 = vmatpush1.msra.mxu0 %v194
        %475 = vmatprep.subr.mxu0 0.0
        %476 = vmatpush1.msra.mxu0 %v193
        %477 = vmatprep.subr.mxu0 0.0
        %478 = vmatpush1.msra.mxu0 %v192
        %479 = vmatprep.subr.mxu0 0.0
        %480 = vmatpush1.msra.mxu0 %v191
        %481 = vmatprep.subr.mxu0 0.0
        %482 = vmatpush1.msra.mxu0 %v190
        %483 = vmatprep.subr.mxu0 0.0
        %484 = vmatpush2.msra.mxu0 0.0
        %485 = vmatprep.subr.mxu0 0.0
        %486 = vmatpush2.msra.mxu0 0.0
        %487 = vmatprep.subr.mxu0 0.0
        %488 = vmatpush2.msra.mxu0 0.0
        %489 = vmatprep.subr.mxu0 0.0
        %490 = vmatpush2.msra.mxu0 0.0
        %491 = vmatprep.subr.mxu0 0.0
        %492 = vmatpush2.msra.mxu0 0.0
        %493 = vmatprep.subr.mxu0 0.0
        %494 = vmatpush2.msra.mxu0 0.0
        %495 = vmatprep.subr.mxu0 0.0
        %496 = vmatpush2.msra.mxu0 0.0
        %497 = vmatprep.subr.mxu0 0.0
        %498 = vmatpush2.msra.mxu0 0.0
        %499 = vmatprep.subr.mxu0 0.0
        %500 = vmatpush2.msra.mxu0 0.0
        %501 = vmatprep.subr.mxu0 0.0
        %502 = vmatpush2.msra.mxu0 0.0
        %503 = vmatprep.subr.mxu0 0.0
        %504 = vmatpush2.msra.mxu0 0.0
        %505 = vmatprep.subr.mxu0 0.0
        %506 = vmatpush2.msra.mxu0 0.0
        %507 = vmatprep.subr.mxu0 0.0
        %508 = vmatpush2.msra.mxu0 0.0
        %509 = vmatprep.subr.mxu0 0.0
        %510 = vmatpush2.msra.mxu0 0.0
        %511 = vmatprep.subr.mxu0 0.0
        %512 = vmatpush2.msra.mxu0 0.0
        %513 = vmatprep.subr.mxu0 0.0
        %514 = vmatpush2.msra.mxu0 0.0
        %515 = vmatprep.mubr.f32.mxu0 0.0
        %516 = vmatmul.mubr.f32.gmra.mxu0 %v450
        %v517 = vpop.f32.mrf.mxu0
        %v518 = vadd.f32 0.0, %v517
        %v519 = vpop.f32.mrf.mxu0
        %520 = vdwg.mxu0
        %v521 = vmax.f32 %v384, %v518
        %vm522 = vcmask 125952
        %523 = vst.msk [vmem:[#allocation3] sm:$0xf] %vm522, %v521
        %v524 = vld [vmem:[#allocation3] ss:$2 sm:$0x3]
        %s525 = scalar_lea.vmem [#allocation3], 1
        %v526 = vld [vmem:[%s525] ss:$2 sm:$0x3]
        %v527 = vmax.f32 %v524, %v526
        %v528 = vadd.f32 %v527, %v211
        %v529 = vmax.f32 %v528, 0.0
        %s530 = scalar_lea.vmem %s170, %s219
        %vm531 = vcmask 123904
        %532 = vst.msk [vmem:[%s530] sm:$0x3] %vm531, %v529
      $region37: #{perspective_forward.6} parent=31 // loop_footer
        %s218 = sadd.s32 1, %s214
      $region38: #{perspective_forward.6} parent=31 // loop_footer_branch
        %213 = sbr.rel target = $region34
      $region39: #{perspective_forward.6} parent=31 // loop_exit
        _
      %p533 = scmp.lt.s32.totalorder %s14, 1
      %s534 = scalar_select %p533, %s14, 1
      %s535 = smul.addr %s534, 2
      %s536 = smul.addr %s535, 2
      %s537 = scalar_lea.vmem %s3, %s536
      // Predicated region
      $region40: #{perspective_forward.6} parent=31 // pred_check
        %p538 = pneg %p100
      $region41: #{perspective_forward.6} parent=31 // pred_check_branch
        %540 = sbr.rel (%p538) target = $region43
      $region42: #{perspective_forward.6} parent=31 // pred_region
        _
      $region43: #{perspective_forward.6} parent=31 // pred_fallthru
        _
    $region32: #{perspective_forward.6} parent=5 // pred_fallthru
      _
    %p541 = scmp.le.s32.totalorder 2, %s9
    // Predicated region
    $region44: #{perspective_forward.6} parent=5 // pred_check
      %p542 = pneg %p541
    $region45: #{perspective_forward.6} parent=5 // pred_check_branch
      %544 = sbr.rel (%p542) target = $region47
    $region46: #{perspective_forward.6} parent=5 // pred_region
      %s545 = ssub.s32 %s9, 2
      // Predicated region
      $region48: #{perspective_forward.6} parent=46 // pred_check
        %p546 = pneg %p106
      $region49: #{perspective_forward.6} parent=46 // pred_check_branch
        %548 = sbr.rel (%p546) target = $region51
      $region50: #{perspective_forward.6} parent=46 // pred_region
        %p549 = scmp.lt.s32.totalorder %s15, 1
        %s550 = scalar_select %p549, %s15, 1
        %s551 = smul.addr %s550, 2
        %s552 = smul.addr %s551, 2
        %s553 = scalar_lea.vmem %s3, %s552
      $region51: #{perspective_forward.6} parent=46 // pred_fallthru
        _
    $region47: #{perspective_forward.6} parent=5 // pred_fallthru
      _
  $region6: #{perspective_forward.6} parent=0 // loop_footer
    %s13 = sadd.s32 1, %s9
  $region7: #{perspective_forward.6} parent=0 // loop_footer_branch
    %8 = sbr.rel target = $region3
  $region8: #{perspective_forward.6} parent=0 // loop_exit
    _

// kernel: perspective_forward.7
$region0: #{perspective_forward.7}
  #allocation0 [shape = 'u32[]', space=smem, size = 0x4, offset = 0x4, fixed_abs, tag = 'smem constant byte address 0x4 - core index']
  #allocation1 [shape = 'u32[144,128]{1,0:T(1,128)}', space=vmem, size = 0x12000, scoped, tag = 'internal scratch']
  #allocation2 [shape = 'f32[2,8]{1,0:T(2,128)}', space=vmem, size = 0x400, scoped, tag = 'scratch operand']
  %s0 = inlined_call_operand.vmem [shape: f32[2,64], index: 0, kind: input, shape index: {}]
  %s1 = inlined_call_operand.vmem [shape: f32[64,64], index: 1, kind: input, shape index: {}]
  %s2 = inlined_call_operand.vmem [shape: f32[1,64], index: 2, kind: input, shape index: {}]
  %s3 = inlined_call_operand.vmem [shape: f32[64,8], index: 3, kind: input, shape index: {}]
  %s4 = inlined_call_operand.vmem [shape: f32[1,8], index: 4, kind: input, shape index: {}]
  %s5 = inlined_call_operand.hbm [shape: f32[2,8], index: 5, kind: output, shape index: {}]
  %s6 = sld [smem:[#allocation0]]
  $region38: #{perspective_forward.7} parent=0
    _
  %s8 = ssub.s32 1, %s6
  %s9 = scalar_select 0, %s8, %s6
  $region1: #{perspective_forward.7} parent=0
    #allocation3 [shape = 'u8[1024]{0}', space=vmem, size = 0x400, scoped, tag = 'output window, operand 0, single buffered']
    #allocation4 [shape = 's32[1]{0}', space=sflag, size = 0x4, scoped, tag = 'scoped memory for perspective_forward.7']
    %10 = vsyncpa [#allocation4], 0
    // Predicated region
    $region2: #{perspective_forward.7} parent=1 // pred_check
      _
    $region3: #{perspective_forward.7} parent=1 // pred_check_branch
      %12 = sbr.rel (0) target = $region5
    $region4: #{perspective_forward.7} parent=1 // pred_region
      _
    $region5: #{perspective_forward.7} parent=1 // pred_fallthru
      _
    // Predicated region
    $region6: #{perspective_forward.7} parent=1 // pred_check
      _
    $region7: #{perspective_forward.7} parent=1 // pred_check_branch
      %14 = sbr.rel (0) target = $region9
    $region8: #{perspective_forward.7} parent=1 // pred_region
      _
    $region9: #{perspective_forward.7} parent=1 // pred_fallthru
      _
    // Predicated region
    $region10: #{perspective_forward.7} parent=1 // pred_check
      _
    $region11: #{perspective_forward.7} parent=1 // pred_check_branch
      %16 = sbr.rel (0) target = $region13
    $region12: #{perspective_forward.7} parent=1 // pred_region
      _
    $region13: #{perspective_forward.7} parent=1 // pred_fallthru
      _
    // Predicated region
    $region14: #{perspective_forward.7} parent=1 // pred_check
      _
    $region15: #{perspective_forward.7} parent=1 // pred_check_branch
      %18 = sbr.rel (0) target = $region17
    $region16: #{perspective_forward.7} parent=1 // pred_region
      _
    $region17: #{perspective_forward.7} parent=1 // pred_fallthru
      _
    // Predicated region
    $region18: #{perspective_forward.7} parent=1 // pred_check
      _
    $region19: #{perspective_forward.7} parent=1 // pred_check_branch
      %20 = sbr.rel (0) target = $region21
    $region20: #{perspective_forward.7} parent=1 // pred_region
      _
    $region21: #{perspective_forward.7} parent=1 // pred_fallthru
      _
    %p21 = scmp.eq.s32.totalorder 0, 0
    // Predicated region
    $region22: #{perspective_forward.7} parent=1 // pred_check
      %p22 = pneg %p21
    $region23: #{perspective_forward.7} parent=1 // pred_check_branch
      %24 = sbr.rel (%p22) target = $region25
    $region24: #{perspective_forward.7} parent=1 // pred_region
      %vm25 = vcmask 58368
      %26 = vst.msk [vmem:[#allocation2] sm:$0x3] %vm25, 0.0
    $region25: #{perspective_forward.7} parent=1 // pred_fallthru
      _
    %v27 = vld [vmem:[%s0] sm:$0x3]
    %v28 = vld [vmem:[%s1] sm:$0xff]
    %v29 = vld [vmem:[%s1 + $0x8] sm:$0xff]
    %v30 = vld [vmem:[%s1 + $0x10] sm:$0xff]
    %v31 = vld [vmem:[%s1 + $0x18] sm:$0xff]
    %v32 = vld [vmem:[%s1 + $0x20] sm:$0xff]
    %v33 = vld [vmem:[%s1 + $0x28] sm:$0xff]
    %v34 = vld [vmem:[%s1 + $0x30] sm:$0xff]
    %v35 = vld [vmem:[%s1 + $0x38] sm:$0xff]
    %v36 = vld [vmem:[%s2] sm:$0x1]
    %v38 = vlaneseq
    %v39 = vshrl.u32 %v38, 7
    %v40 = vsub.s32 0, %v39
    %v41 = vrot.slane %v36, %v40
    %vm43 = vcmask 523264
    %v45 = vsel %vm43, %v27, 0
    %47 = vmatprep.subr.mxu0 0.0
    %48 = vmatpush1.msra.mxu0 0.0
    %49 = vmatprep.subr.mxu0 0.0
    %50 = vmatpush1.msra.mxu0 0.0
    %51 = vmatprep.subr.mxu0 0.0
    %52 = vmatpush1.msra.mxu0 0.0
    %53 = vmatprep.subr.mxu0 0.0
    %54 = vmatpush1.msra.mxu0 0.0
    %55 = vmatprep.subr.mxu0 0.0
    %56 = vmatpush1.msra.mxu0 0.0
    %57 = vmatprep.subr.mxu0 0.0
    %58 = vmatpush1.msra.mxu0 0.0
    %59 = vmatprep.subr.mxu0 0.0
    %60 = vmatpush1.msra.mxu0 0.0
    %61 = vmatprep.subr.mxu0 0.0
    %62 = vmatpush1.msra.mxu0 0.0
    %63 = vmatprep.subr.mxu0 0.0
    %64 = vmatpush1.msra.mxu0 %v35
    %65 = vmatprep.subr.mxu0 0.0
    %66 = vmatpush1.msra.mxu0 %v34
    %67 = vmatprep.subr.mxu0 0.0
    %68 = vmatpush1.msra.mxu0 %v33
    %69 = vmatprep.subr.mxu0 0.0
    %70 = vmatpush1.msra.mxu0 %v32
    %71 = vmatprep.subr.mxu0 0.0
    %72 = vmatpush1.msra.mxu0 %v31
    %73 = vmatprep.subr.mxu0 0.0
    %74 = vmatpush1.msra.mxu0 %v30
    %75 = vmatprep.subr.mxu0 0.0
    %76 = vmatpush1.msra.mxu0 %v29
    %77 = vmatprep.subr.mxu0 0.0
    %78 = vmatpush1.msra.mxu0 %v28
    %79 = vmatprep.subr.mxu0 0.0
    %80 = vmatpush2.msra.mxu0 0.0
    %81 = vmatprep.subr.mxu0 0.0
    %82 = vmatpush2.msra.mxu0 0.0
    %83 = vmatprep.subr.mxu0 0.0
    %84 = vmatpush2.msra.mxu0 0.0
    %85 = vmatprep.subr.mxu0 0.0
    %86 = vmatpush2.msra.mxu0 0.0
    %87 = vmatprep.subr.mxu0 0.0
    %88 = vmatpush2.msra.mxu0 0.0
    %89 = vmatprep.subr.mxu0 0.0
    %90 = vmatpush2.msra.mxu0 0.0
    %91 = vmatprep.subr.mxu0 0.0
    %92 = vmatpush2.msra.mxu0 0.0
    %93 = vmatprep.subr.mxu0 0.0
    %94 = vmatpush2.msra.mxu0 0.0
    %95 = vmatprep.subr.mxu0 0.0
    %96 = vmatpush2.msra.mxu0 0.0
    %97 = vmatprep.subr.mxu0 0.0
    %98 = vmatpush2.msra.mxu0 0.0
    %99 = vmatprep.subr.mxu0 0.0
    %100 = vmatpush2.msra.mxu0 0.0
    %101 = vmatprep.subr.mxu0 0.0
    %102 = vmatpush2.msra.mxu0 0.0
    %103 = vmatprep.subr.mxu0 0.0
    %104 = vmatpush2.msra.mxu0 0.0
    %105 = vmatprep.subr.mxu0 0.0
    %106 = vmatpush2.msra.mxu0 0.0
    %107 = vmatprep.subr.mxu0 0.0
    %108 = vmatpush2.msra.mxu0 0.0
    %109 = vmatprep.subr.mxu0 0.0
    %110 = vmatpush2.msra.mxu0 0.0
    %111 = vmatprep.mubr.f32.mxu0 0.0
    %112 = vmatmul.mubr.f32.gmra.mxu0 %v45
    %v113 = vpop.f32.mrf.mxu0
    %v114 = vadd.f32 %v41, %v113
    %v115 = vpop.f32.mrf.mxu0
    %116 = vdwg.mxu0
    %v117 = vmax.f32 %v114, 0.0
    %v118 = vld [vmem:[#allocation2] sm:$0x3]
    %v119 = vld [vmem:[%s3] sm:$0xff]
    %v120 = vld [vmem:[%s3 + $0x8] sm:$0xff]
    %v121 = vld [vmem:[%s3 + $0x10] sm:$0xff]
    %v122 = vld [vmem:[%s3 + $0x18] sm:$0xff]
    %v123 = vld [vmem:[%s3 + $0x20] sm:$0xff]
    %v124 = vld [vmem:[%s3 + $0x28] sm:$0xff]
    %v125 = vld [vmem:[%s3 + $0x30] sm:$0xff]
    %v126 = vld [vmem:[%s3 + $0x38] sm:$0xff]
    %v128 = vsel %vm43, %v117, 0
    %130 = vmatprep.subr.mxu0 0.0
    %131 = vmatpush1.msra.mxu0 0.0
    %132 = vmatprep.subr.mxu0 0.0
    %133 = vmatpush1.msra.mxu0 0.0
    %134 = vmatprep.subr.mxu0 0.0
    %135 = vmatpush1.msra.mxu0 0.0
    %136 = vmatprep.subr.mxu0 0.0
    %137 = vmatpush1.msra.mxu0 0.0
    %138 = vmatprep.subr.mxu0 0.0
    %139 = vmatpush1.msra.mxu0 0.0
    %140 = vmatprep.subr.mxu0 0.0
    %141 = vmatpush1.msra.mxu0 0.0
    %142 = vmatprep.subr.mxu0 0.0
    %143 = vmatpush1.msra.mxu0 0.0
    %144 = vmatprep.subr.mxu0 0.0
    %145 = vmatpush1.msra.mxu0 0.0
    %146 = vmatprep.subr.mxu0 0.0
    %147 = vmatpush1.msra.mxu0 %v126
    %148 = vmatprep.subr.mxu0 0.0
    %149 = vmatpush1.msra.mxu0 %v125
    %150 = vmatprep.subr.mxu0 0.0
    %151 = vmatpush1.msra.mxu0 %v124
    %152 = vmatprep.subr.mxu0 0.0
    %153 = vmatpush1.msra.mxu0 %v123
    %154 = vmatprep.subr.mxu0 0.0
    %155 = vmatpush1.msra.mxu0 %v122
    %156 = vmatprep.subr.mxu0 0.0
    %157 = vmatpush1.msra.mxu0 %v121
    %158 = vmatprep.subr.mxu0 0.0
    %159 = vmatpush1.msra.mxu0 %v120
    %160 = vmatprep.subr.mxu0 0.0
    %161 = vmatpush1.msra.mxu0 %v119
    %162 = vmatprep.subr.mxu0 0.0
    %163 = vmatpush2.msra.mxu0 0.0
    %164 = vmatprep.subr.mxu0 0.0
    %165 = vmatpush2.msra.mxu0 0.0
    %166 = vmatprep.subr.mxu0 0.0
    %167 = vmatpush2.msra.mxu0 0.0
    %168 = vmatprep.subr.mxu0 0.0
    %169 = vmatpush2.msra.mxu0 0.0
    %170 = vmatprep.subr.mxu0 0.0
    %171 = vmatpush2.msra.mxu0 0.0
    %172 = vmatprep.subr.mxu0 0.0
    %173 = vmatpush2.msra.mxu0 0.0
    %174 = vmatprep.subr.mxu0 0.0
    %175 = vmatpush2.msra.mxu0 0.0
    %176 = vmatprep.subr.mxu0 0.0
    %177 = vmatpush2.msra.mxu0 0.0
    %178 = vmatprep.subr.mxu0 0.0
    %179 = vmatpush2.msra.mxu0 0.0
    %180 = vmatprep.subr.mxu0 0.0
    %181 = vmatpush2.msra.mxu0 0.0
    %182 = vmatprep.subr.mxu0 0.0
    %183 = vmatpush2.msra.mxu0 0.0
    %184 = vmatprep.subr.mxu0 0.0
    %185 = vmatpush2.msra.mxu0 0.0
    %186 = vmatprep.subr.mxu0 0.0
    %187 = vmatpush2.msra.mxu0 0.0
    %188 = vmatprep.subr.mxu0 0.0
    %189 = vmatpush2.msra.mxu0 0.0
    %190 = vmatprep.subr.mxu0 0.0
    %191 = vmatpush2.msra.mxu0 0.0
    %192 = vmatprep.subr.mxu0 0.0
    %193 = vmatpush2.msra.mxu0 0.0
    %194 = vmatprep.mubr.f32.mxu0 0.0
    %195 = vmatmul.mubr.f32.gmra.mxu0 %v128
    %v196 = vpop.f32.mrf.mxu0
    %v197 = vadd.f32 0.0, %v196
    %v198 = vpop.f32.mrf.mxu0
    %199 = vdwg.mxu0
    %v200 = vadd.f32 %v118, %v197
    %vm201 = vcmask 58368
    %202 = vst.msk [vmem:[#allocation2] sm:$0x3] %vm201, %v200
    // Predicated region
    $region26: #{perspective_forward.7} parent=1 // pred_check
      %p203 = pneg %p21
    $region27: #{perspective_forward.7} parent=1 // pred_check_branch
      %205 = sbr.rel (%p203) target = $region29
    $region28: #{perspective_forward.7} parent=1 // pred_region
      %v206 = vld [vmem:[#allocation2] sm:$0x3]
      %v207 = vld [vmem:[%s4] sm:$0x1]
      %v209 = vlaneseq
      %v210 = vshrl.u32 %v209, 7
      %v211 = vsub.s32 0, %v210
      %v212 = vrot.slane %v207, %v211
      %v214 = vadd.f32 %v206, %v212
      %v215 = vmax.f32 %v214, 0.0
      %216 = vst.msk [vmem:[#allocation3] sm:$0x3] %vm201, %v215
    $region29: #{perspective_forward.7} parent=1 // pred_fallthru
      _
    // Predicated region
    $region30: #{perspective_forward.7} parent=1 // pred_check
      _
    $region31: #{perspective_forward.7} parent=1 // pred_check_branch
      %218 = sbr.rel (0) target = $region33
    $region32: #{perspective_forward.7} parent=1 // pred_region
      %s220 = ssub.s32 32, 32
      %221 = vsyncadd [#allocation4], %s220
      %s223 = sshll.u32 [#allocation3], 4
      %s224 = int_to_ptr.vmem [resolvable:$true] %s223
      %226 = dma.vmem_to_hbm [thread:$0]  %s224, 32, %s5, [#allocation4]
    $region33: #{perspective_forward.7} parent=1 // pred_fallthru
      _
    // Predicated region
    $region34: #{perspective_forward.7} parent=1 // pred_check
      _
    $region35: #{perspective_forward.7} parent=1 // pred_check_branch
      %228 = sbr.rel (0) target = $region37
    $region36: #{perspective_forward.7} parent=1 // pred_region
      %229 = dma.done [#allocation4], 32
    $region37: #{perspective_forward.7} parent=1 // pred_fallthru
      _
    %230 = vsyncpa [#allocation4], 1

</llo_original>
